<compile_context>
chip_gen: v6e
topology: v6e:2x2x1
jax: 0.10.0
libtpu: 0.0.40
codegen_flags: <defaults>
</compile_context>

<pallas_src>
import functools

import jax
import jax.numpy as jnp
from jax.experimental import pallas as pl
from jax.experimental.pallas import tpu as pltpu


def _round_up(n, m):
    return (n + m - 1) // m * m


def _fused_kernel(x_ref, w3_ref, bconv_ref, wcls_ref, bcls_ref, out_ref,
                  acc_ref, *, rt, width, kin, f_pad, inv_hw):
    r = pl.program_id(1)

    @pl.when(r == 0)
    def _init():
        acc_ref[...] = jnp.zeros_like(acc_ref)

    m = 8 * rt * width
    xt = x_ref[...]                        # (8, rt, W+2, 3*Cin) bf16

    # ---- backbone stem: 3x3 conv as 3 accumulated MXU matmuls (K = 3*Cin) --
    feat = jnp.zeros((m, f_pad), jnp.float32)
    for dj in range(3):                    # column taps; row taps folded in K
        lhs = xt[:, :, dj:dj + width, :].reshape(m, kin)         # bf16
        feat += jnp.dot(lhs, w3_ref[dj],                         # (3*Cin, F_pad)
                        preferred_element_type=jnp.float32)
    feat = jnp.maximum(feat + bconv_ref[...], 0.0)               # bias + ReLU

    # ---- AdaptiveAvgPool2d(1): running per-image sum across row tiles ------
    acc_ref[...] += feat.reshape(8, rt * width, f_pad).sum(axis=1)

    # ---- finalize: scale + classifier, single lane-dense store -------------
    @pl.when(r == pl.num_programs(1) - 1)
    def _finalize():
        pooled = acc_ref[...] * inv_hw                           # (8, F_pad) f32
        logits = jnp.dot(pooled, wcls_ref[...],
                         preferred_element_type=jnp.float32)
        out_ref[...] = logits + bcls_ref[...]


@jax.jit
def birdclef_forward(x, params):
    """x: (B, Cin, H, W) float32 NCHW.  Returns logits (B, num_classes)."""
    B, Cin, H, W = x.shape
    conv_w = params["conv_w"]          # (F, Cin, 3, 3)   PyTorch OIHW
    conv_b = params["conv_b"]          # (F,)
    cls_w = params["cls_w"]            # (F, num_classes)
    cls_b = params["cls_b"]            # (num_classes,)
    F_ = conv_w.shape[0]
    C = cls_w.shape[1]

    F_pad = _round_up(F_, 128)         # lane-dense feature dim
    C_pad = _round_up(C, 128)          # lane-dense class dim
    B_pad = _round_up(B, 8)            # sublane-full classifier M
    RT = 8 if H % 8 == 0 else H        # row tile (reduction axis)
    n_row_tiles = H // RT
    G = B_pad // 8
    Kin = 3 * Cin                      # row taps folded into the K dim

    # --- host glue: NHWC bf16, batch pad, 1-pixel halo, row-tap folding -----
    xh = jnp.transpose(x, (0, 2, 3, 1)).astype(jnp.bfloat16)
    xh = jnp.pad(xh, ((0, B_pad - B), (1, 1), (1, 1), (0, 0)))
    xcat = jnp.concatenate([xh[:, 0:H], xh[:, 1:H + 1], xh[:, 2:H + 2]],
                           axis=-1)    # (B_pad, H, W+2, 3*Cin)

    # conv weights OIHW -> (kw, kh*Cin, F_pad): w3[dj, di*Cin + c, f] = w[f,c,di,dj]
    w3 = jnp.transpose(conv_w, (3, 2, 1, 0)).reshape(3, Kin, F_)
    w3 = jnp.pad(w3, ((0, 0), (0, 0), (0, F_pad - F_))).astype(jnp.bfloat16)
    bconv = jnp.pad(conv_b, (0, F_pad - F_)).reshape(1, F_pad)
    wcls = jnp.pad(cls_w, ((0, F_pad - F_), (0, C_pad - C)))
    bcls = jnp.pad(cls_b, (0, C_pad - C)).reshape(1, C_pad)

    kernel = functools.partial(_fused_kernel, rt=RT, width=W, kin=Kin,
                               f_pad=F_pad, inv_hw=1.0 / (H * W))

    def resident(shape):               # weights/biases: same block every step
        n = len(shape)
        return pl.BlockSpec(shape, lambda g, r: (0,) * n)

    out = pl.pallas_call(
        kernel,
        out_shape=jax.ShapeDtypeStruct((B_pad, C_pad), jnp.float32),
        grid_spec=pltpu.PrefetchScalarGridSpec(
            num_scalar_prefetch=0,
            grid=(G, n_row_tiles),
            in_specs=[
                pl.BlockSpec((8, RT, W + 2, Kin), lambda g, r: (g, r, 0, 0)),
                resident((3, Kin, F_pad)),
                resident((1, F_pad)),
                resident((F_pad, C_pad)),
                resident((1, C_pad)),
            ],
            out_specs=pl.BlockSpec((8, C_pad), lambda g, r: (g, 0)),
            scratch_shapes=[pltpu.VMEM((8, F_pad), jnp.float32)],
        ),
        compiler_params=pltpu.CompilerParams(
            dimension_semantics=("parallel", "arbitrary"),
            vmem_limit_bytes=64 * 1024 * 1024),
    )(xcat, w3, bconv, wcls, bcls)

    return out[:B, :C]


def _reference_forward(x, params):
    """Independent pure-JAX reference; mirrors the kernel's bf16 input rounding."""
    xb = x.astype(jnp.bfloat16).astype(jnp.float32)
    wb = params["conv_w"].astype(jnp.bfloat16).astype(jnp.float32)
    feat = jax.lax.conv_general_dilated(
        xb, wb, window_strides=(1, 1), padding="SAME",
        dimension_numbers=("NCHW", "OIHW", "NCHW"),
        precision=jax.lax.Precision.HIGHEST)
    feat = feat + params["conv_b"][None, :, None, None]
    feat = jnp.maximum(feat, 0.0)
    pooled = feat.mean(axis=(2, 3))                     # (B, F)
    return jnp.dot(pooled, params["cls_w"],
                   precision=jax.lax.Precision.HIGHEST) + params["cls_b"]


def init_params(key, in_channels, feat_dim, num_classes):
    k1, k2, k3, k4 = jax.random.split(key, 4)
    return {
        "conv_w": 0.1 * jax.random.normal(k1, (feat_dim, in_channels, 3, 3),
                                          jnp.float32),
        "conv_b": 0.01 * jax.random.normal(k2, (feat_dim,), jnp.float32),
        "cls_w": 0.1 * jax.random.normal(k3, (feat_dim, num_classes),
                                         jnp.float32),
        "cls_b": 0.01 * jax.random.normal(k4, (num_classes,), jnp.float32),
    }


if __name__ == "__main__":
    B, Cin, H, W = 2, 4, 16, 16
    feat_dim, num_classes = 32, 16

    key = jax.random.PRNGKey(0)
    kx, kp = jax.random.split(key)
    x = jax.random.normal(kx, (B, Cin, H, W), jnp.float32)
    params = init_params(kp, Cin, feat_dim, num_classes)

    logits = jax.block_until_ready(birdclef_forward(x, params))

    ref = _reference_forward(x, params)
    assert logits.shape == (B, num_classes)
    # tolerance accounts for bf16 rounding on the MXU path (f32 accumulation)
    assert jnp.allclose(logits, ref, atol=1e-2, rtol=1e-2), "mismatch vs reference"

    print("KERNEL_OK")
</pallas_src>

<mosaic_0001>
module attributes {stable_mosaic.version = 11 : i64} {
  func.func @_fused_kernel(%arg0: i32, %arg1: i32, %arg2: memref<8x8x18x12xbf16, #tpu.memory_space<vmem>>, %arg3: memref<3x12x128xbf16, #tpu.memory_space<vmem>>, %arg4: memref<1x128xf32, #tpu.memory_space<vmem>>, %arg5: memref<128x128xf32, #tpu.memory_space<vmem>>, %arg6: memref<1x128xf32, #tpu.memory_space<vmem>>, %arg7: memref<8x128xf32, #tpu.memory_space<vmem>>, %arg8: memref<8x128xf32, #tpu.memory_space<vmem>>) attributes {dimension_semantics = [#tpu.dimension_semantics<parallel>, #tpu.dimension_semantics<arbitrary>], iteration_bounds = array<i64: 1, 2>, scalar_prefetch = 0 : i64, scratch_operands = 1 : i64, tpu.core_type = #tpu.core_type<tc>, window_params = [{transform_indices = @transform_0, window_bounds = array<i64: 8, 8, 18, 12>}, {pipeline_mode = #tpu.pipeline_mode<synchronous>, transform_indices = @transform_1, window_bounds = array<i64: 3, 12, 128>}, {pipeline_mode = #tpu.pipeline_mode<synchronous>, transform_indices = @transform_2, window_bounds = array<i64: 1, 128>}, {pipeline_mode = #tpu.pipeline_mode<synchronous>, transform_indices = @transform_3, window_bounds = array<i64: 128, 128>}, {pipeline_mode = #tpu.pipeline_mode<synchronous>, transform_indices = @transform_4, window_bounds = array<i64: 1, 128>}, {transform_indices = @transform_5, window_bounds = array<i64: 8, 128>}]} {
    %c0_i32 = arith.constant 0 : i32
    %0 = arith.cmpi eq, %arg1, %c0_i32 : i32
    %1 = arith.extui %0 : i1 to i32
    %c0_i32_0 = arith.constant 0 : i32
    %2 = arith.cmpi ne, %1, %c0_i32_0 : i32
    scf.if %2 {
      %cst_23 = arith.constant 0.000000e+00 : f32
      %36 = vector.broadcast %cst_23 : f32 to vector<8x128xf32>
      %c0_24 = arith.constant 0 : index
      %c0_25 = arith.constant 0 : index
      %37 = vector.load %arg8[%c0_24, %c0_25] : memref<8x128xf32, #tpu.memory_space<vmem>>, vector<8x128xf32>
      tpu.vector_store %arg8[%c0_24, %c0_25], %36 {strides = array<i32>} : memref<8x128xf32, #tpu.memory_space<vmem>>, vector<8x128xf32>,
    } else {
    }
    %c0 = arith.constant 0 : index
    %c0_1 = arith.constant 0 : index
    %c0_2 = arith.constant 0 : index
    %c0_3 = arith.constant 0 : index
    %3 = vector.load %arg2[%c0, %c0_1, %c0_2, %c0_3] : memref<8x8x18x12xbf16, #tpu.memory_space<vmem>>, vector<8x8x18x12xbf16>
    %cst = arith.constant 0.000000e+00 : f32
    %4 = vector.broadcast %cst : f32 to vector<1024x128xf32>
    %5 = vector.extract_strided_slice %3 {offsets = [0, 0, 0, 0], sizes = [8, 8, 16, 12], strides = [1, 1, 1, 1]} : vector<8x8x18x12xbf16> to vector<8x8x16x12xbf16>
    %6 = vector.shape_cast %5 : vector<8x8x16x12xbf16> to vector<1024x12xbf16>
    %c0_4 = arith.constant 0 : index
    %c0_5 = arith.constant 0 : index
    %c0_6 = arith.constant 0 : index
    %7 = vector.load %arg3[%c0_4, %c0_5, %c0_6] : memref<3x12x128xbf16, #tpu.memory_space<vmem>>, vector<1x12x128xbf16>
    %8 = vector.shape_cast %7 : vector<1x12x128xbf16> to vector<12x128xbf16>
    %cst_7 = arith.constant dense<0.000000e+00> : vector<1024x128xf32>
    %9 = tpu.matmul %6, %8, %cst_7 {dimension_numbers = #tpu.dot_dimension_numbers<[1], [0], [0], [1], [0, 0, 1, 1], [], []>} : vector<1024x12xbf16>, vector<12x128xbf16>, vector<1024x128xf32> -> vector<1024x128xf32>
    %10 = arith.addf %4, %9 : vector<1024x128xf32>
    %11 = vector.extract_strided_slice %3 {offsets = [0, 0, 1, 0], sizes = [8, 8, 16, 12], strides = [1, 1, 1, 1]} : vector<8x8x18x12xbf16> to vector<8x8x16x12xbf16>
    %12 = vector.shape_cast %11 : vector<8x8x16x12xbf16> to vector<1024x12xbf16>
    %c1 = arith.constant 1 : index
    %c0_8 = arith.constant 0 : index
    %c0_9 = arith.constant 0 : index
    %13 = vector.load %arg3[%c1, %c0_8, %c0_9] : memref<3x12x128xbf16, #tpu.memory_space<vmem>>, vector<1x12x128xbf16>
    %14 = vector.shape_cast %13 : vector<1x12x128xbf16> to vector<12x128xbf16>
    %cst_10 = arith.constant dense<0.000000e+00> : vector<1024x128xf32>
    %15 = tpu.matmul %12, %14, %cst_10 {dimension_numbers = #tpu.dot_dimension_numbers<[1], [0], [0], [1], [0, 0, 1, 1], [], []>} : vector<1024x12xbf16>, vector<12x128xbf16>, vector<1024x128xf32> -> vector<1024x128xf32>
    %16 = arith.addf %10, %15 : vector<1024x128xf32>
    %17 = vector.extract_strided_slice %3 {offsets = [0, 0, 2, 0], sizes = [8, 8, 16, 12], strides = [1, 1, 1, 1]} : vector<8x8x18x12xbf16> to vector<8x8x16x12xbf16>
    %18 = vector.shape_cast %17 : vector<8x8x16x12xbf16> to vector<1024x12xbf16>
    %c2 = arith.constant 2 : index
    %c0_11 = arith.constant 0 : index
    %c0_12 = arith.constant 0 : index
    %19 = vector.load %arg3[%c2, %c0_11, %c0_12] : memref<3x12x128xbf16, #tpu.memory_space<vmem>>, vector<1x12x128xbf16>
    %20 = vector.shape_cast %19 : vector<1x12x128xbf16> to vector<12x128xbf16>
    %cst_13 = arith.constant dense<0.000000e+00> : vector<1024x128xf32>
    %21 = tpu.matmul %18, %20, %cst_13 {dimension_numbers = #tpu.dot_dimension_numbers<[1], [0], [0], [1], [0, 0, 1, 1], [], []>} : vector<1024x12xbf16>, vector<12x128xbf16>, vector<1024x128xf32> -> vector<1024x128xf32>
    %22 = arith.addf %16, %21 : vector<1024x128xf32>
    %c0_14 = arith.constant 0 : index
    %c0_15 = arith.constant 0 : index
    %23 = vector.load %arg4[%c0_14, %c0_15] : memref<1x128xf32, #tpu.memory_space<vmem>>, vector<1x128xf32>
    %24 = vector.broadcast %23 : vector<1x128xf32> to vector<1024x128xf32>
    %25 = arith.addf %22, %24 : vector<1024x128xf32>
    %cst_16 = arith.constant 0.000000e+00 : f32
    %26 = vector.broadcast %cst_16 : f32 to vector<1024x128xf32>
    %27 = arith.maximumf %25, %26 : vector<1024x128xf32>
    %c0_17 = arith.constant 0 : index
    %c0_18 = arith.constant 0 : index
    %28 = vector.load %arg8[%c0_17, %c0_18] : memref<8x128xf32, #tpu.memory_space<vmem>>, vector<8x128xf32>
    %29 = vector.shape_cast %27 : vector<1024x128xf32> to vector<8x128x128xf32>
    %cst_19 = arith.constant dense<0.000000e+00> : vector<8x128xf32>
    %30 = vector.multi_reduction <add>, %29, %cst_19 [1] : vector<8x128x128xf32> to vector<8x128xf32>
    %31 = arith.addf %28, %30 : vector<8x128xf32>
    %c0_20 = arith.constant 0 : index
    %c0_21 = arith.constant 0 : index
    %32 = vector.load %arg8[%c0_20, %c0_21] : memref<8x128xf32, #tpu.memory_space<vmem>>, vector<8x128xf32>
    tpu.vector_store %arg8[%c0_20, %c0_21], %31 {strides = array<i32>} : memref<8x128xf32, #tpu.memory_space<vmem>>, vector<8x128xf32>,
    %c1_i32 = arith.constant 1 : i32
    %33 = arith.cmpi eq, %arg1, %c1_i32 : i32
    %34 = arith.extui %33 : i1 to i32
    %c0_i32_22 = arith.constant 0 : i32
    %35 = arith.cmpi ne, %34, %c0_i32_22 : i32
    scf.if %35 {
      %c0_23 = arith.constant 0 : index
      %c0_24 = arith.constant 0 : index
      %36 = vector.load %arg8[%c0_23, %c0_24] : memref<8x128xf32, #tpu.memory_space<vmem>>, vector<8x128xf32>
      %cst_25 = arith.constant 3.906250e-03 : f32
      %37 = vector.broadcast %cst_25 : f32 to vector<8x128xf32>
      %38 = arith.mulf %36, %37 : vector<8x128xf32>
      %c0_26 = arith.constant 0 : index
      %c0_27 = arith.constant 0 : index
      %39 = vector.load %arg5[%c0_26, %c0_27] : memref<128x128xf32, #tpu.memory_space<vmem>>, vector<128x128xf32>
      %cst_28 = arith.constant dense<0.000000e+00> : vector<8x128xf32>
      %40 = tpu.matmul %38, %39, %cst_28 {dimension_numbers = #tpu.dot_dimension_numbers<[1], [0], [0], [1], [0, 0, 1, 1], [], []>} : vector<8x128xf32>, vector<128x128xf32>, vector<8x128xf32> -> vector<8x128xf32>
      %c0_29 = arith.constant 0 : index
      %c0_30 = arith.constant 0 : index
      %41 = vector.load %arg6[%c0_29, %c0_30] : memref<1x128xf32, #tpu.memory_space<vmem>>, vector<1x128xf32>
      %42 = vector.broadcast %41 : vector<1x128xf32> to vector<8x128xf32>
      %43 = arith.addf %40, %42 : vector<8x128xf32>
      %c0_31 = arith.constant 0 : index
      %c0_32 = arith.constant 0 : index
      %44 = vector.load %arg7[%c0_31, %c0_32] : memref<8x128xf32, #tpu.memory_space<vmem>>, vector<8x128xf32>
      tpu.vector_store %arg7[%c0_31, %c0_32], %43 {strides = array<i32>} : memref<8x128xf32, #tpu.memory_space<vmem>>, vector<8x128xf32>,
    } else {
    }
    return
  }
  func.func @transform_0(%arg0: i32, %arg1: i32) -> (i32, i32, i32, i32) {
    %c0_i32 = arith.constant 0 : i32
    %c0_i32_0 = arith.constant 0 : i32
    %c0_i32_1 = arith.constant 0 : i32
    return %arg0, %arg1, %c0_i32, %c0_i32_0 : i32, i32, i32, i32
  }
  func.func @transform_1(%arg0: i32, %arg1: i32) -> (i32, i32, i32) {
    %c0_i32 = arith.constant 0 : i32
    %c0_i32_0 = arith.constant 0 : i32
    %c0_i32_1 = arith.constant 0 : i32
    %c0_i32_2 = arith.constant 0 : i32
    return %c0_i32, %c0_i32_0, %c0_i32_1 : i32, i32, i32
  }
  func.func @transform_2(%arg0: i32, %arg1: i32) -> (i32, i32) {
    %c0_i32 = arith.constant 0 : i32
    %c0_i32_0 = arith.constant 0 : i32
    %c0_i32_1 = arith.constant 0 : i32
    return %c0_i32, %c0_i32_0 : i32, i32
  }
  func.func @transform_3(%arg0: i32, %arg1: i32) -> (i32, i32) {
    %c0_i32 = arith.constant 0 : i32
    %c0_i32_0 = arith.constant 0 : i32
    %c0_i32_1 = arith.constant 0 : i32
    return %c0_i32, %c0_i32_0 : i32, i32
  }
  func.func @transform_4(%arg0: i32, %arg1: i32) -> (i32, i32) {
    %c0_i32 = arith.constant 0 : i32
    %c0_i32_0 = arith.constant 0 : i32
    %c0_i32_1 = arith.constant 0 : i32
    return %c0_i32, %c0_i32_0 : i32, i32
  }
  func.func @transform_5(%arg0: i32, %arg1: i32) -> (i32, i32) {
    %c0_i32 = arith.constant 0 : i32
    %c0_i32_0 = arith.constant 0 : i32
    return %arg0, %c0_i32 : i32, i32
  }
}

</mosaic_0001>

<llo_original>
// kernel: birdclef_forward.1
$region0: #{birdclef_forward.1}
  #allocation0 [shape = 'u32[]', space=smem, size = 0x4, offset = 0x4, fixed_abs, tag = 'smem constant byte address 0x4 - core index']
  #allocation1 [shape = 'u32[144,128]{1,0:T(1,128)}', space=vmem, size = 0x12000, scoped, tag = 'internal scratch']
  #allocation2 [shape = 'f32[8,128]{1,0:T(8,128)}', space=vmem, size = 0x1000, scoped, tag = 'scratch operand']
  %s0 = inlined_call_operand.vmem [shape: bf16[8,16,18,12], index: 0, kind: input, shape index: {}]
  %s1 = inlined_call_operand.vmem [shape: bf16[3,12,128], index: 1, kind: input, shape index: {}]
  %s2 = inlined_call_operand.vmem [shape: f32[1,128], index: 2, kind: input, shape index: {}]
  %s3 = inlined_call_operand.vmem [shape: f32[128,128], index: 3, kind: input, shape index: {}]
  %s4 = inlined_call_operand.vmem [shape: f32[1,128], index: 4, kind: input, shape index: {}]
  %s5 = inlined_call_operand.vmem [shape: f32[8,128], index: 5, kind: output, shape index: {}]
  %s6 = sld [smem:[#allocation0]]
  $region102: #{birdclef_forward.1} parent=0
    _
  %s8 = ssub.s32 1, %s6
  %s9 = scalar_select 0, %s8, %s6
  $region1: #{birdclef_forward.1} parent=0
    #allocation3 [shape = 'u8[786432]{0}', space=vmem, size = 0xc0000, scoped, tag = 'input window, operand 0']
    loop: start=0, step=1, limit=4
    $region2: #{birdclef_forward.1} parent=1 // loop_pre_header
      _
    $region3: #{birdclef_forward.1} parent=1 // loop_header
      %s11 = sphi 0, %s15
      %p12 = scmp.ge.s32.totalorder %s11, 4
      %s18 = sphi 0, %s30
      %s19 = sphi 0, %s26
      %s20 = sphi 0, %s18
      %s21 = sphi 0, %s19
      %s22 = sphi 0, %s20
      %s23 = sphi 0, %s21
      %s35 = sphi 0, %s37
      %s38 = sphi 0, %s35
      %s39 = sphi 0, %s38
      %s55 = sphi 0, %s39
      %s59 = sphi 0, %s59
      %s61 = sphi 0, %s59
      %s62 = sphi 0, %s61
      %s76 = sphi 0, %s62
      %s80 = sphi 0, %s80
      %s82 = sphi 0, %s80
      %s83 = sphi 0, %s82
      %s97 = sphi 0, %s83
      %s101 = sphi 0, %s101
      %s103 = sphi 0, %s101
      %s104 = sphi 0, %s103
      %s118 = sphi 0, %s104
      %s122 = sphi 0, %s122
      %s124 = sphi 0, %s122
      %s125 = sphi 0, %s124
      %s139 = sphi 0, %s125
      %s145 = sphi 0, %s147
      %s148 = sphi 0, %s145
      %s149 = sphi 0, %s148
      %s165 = sphi 0, %s149
    $region4: #{birdclef_forward.1} parent=1 // loop_header_branch
      %14 = sbr.rel (%p12) target = $region8
    $region5: #{birdclef_forward.1} parent=1 // loop_body
      %s16 = ssub.s32 %s11, 1
      %s17 = ssub.s32 %s11, 2
      %s24 = sadd.s32 1, %s19
      %p25 = scmp.ge.s32.totalorder %s24, 2
      %s26 = scalar_select %p25, 0, %s24
      %s27 = sadd.s32 1, %s18
      %s28 = scalar_select %p25, %s27, %s18
      %p29 = scmp.ge.s32.totalorder %s28, 1
      %s30 = scalar_select %p29, 0, %s28
      %s31 = ssub.s32 %s18, %s30
      %s32 = ssub.s32 %s19, %s26
      %s33 = sor.u32 %s31, %s32
      %p34 = scmp.eq.s32.totalorder %s33, 0
      %s36 = sadd.s32 %s35, 1
      %s37 = scalar_select %p34, %s35, %s36
      %p40 = pneg %p34
      %p41 = scmp.eq.s32.totalorder %s11, 1
      %p42 = por %p40, %p41
      %p43 = scmp.ne.s32.totalorder %s35, %s38
      %p44 = scmp.eq.s32.totalorder %s11, 0
      %p45 = por %p43, %p44
      %p46 = scmp.ne.s32.totalorder %s35, %s38
      %p47 = scmp.eq.s32.totalorder %s16, 1
      %p48 = por %p46, %p47
      %p49 = scmp.ne.s32.totalorder %s38, %s39
      %p50 = scmp.eq.s32.totalorder %s16, 0
      %p51 = por %p49, %p50
      %p52 = scmp.ne.s32.totalorder %s38, %s39
      %p53 = scmp.eq.s32.totalorder %s17, 1
      %p54 = por %p52, %p53
      %p56 = scmp.ne.s32.totalorder %s39, %s55
      %p57 = scmp.eq.s32.totalorder %s17, 0
      %p58 = por %p56, %p57
      %s60 = sadd.s32 %s59, 1
      %p63 = scmp.eq.s32.totalorder %s11, 1
      %p64 = scmp.ne.s32.totalorder %s59, %s61
      %p65 = scmp.eq.s32.totalorder %s11, 0
      %p66 = por %p64, %p65
      %p67 = scmp.ne.s32.totalorder %s59, %s61
      %p68 = scmp.eq.s32.totalorder %s16, 1
      %p69 = por %p67, %p68
      %p70 = scmp.ne.s32.totalorder %s61, %s62
      %p71 = scmp.eq.s32.totalorder %s16, 0
      %p72 = por %p70, %p71
      %p73 = scmp.ne.s32.totalorder %s61, %s62
      %p74 = scmp.eq.s32.totalorder %s17, 1
      %p75 = por %p73, %p74
      %p77 = scmp.ne.s32.totalorder %s62, %s76
      %p78 = scmp.eq.s32.totalorder %s17, 0
      %p79 = por %p77, %p78
      %s81 = sadd.s32 %s80, 1
      %p84 = scmp.eq.s32.totalorder %s11, 1
      %p85 = scmp.ne.s32.totalorder %s80, %s82
      %p86 = scmp.eq.s32.totalorder %s11, 0
      %p87 = por %p85, %p86
      %p88 = scmp.ne.s32.totalorder %s80, %s82
      %p89 = scmp.eq.s32.totalorder %s16, 1
      %p90 = por %p88, %p89
      %p91 = scmp.ne.s32.totalorder %s82, %s83
      %p92 = scmp.eq.s32.totalorder %s16, 0
      %p93 = por %p91, %p92
      %p94 = scmp.ne.s32.totalorder %s82, %s83
      %p95 = scmp.eq.s32.totalorder %s17, 1
      %p96 = por %p94, %p95
      %p98 = scmp.ne.s32.totalorder %s83, %s97
      %p99 = scmp.eq.s32.totalorder %s17, 0
      %p100 = por %p98, %p99
      %s102 = sadd.s32 %s101, 1
      %p105 = scmp.eq.s32.totalorder %s11, 1
      %p106 = scmp.ne.s32.totalorder %s101, %s103
      %p107 = scmp.eq.s32.totalorder %s11, 0
      %p108 = por %p106, %p107
      %p109 = scmp.ne.s32.totalorder %s101, %s103
      %p110 = scmp.eq.s32.totalorder %s16, 1
      %p111 = por %p109, %p110
      %p112 = scmp.ne.s32.totalorder %s103, %s104
      %p113 = scmp.eq.s32.totalorder %s16, 0
      %p114 = por %p112, %p113
      %p115 = scmp.ne.s32.totalorder %s103, %s104
      %p116 = scmp.eq.s32.totalorder %s17, 1
      %p117 = por %p115, %p116
      %p119 = scmp.ne.s32.totalorder %s104, %s118
      %p120 = scmp.eq.s32.totalorder %s17, 0
      %p121 = por %p119, %p120
      %s123 = sadd.s32 %s122, 1
      %p126 = scmp.eq.s32.totalorder %s11, 1
      %p127 = scmp.ne.s32.totalorder %s122, %s124
      %p128 = scmp.eq.s32.totalorder %s11, 0
      %p129 = por %p127, %p128
      %p130 = scmp.ne.s32.totalorder %s122, %s124
      %p131 = scmp.eq.s32.totalorder %s16, 1
      %p132 = por %p130, %p131
      %p133 = scmp.ne.s32.totalorder %s124, %s125
      %p134 = scmp.eq.s32.totalorder %s16, 0
      %p135 = por %p133, %p134
      %p136 = scmp.ne.s32.totalorder %s124, %s125
      %p137 = scmp.eq.s32.totalorder %s17, 1
      %p138 = por %p136, %p137
      %p140 = scmp.ne.s32.totalorder %s125, %s139
      %p141 = scmp.eq.s32.totalorder %s17, 0
      %p142 = por %p140, %p141
      %s143 = ssub.s32 %s18, %s30
      %p144 = scmp.eq.s32.totalorder %s143, 0
      %s146 = sadd.s32 %s145, 1
      %s147 = scalar_select %p144, %s145, %s146
      %p150 = pneg %p144
      %p151 = scmp.eq.s32.totalorder %s11, 1
      %p152 = por %p150, %p151
      %p153 = scmp.ne.s32.totalorder %s145, %s148
      %p154 = scmp.eq.s32.totalorder %s11, 0
      %p155 = por %p153, %p154
      %p156 = scmp.ne.s32.totalorder %s145, %s148
      %p157 = scmp.eq.s32.totalorder %s16, 1
      %p158 = por %p156, %p157
      %p159 = scmp.ne.s32.totalorder %s148, %s149
      %p160 = scmp.eq.s32.totalorder %s16, 0
      %p161 = por %p159, %p160
      %p162 = scmp.ne.s32.totalorder %s148, %s149
      %p163 = scmp.eq.s32.totalorder %s17, 1
      %p164 = por %p162, %p163
      %p166 = scmp.ne.s32.totalorder %s149, %s165
      %p167 = scmp.eq.s32.totalorder %s17, 0
      %p168 = por %p166, %p167
      %p169 = scmp.le.s32.totalorder 1, %s11
      %p170 = scmp.lt.s32.totalorder %s11, 3
      %p171 = pnand %p169, %p170
      %p172 = pneg %p171
      // Predicated region
      $region9: #{birdclef_forward.1} parent=5 // pred_check
        _
      $region10: #{birdclef_forward.1} parent=5 // pred_check_branch
        %174 = sbr.rel (%p171) target = $region12
      $region11: #{birdclef_forward.1} parent=5 // pred_region
        %s175 = ssub.s32 %s11, 1
        // Predicated region
        $region13: #{birdclef_forward.1} parent=11 // pred_check
          %p176 = pneg %p72
        $region14: #{birdclef_forward.1} parent=11 // pred_check_branch
          %178 = sbr.rel (%p176) target = $region16
        $region15: #{birdclef_forward.1} parent=11 // pred_region
          _
        $region16: #{birdclef_forward.1} parent=11 // pred_fallthru
          _
        // Predicated region
        $region17: #{birdclef_forward.1} parent=11 // pred_check
          %p179 = pneg %p93
        $region18: #{birdclef_forward.1} parent=11 // pred_check_branch
          %181 = sbr.rel (%p179) target = $region20
        $region19: #{birdclef_forward.1} parent=11 // pred_region
          _
        $region20: #{birdclef_forward.1} parent=11 // pred_fallthru
          _
        // Predicated region
        $region21: #{birdclef_forward.1} parent=11 // pred_check
          %p182 = pneg %p114
        $region22: #{birdclef_forward.1} parent=11 // pred_check_branch
          %184 = sbr.rel (%p182) target = $region24
        $region23: #{birdclef_forward.1} parent=11 // pred_region
          _
        $region24: #{birdclef_forward.1} parent=11 // pred_fallthru
          _
        // Predicated region
        $region25: #{birdclef_forward.1} parent=11 // pred_check
          %p185 = pneg %p135
        $region26: #{birdclef_forward.1} parent=11 // pred_check_branch
          %187 = sbr.rel (%p185) target = $region28
        $region27: #{birdclef_forward.1} parent=11 // pred_region
          _
        $region28: #{birdclef_forward.1} parent=11 // pred_fallthru
          _
      $region12: #{birdclef_forward.1} parent=5 // pred_fallthru
        _
      %p188 = scmp.lt.s32.totalorder %s11, 2
      // Predicated region
      $region29: #{birdclef_forward.1} parent=5 // pred_check
        %p189 = pneg %p188
      $region30: #{birdclef_forward.1} parent=5 // pred_check_branch
        %191 = sbr.rel (%p189) target = $region32
      $region31: #{birdclef_forward.1} parent=5 // pred_region
        // Predicated region
        $region33: #{birdclef_forward.1} parent=31 // pred_check
          %p192 = pneg %p45
        $region34: #{birdclef_forward.1} parent=31 // pred_check_branch
          %194 = sbr.rel (%p192) target = $region36
        $region35: #{birdclef_forward.1} parent=31 // pred_region
          %s195 = sand.u32 %s35, 1
          %s196 = sand.u32 %s35, 1
          %s197 = smul.addr %s196, 768
          %s198 = scalar_lea.vmem [#allocation3], %s197
          %s199 = smul.u32 8, %s18
          %s200 = smul.u32 8, %s19
          %s201 = smul.addr %s200, 3
          %s202 = smul.addr %s199, 48
          %s203 = sadd.s32 %s201, %s202
          %s204 = smul.addr %s203, 4
          %s205 = scalar_lea.vmem %s0, %s204
          // Predicated region
          $region37: #{birdclef_forward.1} parent=35 // pred_check
            _
          $region38: #{birdclef_forward.1} parent=35 // pred_check_branch
            %207 = sbr.rel (0) target = $region40
          $region39: #{birdclef_forward.1} parent=35 // pred_region
            // Predicated region
            $region41: #{birdclef_forward.1} parent=39 // pred_check
              _
            $region42: #{birdclef_forward.1} parent=39 // pred_check_branch
              %209 = sbr.rel target = $region44
            $region43: #{birdclef_forward.1} parent=39 // pred_region
              // Predicated region
              $region56: #{birdclef_forward.1} parent=43 // pred_check
                _
              $region57: #{birdclef_forward.1} parent=43 // pred_check_branch
                %607 = sbr.rel (0) target = $region59
              $region58: #{birdclef_forward.1} parent=43 // pred_region
                loop: start=0, step=1, limit=1
                $region60: #{birdclef_forward.1} parent=58 // loop_pre_header
                  _
                $region61: #{birdclef_forward.1} parent=58 // loop_header
                  %s609 = sphi 0, %s613
                  %p610 = scmp.ge.s32.totalorder %s609, 1
                  %s614 = sphi %s205, %s205
                  %s615 = sphi %s198, %s198
                $region62: #{birdclef_forward.1} parent=58 // loop_header_branch
                  %612 = sbr.rel (%p610) target = $region66
                $region63: #{birdclef_forward.1} parent=58 // loop_body
                  _
                $region64: #{birdclef_forward.1} parent=58 // loop_footer
                  %s613 = sadd.s32 1, %s609
                $region65: #{birdclef_forward.1} parent=58 // loop_footer_branch
                  %608 = sbr.rel target = $region61
                $region66: #{birdclef_forward.1} parent=58 // loop_exit
                  _
                %s617 = ssub.s32 16, 1
                loop: start=0, step=1, limit=1
                $region67: #{birdclef_forward.1} parent=58 // loop_pre_header
                  _
                $region68: #{birdclef_forward.1} parent=58 // loop_header
                  %s619 = sphi 0, %s623
                  %p620 = scmp.ge.s32.totalorder %s619, 1
                  %s624 = sphi %s205, %s205
                  %s625 = sphi %s198, %s198
                $region69: #{birdclef_forward.1} parent=58 // loop_header_branch
                  %622 = sbr.rel (%p620) target = $region73
                $region70: #{birdclef_forward.1} parent=58 // loop_body
                  %v626 = vld [vmem:[%s624] sm:%s617]
                  %627 = vst [vmem:[%s625] sm:%s617] %v626
                  %v628 = vld [vmem:[%s624 + $0x4] sm:%s617]
                  %629 = vst [vmem:[%s625 + $0x4] sm:%s617] %v628
                  %v630 = vld [vmem:[%s624 + $0x8] sm:%s617]
                  %631 = vst [vmem:[%s625 + $0x8] sm:%s617] %v630
                  %v632 = vld [vmem:[%s624 + $0xc] sm:%s617]
                  %633 = vst [vmem:[%s625 + $0xc] sm:%s617] %v632
                  %v634 = vld [vmem:[%s624 + $0x10] sm:%s617]
                  %635 = vst [vmem:[%s625 + $0x10] sm:%s617] %v634
                  %v636 = vld [vmem:[%s624 + $0x14] sm:%s617]
                  %637 = vst [vmem:[%s625 + $0x14] sm:%s617] %v636
                  %v638 = vld [vmem:[%s624 + $0x18] sm:%s617]
                  %639 = vst [vmem:[%s625 + $0x18] sm:%s617] %v638
                  %v640 = vld [vmem:[%s624 + $0x1c] sm:%s617]
                  %641 = vst [vmem:[%s625 + $0x1c] sm:%s617] %v640
                  %v642 = vld [vmem:[%s624 + $0x20] sm:%s617]
                  %643 = vst [vmem:[%s625 + $0x20] sm:%s617] %v642
                  %v644 = vld [vmem:[%s624 + $0x24] sm:%s617]
                  %645 = vst [vmem:[%s625 + $0x24] sm:%s617] %v644
                  %v646 = vld [vmem:[%s624 + $0x28] sm:%s617]
                  %647 = vst [vmem:[%s625 + $0x28] sm:%s617] %v646
                  %v648 = vld [vmem:[%s624 + $0x2c] sm:%s617]
                  %649 = vst [vmem:[%s625 + $0x2c] sm:%s617] %v648
                  %v650 = vld [vmem:[%s624 + $0x30] sm:%s617]
                  %651 = vst [vmem:[%s625 + $0x30] sm:%s617] %v650
                  %v652 = vld [vmem:[%s624 + $0x34] sm:%s617]
                  %653 = vst [vmem:[%s625 + $0x34] sm:%s617] %v652
                  %v654 = vld [vmem:[%s624 + $0x38] sm:%s617]
                  %655 = vst [vmem:[%s625 + $0x38] sm:%s617] %v654
                  %v656 = vld [vmem:[%s624 + $0x3c] sm:%s617]
                  %657 = vst [vmem:[%s625 + $0x3c] sm:%s617] %v656
                  %v658 = vld [vmem:[%s624 + $0x40] sm:%s617]
                  %659 = vst [vmem:[%s625 + $0x40] sm:%s617] %v658
                  %v660 = vld [vmem:[%s624 + $0x44] sm:%s617]
                  %661 = vst [vmem:[%s625 + $0x44] sm:%s617] %v660
                  %v662 = vld [vmem:[%s624 + $0x48] sm:%s617]
                  %663 = vst [vmem:[%s625 + $0x48] sm:%s617] %v662
                  %v664 = vld [vmem:[%s624 + $0x4c] sm:%s617]
                  %665 = vst [vmem:[%s625 + $0x4c] sm:%s617] %v664
                  %v666 = vld [vmem:[%s624 + $0x50] sm:%s617]
                  %667 = vst [vmem:[%s625 + $0x50] sm:%s617] %v666
                  %v668 = vld [vmem:[%s624 + $0x54] sm:%s617]
                  %669 = vst [vmem:[%s625 + $0x54] sm:%s617] %v668
                  %v670 = vld [vmem:[%s624 + $0x58] sm:%s617]
                  %671 = vst [vmem:[%s625 + $0x58] sm:%s617] %v670
                  %v672 = vld [vmem:[%s624 + $0x5c] sm:%s617]
                  %673 = vst [vmem:[%s625 + $0x5c] sm:%s617] %v672
                  %v674 = vld [vmem:[%s624 + $0xc0] sm:%s617]
                  %675 = vst [vmem:[%s625 + $0x60] sm:%s617] %v674
                  %v676 = vld [vmem:[%s624 + $0xc4] sm:%s617]
                  %677 = vst [vmem:[%s625 + $0x64] sm:%s617] %v676
                  %v678 = vld [vmem:[%s624 + $0xc8] sm:%s617]
                  %679 = vst [vmem:[%s625 + $0x68] sm:%s617] %v678
                  %v680 = vld [vmem:[%s624 + $0xcc] sm:%s617]
                  %681 = vst [vmem:[%s625 + $0x6c] sm:%s617] %v680
                  %v682 = vld [vmem:[%s624 + $0xd0] sm:%s617]
                  %683 = vst [vmem:[%s625 + $0x70] sm:%s617] %v682
                  %v684 = vld [vmem:[%s624 + $0xd4] sm:%s617]
                  %685 = vst [vmem:[%s625 + $0x74] sm:%s617] %v684
                  %v686 = vld [vmem:[%s624 + $0xd8] sm:%s617]
                  %687 = vst [vmem:[%s625 + $0x78] sm:%s617] %v686
                  %v688 = vld [vmem:[%s624 + $0xdc] sm:%s617]
                  %689 = vst [vmem:[%s625 + $0x7c] sm:%s617] %v688
                  %v690 = vld [vmem:[%s624 + $0xe0] sm:%s617]
                  %691 = vst [vmem:[%s625 + $0x80] sm:%s617] %v690
                  %v692 = vld [vmem:[%s624 + $0xe4] sm:%s617]
                  %693 = vst [vmem:[%s625 + $0x84] sm:%s617] %v692
                  %v694 = vld [vmem:[%s624 + $0xe8] sm:%s617]
                  %695 = vst [vmem:[%s625 + $0x88] sm:%s617] %v694
                  %v696 = vld [vmem:[%s624 + $0xec] sm:%s617]
                  %697 = vst [vmem:[%s625 + $0x8c] sm:%s617] %v696
                  %v698 = vld [vmem:[%s624 + $0xf0] sm:%s617]
                  %699 = vst [vmem:[%s625 + $0x90] sm:%s617] %v698
                  %v700 = vld [vmem:[%s624 + $0xf4] sm:%s617]
                  %701 = vst [vmem:[%s625 + $0x94] sm:%s617] %v700
                  %v702 = vld [vmem:[%s624 + $0xf8] sm:%s617]
                  %703 = vst [vmem:[%s625 + $0x98] sm:%s617] %v702
                  %v704 = vld [vmem:[%s624 + $0xfc] sm:%s617]
                  %705 = vst [vmem:[%s625 + $0x9c] sm:%s617] %v704
                  %v706 = vld [vmem:[%s624 + $0x100] sm:%s617]
                  %707 = vst [vmem:[%s625 + $0xa0] sm:%s617] %v706
                  %v708 = vld [vmem:[%s624 + $0x104] sm:%s617]
                  %709 = vst [vmem:[%s625 + $0xa4] sm:%s617] %v708
                  %v710 = vld [vmem:[%s624 + $0x108] sm:%s617]
                  %711 = vst [vmem:[%s625 + $0xa8] sm:%s617] %v710
                  %v712 = vld [vmem:[%s624 + $0x10c] sm:%s617]
                  %713 = vst [vmem:[%s625 + $0xac] sm:%s617] %v712
                  %v714 = vld [vmem:[%s624 + $0x110] sm:%s617]
                  %715 = vst [vmem:[%s625 + $0xb0] sm:%s617] %v714
                  %v716 = vld [vmem:[%s624 + $0x114] sm:%s617]
                  %717 = vst [vmem:[%s625 + $0xb4] sm:%s617] %v716
                  %v718 = vld [vmem:[%s624 + $0x118] sm:%s617]
                  %719 = vst [vmem:[%s625 + $0xb8] sm:%s617] %v718
                  %v720 = vld [vmem:[%s624 + $0x11c] sm:%s617]
                  %721 = vst [vmem:[%s625 + $0xbc] sm:%s617] %v720
                  %v722 = vld [vmem:[%s624 + $0x180] sm:%s617]
                  %723 = vst [vmem:[%s625 + $0xc0] sm:%s617] %v722
                  %v724 = vld [vmem:[%s624 + $0x184] sm:%s617]
                  %725 = vst [vmem:[%s625 + $0xc4] sm:%s617] %v724
                  %v726 = vld [vmem:[%s624 + $0x188] sm:%s617]
                  %727 = vst [vmem:[%s625 + $0xc8] sm:%s617] %v726
                  %v728 = vld [vmem:[%s624 + $0x18c] sm:%s617]
                  %729 = vst [vmem:[%s625 + $0xcc] sm:%s617] %v728
                  %v730 = vld [vmem:[%s624 + $0x190] sm:%s617]
                  %731 = vst [vmem:[%s625 + $0xd0] sm:%s617] %v730
                  %v732 = vld [vmem:[%s624 + $0x194] sm:%s617]
                  %733 = vst [vmem:[%s625 + $0xd4] sm:%s617] %v732
                  %v734 = vld [vmem:[%s624 + $0x198] sm:%s617]
                  %735 = vst [vmem:[%s625 + $0xd8] sm:%s617] %v734
                  %v736 = vld [vmem:[%s624 + $0x19c] sm:%s617]
                  %737 = vst [vmem:[%s625 + $0xdc] sm:%s617] %v736
                  %v738 = vld [vmem:[%s624 + $0x1a0] sm:%s617]
                  %739 = vst [vmem:[%s625 + $0xe0] sm:%s617] %v738
                  %v740 = vld [vmem:[%s624 + $0x1a4] sm:%s617]
                  %741 = vst [vmem:[%s625 + $0xe4] sm:%s617] %v740
                  %v742 = vld [vmem:[%s624 + $0x1a8] sm:%s617]
                  %743 = vst [vmem:[%s625 + $0xe8] sm:%s617] %v742
                  %v744 = vld [vmem:[%s624 + $0x1ac] sm:%s617]
                  %745 = vst [vmem:[%s625 + $0xec] sm:%s617] %v744
                  %v746 = vld [vmem:[%s624 + $0x1b0] sm:%s617]
                  %747 = vst [vmem:[%s625 + $0xf0] sm:%s617] %v746
                  %v748 = vld [vmem:[%s624 + $0x1b4] sm:%s617]
                  %749 = vst [vmem:[%s625 + $0xf4] sm:%s617] %v748
                  %v750 = vld [vmem:[%s624 + $0x1b8] sm:%s617]
                  %751 = vst [vmem:[%s625 + $0xf8] sm:%s617] %v750
                  %v752 = vld [vmem:[%s624 + $0x1bc] sm:%s617]
                  %753 = vst [vmem:[%s625 + $0xfc] sm:%s617] %v752
                  %v754 = vld [vmem:[%s624 + $0x1c0] sm:%s617]
                  %755 = vst [vmem:[%s625 + $0x100] sm:%s617] %v754
                  %v756 = vld [vmem:[%s624 + $0x1c4] sm:%s617]
                  %757 = vst [vmem:[%s625 + $0x104] sm:%s617] %v756
                  %v758 = vld [vmem:[%s624 + $0x1c8] sm:%s617]
                  %759 = vst [vmem:[%s625 + $0x108] sm:%s617] %v758
                  %v760 = vld [vmem:[%s624 + $0x1cc] sm:%s617]
                  %761 = vst [vmem:[%s625 + $0x10c] sm:%s617] %v760
                  %v762 = vld [vmem:[%s624 + $0x1d0] sm:%s617]
                  %763 = vst [vmem:[%s625 + $0x110] sm:%s617] %v762
                  %v764 = vld [vmem:[%s624 + $0x1d4] sm:%s617]
                  %765 = vst [vmem:[%s625 + $0x114] sm:%s617] %v764
                  %v766 = vld [vmem:[%s624 + $0x1d8] sm:%s617]
                  %767 = vst [vmem:[%s625 + $0x118] sm:%s617] %v766
                  %v768 = vld [vmem:[%s624 + $0x1dc] sm:%s617]
                  %769 = vst [vmem:[%s625 + $0x11c] sm:%s617] %v768
                  %v770 = vld [vmem:[%s624 + $0x240] sm:%s617]
                  %771 = vst [vmem:[%s625 + $0x120] sm:%s617] %v770
                  %v772 = vld [vmem:[%s624 + $0x244] sm:%s617]
                  %773 = vst [vmem:[%s625 + $0x124] sm:%s617] %v772
                  %v774 = vld [vmem:[%s624 + $0x248] sm:%s617]
                  %775 = vst [vmem:[%s625 + $0x128] sm:%s617] %v774
                  %v776 = vld [vmem:[%s624 + $0x24c] sm:%s617]
                  %777 = vst [vmem:[%s625 + $0x12c] sm:%s617] %v776
                  %v778 = vld [vmem:[%s624 + $0x250] sm:%s617]
                  %779 = vst [vmem:[%s625 + $0x130] sm:%s617] %v778
                  %v780 = vld [vmem:[%s624 + $0x254] sm:%s617]
                  %781 = vst [vmem:[%s625 + $0x134] sm:%s617] %v780
                  %v782 = vld [vmem:[%s624 + $0x258] sm:%s617]
                  %783 = vst [vmem:[%s625 + $0x138] sm:%s617] %v782
                  %v784 = vld [vmem:[%s624 + $0x25c] sm:%s617]
                  %785 = vst [vmem:[%s625 + $0x13c] sm:%s617] %v784
                  %v786 = vld [vmem:[%s624 + $0x260] sm:%s617]
                  %787 = vst [vmem:[%s625 + $0x140] sm:%s617] %v786
                  %v788 = vld [vmem:[%s624 + $0x264] sm:%s617]
                  %789 = vst [vmem:[%s625 + $0x144] sm:%s617] %v788
                  %v790 = vld [vmem:[%s624 + $0x268] sm:%s617]
                  %791 = vst [vmem:[%s625 + $0x148] sm:%s617] %v790
                  %v792 = vld [vmem:[%s624 + $0x26c] sm:%s617]
                  %793 = vst [vmem:[%s625 + $0x14c] sm:%s617] %v792
                  %v794 = vld [vmem:[%s624 + $0x270] sm:%s617]
                  %795 = vst [vmem:[%s625 + $0x150] sm:%s617] %v794
                  %v796 = vld [vmem:[%s624 + $0x274] sm:%s617]
                  %797 = vst [vmem:[%s625 + $0x154] sm:%s617] %v796
                  %v798 = vld [vmem:[%s624 + $0x278] sm:%s617]
                  %799 = vst [vmem:[%s625 + $0x158] sm:%s617] %v798
                  %v800 = vld [vmem:[%s624 + $0x27c] sm:%s617]
                  %801 = vst [vmem:[%s625 + $0x15c] sm:%s617] %v800
                  %v802 = vld [vmem:[%s624 + $0x280] sm:%s617]
                  %803 = vst [vmem:[%s625 + $0x160] sm:%s617] %v802
                  %v804 = vld [vmem:[%s624 + $0x284] sm:%s617]
                  %805 = vst [vmem:[%s625 + $0x164] sm:%s617] %v804
                  %v806 = vld [vmem:[%s624 + $0x288] sm:%s617]
                  %807 = vst [vmem:[%s625 + $0x168] sm:%s617] %v806
                  %v808 = vld [vmem:[%s624 + $0x28c] sm:%s617]
                  %809 = vst [vmem:[%s625 + $0x16c] sm:%s617] %v808
                  %v810 = vld [vmem:[%s624 + $0x290] sm:%s617]
                  %811 = vst [vmem:[%s625 + $0x170] sm:%s617] %v810
                  %v812 = vld [vmem:[%s624 + $0x294] sm:%s617]
                  %813 = vst [vmem:[%s625 + $0x174] sm:%s617] %v812
                  %v814 = vld [vmem:[%s624 + $0x298] sm:%s617]
                  %815 = vst [vmem:[%s625 + $0x178] sm:%s617] %v814
                  %v816 = vld [vmem:[%s624 + $0x29c] sm:%s617]
                  %817 = vst [vmem:[%s625 + $0x17c] sm:%s617] %v816
                  %v818 = vld [vmem:[%s624 + $0x300] sm:%s617]
                  %819 = vst [vmem:[%s625 + $0x180] sm:%s617] %v818
                  %v820 = vld [vmem:[%s624 + $0x304] sm:%s617]
                  %821 = vst [vmem:[%s625 + $0x184] sm:%s617] %v820
                  %v822 = vld [vmem:[%s624 + $0x308] sm:%s617]
                  %823 = vst [vmem:[%s625 + $0x188] sm:%s617] %v822
                  %v824 = vld [vmem:[%s624 + $0x30c] sm:%s617]
                  %825 = vst [vmem:[%s625 + $0x18c] sm:%s617] %v824
                  %v826 = vld [vmem:[%s624 + $0x310] sm:%s617]
                  %827 = vst [vmem:[%s625 + $0x190] sm:%s617] %v826
                  %v828 = vld [vmem:[%s624 + $0x314] sm:%s617]
                  %829 = vst [vmem:[%s625 + $0x194] sm:%s617] %v828
                  %v830 = vld [vmem:[%s624 + $0x318] sm:%s617]
                  %831 = vst [vmem:[%s625 + $0x198] sm:%s617] %v830
                  %v832 = vld [vmem:[%s624 + $0x31c] sm:%s617]
                  %833 = vst [vmem:[%s625 + $0x19c] sm:%s617] %v832
                  %v834 = vld [vmem:[%s624 + $0x320] sm:%s617]
                  %835 = vst [vmem:[%s625 + $0x1a0] sm:%s617] %v834
                  %v836 = vld [vmem:[%s624 + $0x324] sm:%s617]
                  %837 = vst [vmem:[%s625 + $0x1a4] sm:%s617] %v836
                  %v838 = vld [vmem:[%s624 + $0x328] sm:%s617]
                  %839 = vst [vmem:[%s625 + $0x1a8] sm:%s617] %v838
                  %v840 = vld [vmem:[%s624 + $0x32c] sm:%s617]
                  %841 = vst [vmem:[%s625 + $0x1ac] sm:%s617] %v840
                  %v842 = vld [vmem:[%s624 + $0x330] sm:%s617]
                  %843 = vst [vmem:[%s625 + $0x1b0] sm:%s617] %v842
                  %v844 = vld [vmem:[%s624 + $0x334] sm:%s617]
                  %845 = vst [vmem:[%s625 + $0x1b4] sm:%s617] %v844
                  %v846 = vld [vmem:[%s624 + $0x338] sm:%s617]
                  %847 = vst [vmem:[%s625 + $0x1b8] sm:%s617] %v846
                  %v848 = vld [vmem:[%s624 + $0x33c] sm:%s617]
                  %849 = vst [vmem:[%s625 + $0x1bc] sm:%s617] %v848
                  %v850 = vld [vmem:[%s624 + $0x340] sm:%s617]
                  %851 = vst [vmem:[%s625 + $0x1c0] sm:%s617] %v850
                  %v852 = vld [vmem:[%s624 + $0x344] sm:%s617]
                  %853 = vst [vmem:[%s625 + $0x1c4] sm:%s617] %v852
                  %v854 = vld [vmem:[%s624 + $0x348] sm:%s617]
                  %855 = vst [vmem:[%s625 + $0x1c8] sm:%s617] %v854
                  %v856 = vld [vmem:[%s624 + $0x34c] sm:%s617]
                  %857 = vst [vmem:[%s625 + $0x1cc] sm:%s617] %v856
                  %v858 = vld [vmem:[%s624 + $0x350] sm:%s617]
                  %859 = vst [vmem:[%s625 + $0x1d0] sm:%s617] %v858
                  %v860 = vld [vmem:[%s624 + $0x354] sm:%s617]
                  %861 = vst [vmem:[%s625 + $0x1d4] sm:%s617] %v860
                  %v862 = vld [vmem:[%s624 + $0x358] sm:%s617]
                  %863 = vst [vmem:[%s625 + $0x1d8] sm:%s617] %v862
                  %v864 = vld [vmem:[%s624 + $0x35c] sm:%s617]
                  %865 = vst [vmem:[%s625 + $0x1dc] sm:%s617] %v864
                  %v866 = vld [vmem:[%s624 + $0x3c0] sm:%s617]
                  %867 = vst [vmem:[%s625 + $0x1e0] sm:%s617] %v866
                  %v868 = vld [vmem:[%s624 + $0x3c4] sm:%s617]
                  %869 = vst [vmem:[%s625 + $0x1e4] sm:%s617] %v868
                  %v870 = vld [vmem:[%s624 + $0x3c8] sm:%s617]
                  %871 = vst [vmem:[%s625 + $0x1e8] sm:%s617] %v870
                  %v872 = vld [vmem:[%s624 + $0x3cc] sm:%s617]
                  %873 = vst [vmem:[%s625 + $0x1ec] sm:%s617] %v872
                  %v874 = vld [vmem:[%s624 + $0x3d0] sm:%s617]
                  %875 = vst [vmem:[%s625 + $0x1f0] sm:%s617] %v874
                  %v876 = vld [vmem:[%s624 + $0x3d4] sm:%s617]
                  %877 = vst [vmem:[%s625 + $0x1f4] sm:%s617] %v876
                  %v878 = vld [vmem:[%s624 + $0x3d8] sm:%s617]
                  %879 = vst [vmem:[%s625 + $0x1f8] sm:%s617] %v878
                  %v880 = vld [vmem:[%s624 + $0x3dc] sm:%s617]
                  %881 = vst [vmem:[%s625 + $0x1fc] sm:%s617] %v880
                  %v882 = vld [vmem:[%s624 + $0x3e0] sm:%s617]
                  %883 = vst [vmem:[%s625 + $0x200] sm:%s617] %v882
                  %v884 = vld [vmem:[%s624 + $0x3e4] sm:%s617]
                  %885 = vst [vmem:[%s625 + $0x204] sm:%s617] %v884
                  %v886 = vld [vmem:[%s624 + $0x3e8] sm:%s617]
                  %887 = vst [vmem:[%s625 + $0x208] sm:%s617] %v886
                  %v888 = vld [vmem:[%s624 + $0x3ec] sm:%s617]
                  %889 = vst [vmem:[%s625 + $0x20c] sm:%s617] %v888
                  %v890 = vld [vmem:[%s624 + $0x3f0] sm:%s617]
                  %891 = vst [vmem:[%s625 + $0x210] sm:%s617] %v890
                  %v892 = vld [vmem:[%s624 + $0x3f4] sm:%s617]
                  %893 = vst [vmem:[%s625 + $0x214] sm:%s617] %v892
                  %v894 = vld [vmem:[%s624 + $0x3f8] sm:%s617]
                  %895 = vst [vmem:[%s625 + $0x218] sm:%s617] %v894
                  %v896 = vld [vmem:[%s624 + $0x3fc] sm:%s617]
                  %897 = vst [vmem:[%s625 + $0x21c] sm:%s617] %v896
                  %v898 = vld [vmem:[%s624 + $0x400] sm:%s617]
                  %899 = vst [vmem:[%s625 + $0x220] sm:%s617] %v898
                  %v900 = vld [vmem:[%s624 + $0x404] sm:%s617]
                  %901 = vst [vmem:[%s625 + $0x224] sm:%s617] %v900
                  %v902 = vld [vmem:[%s624 + $0x408] sm:%s617]
                  %903 = vst [vmem:[%s625 + $0x228] sm:%s617] %v902
                  %v904 = vld [vmem:[%s624 + $0x40c] sm:%s617]
                  %905 = vst [vmem:[%s625 + $0x22c] sm:%s617] %v904
                  %v906 = vld [vmem:[%s624 + $0x410] sm:%s617]
                  %907 = vst [vmem:[%s625 + $0x230] sm:%s617] %v906
                  %v908 = vld [vmem:[%s624 + $0x414] sm:%s617]
                  %909 = vst [vmem:[%s625 + $0x234] sm:%s617] %v908
                  %v910 = vld [vmem:[%s624 + $0x418] sm:%s617]
                  %911 = vst [vmem:[%s625 + $0x238] sm:%s617] %v910
                  %v912 = vld [vmem:[%s624 + $0x41c] sm:%s617]
                  %913 = vst [vmem:[%s625 + $0x23c] sm:%s617] %v912
                  %v914 = vld [vmem:[%s624 + $0x480] sm:%s617]
                  %915 = vst [vmem:[%s625 + $0x240] sm:%s617] %v914
                  %v916 = vld [vmem:[%s624 + $0x484] sm:%s617]
                  %917 = vst [vmem:[%s625 + $0x244] sm:%s617] %v916
                  %v918 = vld [vmem:[%s624 + $0x488] sm:%s617]
                  %919 = vst [vmem:[%s625 + $0x248] sm:%s617] %v918
                  %v920 = vld [vmem:[%s624 + $0x48c] sm:%s617]
                  %921 = vst [vmem:[%s625 + $0x24c] sm:%s617] %v920
                  %v922 = vld [vmem:[%s624 + $0x490] sm:%s617]
                  %923 = vst [vmem:[%s625 + $0x250] sm:%s617] %v922
                  %v924 = vld [vmem:[%s624 + $0x494] sm:%s617]
                  %925 = vst [vmem:[%s625 + $0x254] sm:%s617] %v924
                  %v926 = vld [vmem:[%s624 + $0x498] sm:%s617]
                  %927 = vst [vmem:[%s625 + $0x258] sm:%s617] %v926
                  %v928 = vld [vmem:[%s624 + $0x49c] sm:%s617]
                  %929 = vst [vmem:[%s625 + $0x25c] sm:%s617] %v928
                  %v930 = vld [vmem:[%s624 + $0x4a0] sm:%s617]
                  %931 = vst [vmem:[%s625 + $0x260] sm:%s617] %v930
                  %v932 = vld [vmem:[%s624 + $0x4a4] sm:%s617]
                  %933 = vst [vmem:[%s625 + $0x264] sm:%s617] %v932
                  %v934 = vld [vmem:[%s624 + $0x4a8] sm:%s617]
                  %935 = vst [vmem:[%s625 + $0x268] sm:%s617] %v934
                  %v936 = vld [vmem:[%s624 + $0x4ac] sm:%s617]
                  %937 = vst [vmem:[%s625 + $0x26c] sm:%s617] %v936
                  %v938 = vld [vmem:[%s624 + $0x4b0] sm:%s617]
                  %939 = vst [vmem:[%s625 + $0x270] sm:%s617] %v938
                  %v940 = vld [vmem:[%s624 + $0x4b4] sm:%s617]
                  %941 = vst [vmem:[%s625 + $0x274] sm:%s617] %v940
                  %v942 = vld [vmem:[%s624 + $0x4b8] sm:%s617]
                  %943 = vst [vmem:[%s625 + $0x278] sm:%s617] %v942
                  %v944 = vld [vmem:[%s624 + $0x4bc] sm:%s617]
                  %945 = vst [vmem:[%s625 + $0x27c] sm:%s617] %v944
                  %v946 = vld [vmem:[%s624 + $0x4c0] sm:%s617]
                  %947 = vst [vmem:[%s625 + $0x280] sm:%s617] %v946
                  %v948 = vld [vmem:[%s624 + $0x4c4] sm:%s617]
                  %949 = vst [vmem:[%s625 + $0x284] sm:%s617] %v948
                  %v950 = vld [vmem:[%s624 + $0x4c8] sm:%s617]
                  %951 = vst [vmem:[%s625 + $0x288] sm:%s617] %v950
                  %v952 = vld [vmem:[%s624 + $0x4cc] sm:%s617]
                  %953 = vst [vmem:[%s625 + $0x28c] sm:%s617] %v952
                  %v954 = vld [vmem:[%s624 + $0x4d0] sm:%s617]
                  %955 = vst [vmem:[%s625 + $0x290] sm:%s617] %v954
                  %v956 = vld [vmem:[%s624 + $0x4d4] sm:%s617]
                  %957 = vst [vmem:[%s625 + $0x294] sm:%s617] %v956
                  %v958 = vld [vmem:[%s624 + $0x4d8] sm:%s617]
                  %959 = vst [vmem:[%s625 + $0x298] sm:%s617] %v958
                  %v960 = vld [vmem:[%s624 + $0x4dc] sm:%s617]
                  %961 = vst [vmem:[%s625 + $0x29c] sm:%s617] %v960
                  %v962 = vld [vmem:[%s624 + $0x540] sm:%s617]
                  %963 = vst [vmem:[%s625 + $0x2a0] sm:%s617] %v962
                  %v964 = vld [vmem:[%s624 + $0x544] sm:%s617]
                  %965 = vst [vmem:[%s625 + $0x2a4] sm:%s617] %v964
                  %v966 = vld [vmem:[%s624 + $0x548] sm:%s617]
                  %967 = vst [vmem:[%s625 + $0x2a8] sm:%s617] %v966
                  %v968 = vld [vmem:[%s624 + $0x54c] sm:%s617]
                  %969 = vst [vmem:[%s625 + $0x2ac] sm:%s617] %v968
                  %v970 = vld [vmem:[%s624 + $0x550] sm:%s617]
                  %971 = vst [vmem:[%s625 + $0x2b0] sm:%s617] %v970
                  %v972 = vld [vmem:[%s624 + $0x554] sm:%s617]
                  %973 = vst [vmem:[%s625 + $0x2b4] sm:%s617] %v972
                  %v974 = vld [vmem:[%s624 + $0x558] sm:%s617]
                  %975 = vst [vmem:[%s625 + $0x2b8] sm:%s617] %v974
                  %v976 = vld [vmem:[%s624 + $0x55c] sm:%s617]
                  %977 = vst [vmem:[%s625 + $0x2bc] sm:%s617] %v976
                  %v978 = vld [vmem:[%s624 + $0x560] sm:%s617]
                  %979 = vst [vmem:[%s625 + $0x2c0] sm:%s617] %v978
                  %v980 = vld [vmem:[%s624 + $0x564] sm:%s617]
                  %981 = vst [vmem:[%s625 + $0x2c4] sm:%s617] %v980
                  %v982 = vld [vmem:[%s624 + $0x568] sm:%s617]
                  %983 = vst [vmem:[%s625 + $0x2c8] sm:%s617] %v982
                  %v984 = vld [vmem:[%s624 + $0x56c] sm:%s617]
                  %985 = vst [vmem:[%s625 + $0x2cc] sm:%s617] %v984
                  %v986 = vld [vmem:[%s624 + $0x570] sm:%s617]
                  %987 = vst [vmem:[%s625 + $0x2d0] sm:%s617] %v986
                  %v988 = vld [vmem:[%s624 + $0x574] sm:%s617]
                  %989 = vst [vmem:[%s625 + $0x2d4] sm:%s617] %v988
                  %v990 = vld [vmem:[%s624 + $0x578] sm:%s617]
                  %991 = vst [vmem:[%s625 + $0x2d8] sm:%s617] %v990
                  %v992 = vld [vmem:[%s624 + $0x57c] sm:%s617]
                  %993 = vst [vmem:[%s625 + $0x2dc] sm:%s617] %v992
                  %v994 = vld [vmem:[%s624 + $0x580] sm:%s617]
                  %995 = vst [vmem:[%s625 + $0x2e0] sm:%s617] %v994
                  %v996 = vld [vmem:[%s624 + $0x584] sm:%s617]
                  %997 = vst [vmem:[%s625 + $0x2e4] sm:%s617] %v996
                  %v998 = vld [vmem:[%s624 + $0x588] sm:%s617]
                  %999 = vst [vmem:[%s625 + $0x2e8] sm:%s617] %v998
                  %v1000 = vld [vmem:[%s624 + $0x58c] sm:%s617]
                  %1001 = vst [vmem:[%s625 + $0x2ec] sm:%s617] %v1000
                  %v1002 = vld [vmem:[%s624 + $0x590] sm:%s617]
                  %1003 = vst [vmem:[%s625 + $0x2f0] sm:%s617] %v1002
                  %v1004 = vld [vmem:[%s624 + $0x594] sm:%s617]
                  %1005 = vst [vmem:[%s625 + $0x2f4] sm:%s617] %v1004
                  %v1006 = vld [vmem:[%s624 + $0x598] sm:%s617]
                  %1007 = vst [vmem:[%s625 + $0x2f8] sm:%s617] %v1006
                  %v1008 = vld [vmem:[%s624 + $0x59c] sm:%s617]
                  %1009 = vst [vmem:[%s625 + $0x2fc] sm:%s617] %v1008
                $region71: #{birdclef_forward.1} parent=58 // loop_footer
                  %s623 = sadd.s32 1, %s619
                $region72: #{birdclef_forward.1} parent=58 // loop_footer_branch
                  %618 = sbr.rel target = $region68
                $region73: #{birdclef_forward.1} parent=58 // loop_exit
                  _
              $region59: #{birdclef_forward.1} parent=43 // pred_fallthru
                _
            $region44: #{birdclef_forward.1} parent=39 // pred_fallthru
              _
            // Predicated region
            $region45: #{birdclef_forward.1} parent=39 // pred_check
              _
            $region46: #{birdclef_forward.1} parent=39 // pred_check_branch
              %211 = sbr.rel (0) target = $region48
            $region47: #{birdclef_forward.1} parent=39 // pred_region
              %s213 = ssub.s32 16, 1
              loop: start=0, step=1, limit=1
              $region49: #{birdclef_forward.1} parent=47 // loop_pre_header
                _
              $region50: #{birdclef_forward.1} parent=47 // loop_header
                %s215 = sphi 0, %s219
                %p216 = scmp.ge.s32.totalorder %s215, 1
                %s220 = sphi %s205, %s205
                %s221 = sphi %s198, %s198
              $region51: #{birdclef_forward.1} parent=47 // loop_header_branch
                %218 = sbr.rel (%p216) target = $region55
              $region52: #{birdclef_forward.1} parent=47 // loop_body
                %v222 = vld [vmem:[%s220] sm:%s213]
                %223 = vst [vmem:[%s221] sm:%s213] %v222
                %v224 = vld [vmem:[%s220 + $0x4] sm:%s213]
                %225 = vst [vmem:[%s221 + $0x4] sm:%s213] %v224
                %v226 = vld [vmem:[%s220 + $0x8] sm:%s213]
                %227 = vst [vmem:[%s221 + $0x8] sm:%s213] %v226
                %v228 = vld [vmem:[%s220 + $0xc] sm:%s213]
                %229 = vst [vmem:[%s221 + $0xc] sm:%s213] %v228
                %v230 = vld [vmem:[%s220 + $0x10] sm:%s213]
                %231 = vst [vmem:[%s221 + $0x10] sm:%s213] %v230
                %v232 = vld [vmem:[%s220 + $0x14] sm:%s213]
                %233 = vst [vmem:[%s221 + $0x14] sm:%s213] %v232
                %v234 = vld [vmem:[%s220 + $0x18] sm:%s213]
                %235 = vst [vmem:[%s221 + $0x18] sm:%s213] %v234
                %v236 = vld [vmem:[%s220 + $0x1c] sm:%s213]
                %237 = vst [vmem:[%s221 + $0x1c] sm:%s213] %v236
                %v238 = vld [vmem:[%s220 + $0x20] sm:%s213]
                %239 = vst [vmem:[%s221 + $0x20] sm:%s213] %v238
                %v240 = vld [vmem:[%s220 + $0x24] sm:%s213]
                %241 = vst [vmem:[%s221 + $0x24] sm:%s213] %v240
                %v242 = vld [vmem:[%s220 + $0x28] sm:%s213]
                %243 = vst [vmem:[%s221 + $0x28] sm:%s213] %v242
                %v244 = vld [vmem:[%s220 + $0x2c] sm:%s213]
                %245 = vst [vmem:[%s221 + $0x2c] sm:%s213] %v244
                %v246 = vld [vmem:[%s220 + $0x30] sm:%s213]
                %247 = vst [vmem:[%s221 + $0x30] sm:%s213] %v246
                %v248 = vld [vmem:[%s220 + $0x34] sm:%s213]
                %249 = vst [vmem:[%s221 + $0x34] sm:%s213] %v248
                %v250 = vld [vmem:[%s220 + $0x38] sm:%s213]
                %251 = vst [vmem:[%s221 + $0x38] sm:%s213] %v250
                %v252 = vld [vmem:[%s220 + $0x3c] sm:%s213]
                %253 = vst [vmem:[%s221 + $0x3c] sm:%s213] %v252
                %v254 = vld [vmem:[%s220 + $0x40] sm:%s213]
                %255 = vst [vmem:[%s221 + $0x40] sm:%s213] %v254
                %v256 = vld [vmem:[%s220 + $0x44] sm:%s213]
                %257 = vst [vmem:[%s221 + $0x44] sm:%s213] %v256
                %v258 = vld [vmem:[%s220 + $0x48] sm:%s213]
                %259 = vst [vmem:[%s221 + $0x48] sm:%s213] %v258
                %v260 = vld [vmem:[%s220 + $0x4c] sm:%s213]
                %261 = vst [vmem:[%s221 + $0x4c] sm:%s213] %v260
                %v262 = vld [vmem:[%s220 + $0x50] sm:%s213]
                %263 = vst [vmem:[%s221 + $0x50] sm:%s213] %v262
                %v264 = vld [vmem:[%s220 + $0x54] sm:%s213]
                %265 = vst [vmem:[%s221 + $0x54] sm:%s213] %v264
                %v266 = vld [vmem:[%s220 + $0x58] sm:%s213]
                %267 = vst [vmem:[%s221 + $0x58] sm:%s213] %v266
                %v268 = vld [vmem:[%s220 + $0x5c] sm:%s213]
                %269 = vst [vmem:[%s221 + $0x5c] sm:%s213] %v268
                %v270 = vld [vmem:[%s220 + $0xc0] sm:%s213]
                %271 = vst [vmem:[%s221 + $0x60] sm:%s213] %v270
                %v272 = vld [vmem:[%s220 + $0xc4] sm:%s213]
                %273 = vst [vmem:[%s221 + $0x64] sm:%s213] %v272
                %v274 = vld [vmem:[%s220 + $0xc8] sm:%s213]
                %275 = vst [vmem:[%s221 + $0x68] sm:%s213] %v274
                %v276 = vld [vmem:[%s220 + $0xcc] sm:%s213]
                %277 = vst [vmem:[%s221 + $0x6c] sm:%s213] %v276
                %v278 = vld [vmem:[%s220 + $0xd0] sm:%s213]
                %279 = vst [vmem:[%s221 + $0x70] sm:%s213] %v278
                %v280 = vld [vmem:[%s220 + $0xd4] sm:%s213]
                %281 = vst [vmem:[%s221 + $0x74] sm:%s213] %v280
                %v282 = vld [vmem:[%s220 + $0xd8] sm:%s213]
                %283 = vst [vmem:[%s221 + $0x78] sm:%s213] %v282
                %v284 = vld [vmem:[%s220 + $0xdc] sm:%s213]
                %285 = vst [vmem:[%s221 + $0x7c] sm:%s213] %v284
                %v286 = vld [vmem:[%s220 + $0xe0] sm:%s213]
                %287 = vst [vmem:[%s221 + $0x80] sm:%s213] %v286
                %v288 = vld [vmem:[%s220 + $0xe4] sm:%s213]
                %289 = vst [vmem:[%s221 + $0x84] sm:%s213] %v288
                %v290 = vld [vmem:[%s220 + $0xe8] sm:%s213]
                %291 = vst [vmem:[%s221 + $0x88] sm:%s213] %v290
                %v292 = vld [vmem:[%s220 + $0xec] sm:%s213]
                %293 = vst [vmem:[%s221 + $0x8c] sm:%s213] %v292
                %v294 = vld [vmem:[%s220 + $0xf0] sm:%s213]
                %295 = vst [vmem:[%s221 + $0x90] sm:%s213] %v294
                %v296 = vld [vmem:[%s220 + $0xf4] sm:%s213]
                %297 = vst [vmem:[%s221 + $0x94] sm:%s213] %v296
                %v298 = vld [vmem:[%s220 + $0xf8] sm:%s213]
                %299 = vst [vmem:[%s221 + $0x98] sm:%s213] %v298
                %v300 = vld [vmem:[%s220 + $0xfc] sm:%s213]
                %301 = vst [vmem:[%s221 + $0x9c] sm:%s213] %v300
                %v302 = vld [vmem:[%s220 + $0x100] sm:%s213]
                %303 = vst [vmem:[%s221 + $0xa0] sm:%s213] %v302
                %v304 = vld [vmem:[%s220 + $0x104] sm:%s213]
                %305 = vst [vmem:[%s221 + $0xa4] sm:%s213] %v304
                %v306 = vld [vmem:[%s220 + $0x108] sm:%s213]
                %307 = vst [vmem:[%s221 + $0xa8] sm:%s213] %v306
                %v308 = vld [vmem:[%s220 + $0x10c] sm:%s213]
                %309 = vst [vmem:[%s221 + $0xac] sm:%s213] %v308
                %v310 = vld [vmem:[%s220 + $0x110] sm:%s213]
                %311 = vst [vmem:[%s221 + $0xb0] sm:%s213] %v310
                %v312 = vld [vmem:[%s220 + $0x114] sm:%s213]
                %313 = vst [vmem:[%s221 + $0xb4] sm:%s213] %v312
                %v314 = vld [vmem:[%s220 + $0x118] sm:%s213]
                %315 = vst [vmem:[%s221 + $0xb8] sm:%s213] %v314
                %v316 = vld [vmem:[%s220 + $0x11c] sm:%s213]
                %317 = vst [vmem:[%s221 + $0xbc] sm:%s213] %v316
                %v318 = vld [vmem:[%s220 + $0x180] sm:%s213]
                %319 = vst [vmem:[%s221 + $0xc0] sm:%s213] %v318
                %v320 = vld [vmem:[%s220 + $0x184] sm:%s213]
                %321 = vst [vmem:[%s221 + $0xc4] sm:%s213] %v320
                %v322 = vld [vmem:[%s220 + $0x188] sm:%s213]
                %323 = vst [vmem:[%s221 + $0xc8] sm:%s213] %v322
                %v324 = vld [vmem:[%s220 + $0x18c] sm:%s213]
                %325 = vst [vmem:[%s221 + $0xcc] sm:%s213] %v324
                %v326 = vld [vmem:[%s220 + $0x190] sm:%s213]
                %327 = vst [vmem:[%s221 + $0xd0] sm:%s213] %v326
                %v328 = vld [vmem:[%s220 + $0x194] sm:%s213]
                %329 = vst [vmem:[%s221 + $0xd4] sm:%s213] %v328
                %v330 = vld [vmem:[%s220 + $0x198] sm:%s213]
                %331 = vst [vmem:[%s221 + $0xd8] sm:%s213] %v330
                %v332 = vld [vmem:[%s220 + $0x19c] sm:%s213]
                %333 = vst [vmem:[%s221 + $0xdc] sm:%s213] %v332
                %v334 = vld [vmem:[%s220 + $0x1a0] sm:%s213]
                %335 = vst [vmem:[%s221 + $0xe0] sm:%s213] %v334
                %v336 = vld [vmem:[%s220 + $0x1a4] sm:%s213]
                %337 = vst [vmem:[%s221 + $0xe4] sm:%s213] %v336
                %v338 = vld [vmem:[%s220 + $0x1a8] sm:%s213]
                %339 = vst [vmem:[%s221 + $0xe8] sm:%s213] %v338
                %v340 = vld [vmem:[%s220 + $0x1ac] sm:%s213]
                %341 = vst [vmem:[%s221 + $0xec] sm:%s213] %v340
                %v342 = vld [vmem:[%s220 + $0x1b0] sm:%s213]
                %343 = vst [vmem:[%s221 + $0xf0] sm:%s213] %v342
                %v344 = vld [vmem:[%s220 + $0x1b4] sm:%s213]
                %345 = vst [vmem:[%s221 + $0xf4] sm:%s213] %v344
                %v346 = vld [vmem:[%s220 + $0x1b8] sm:%s213]
                %347 = vst [vmem:[%s221 + $0xf8] sm:%s213] %v346
                %v348 = vld [vmem:[%s220 + $0x1bc] sm:%s213]
                %349 = vst [vmem:[%s221 + $0xfc] sm:%s213] %v348
                %v350 = vld [vmem:[%s220 + $0x1c0] sm:%s213]
                %351 = vst [vmem:[%s221 + $0x100] sm:%s213] %v350
                %v352 = vld [vmem:[%s220 + $0x1c4] sm:%s213]
                %353 = vst [vmem:[%s221 + $0x104] sm:%s213] %v352
                %v354 = vld [vmem:[%s220 + $0x1c8] sm:%s213]
                %355 = vst [vmem:[%s221 + $0x108] sm:%s213] %v354
                %v356 = vld [vmem:[%s220 + $0x1cc] sm:%s213]
                %357 = vst [vmem:[%s221 + $0x10c] sm:%s213] %v356
                %v358 = vld [vmem:[%s220 + $0x1d0] sm:%s213]
                %359 = vst [vmem:[%s221 + $0x110] sm:%s213] %v358
                %v360 = vld [vmem:[%s220 + $0x1d4] sm:%s213]
                %361 = vst [vmem:[%s221 + $0x114] sm:%s213] %v360
                %v362 = vld [vmem:[%s220 + $0x1d8] sm:%s213]
                %363 = vst [vmem:[%s221 + $0x118] sm:%s213] %v362
                %v364 = vld [vmem:[%s220 + $0x1dc] sm:%s213]
                %365 = vst [vmem:[%s221 + $0x11c] sm:%s213] %v364
                %v366 = vld [vmem:[%s220 + $0x240] sm:%s213]
                %367 = vst [vmem:[%s221 + $0x120] sm:%s213] %v366
                %v368 = vld [vmem:[%s220 + $0x244] sm:%s213]
                %369 = vst [vmem:[%s221 + $0x124] sm:%s213] %v368
                %v370 = vld [vmem:[%s220 + $0x248] sm:%s213]
                %371 = vst [vmem:[%s221 + $0x128] sm:%s213] %v370
                %v372 = vld [vmem:[%s220 + $0x24c] sm:%s213]
                %373 = vst [vmem:[%s221 + $0x12c] sm:%s213] %v372
                %v374 = vld [vmem:[%s220 + $0x250] sm:%s213]
                %375 = vst [vmem:[%s221 + $0x130] sm:%s213] %v374
                %v376 = vld [vmem:[%s220 + $0x254] sm:%s213]
                %377 = vst [vmem:[%s221 + $0x134] sm:%s213] %v376
                %v378 = vld [vmem:[%s220 + $0x258] sm:%s213]
                %379 = vst [vmem:[%s221 + $0x138] sm:%s213] %v378
                %v380 = vld [vmem:[%s220 + $0x25c] sm:%s213]
                %381 = vst [vmem:[%s221 + $0x13c] sm:%s213] %v380
                %v382 = vld [vmem:[%s220 + $0x260] sm:%s213]
                %383 = vst [vmem:[%s221 + $0x140] sm:%s213] %v382
                %v384 = vld [vmem:[%s220 + $0x264] sm:%s213]
                %385 = vst [vmem:[%s221 + $0x144] sm:%s213] %v384
                %v386 = vld [vmem:[%s220 + $0x268] sm:%s213]
                %387 = vst [vmem:[%s221 + $0x148] sm:%s213] %v386
                %v388 = vld [vmem:[%s220 + $0x26c] sm:%s213]
                %389 = vst [vmem:[%s221 + $0x14c] sm:%s213] %v388
                %v390 = vld [vmem:[%s220 + $0x270] sm:%s213]
                %391 = vst [vmem:[%s221 + $0x150] sm:%s213] %v390
                %v392 = vld [vmem:[%s220 + $0x274] sm:%s213]
                %393 = vst [vmem:[%s221 + $0x154] sm:%s213] %v392
                %v394 = vld [vmem:[%s220 + $0x278] sm:%s213]
                %395 = vst [vmem:[%s221 + $0x158] sm:%s213] %v394
                %v396 = vld [vmem:[%s220 + $0x27c] sm:%s213]
                %397 = vst [vmem:[%s221 + $0x15c] sm:%s213] %v396
                %v398 = vld [vmem:[%s220 + $0x280] sm:%s213]
                %399 = vst [vmem:[%s221 + $0x160] sm:%s213] %v398
                %v400 = vld [vmem:[%s220 + $0x284] sm:%s213]
                %401 = vst [vmem:[%s221 + $0x164] sm:%s213] %v400
                %v402 = vld [vmem:[%s220 + $0x288] sm:%s213]
                %403 = vst [vmem:[%s221 + $0x168] sm:%s213] %v402
                %v404 = vld [vmem:[%s220 + $0x28c] sm:%s213]
                %405 = vst [vmem:[%s221 + $0x16c] sm:%s213] %v404
                %v406 = vld [vmem:[%s220 + $0x290] sm:%s213]
                %407 = vst [vmem:[%s221 + $0x170] sm:%s213] %v406
                %v408 = vld [vmem:[%s220 + $0x294] sm:%s213]
                %409 = vst [vmem:[%s221 + $0x174] sm:%s213] %v408
                %v410 = vld [vmem:[%s220 + $0x298] sm:%s213]
                %411 = vst [vmem:[%s221 + $0x178] sm:%s213] %v410
                %v412 = vld [vmem:[%s220 + $0x29c] sm:%s213]
                %413 = vst [vmem:[%s221 + $0x17c] sm:%s213] %v412
                %v414 = vld [vmem:[%s220 + $0x300] sm:%s213]
                %415 = vst [vmem:[%s221 + $0x180] sm:%s213] %v414
                %v416 = vld [vmem:[%s220 + $0x304] sm:%s213]
                %417 = vst [vmem:[%s221 + $0x184] sm:%s213] %v416
                %v418 = vld [vmem:[%s220 + $0x308] sm:%s213]
                %419 = vst [vmem:[%s221 + $0x188] sm:%s213] %v418
                %v420 = vld [vmem:[%s220 + $0x30c] sm:%s213]
                %421 = vst [vmem:[%s221 + $0x18c] sm:%s213] %v420
                %v422 = vld [vmem:[%s220 + $0x310] sm:%s213]
                %423 = vst [vmem:[%s221 + $0x190] sm:%s213] %v422
                %v424 = vld [vmem:[%s220 + $0x314] sm:%s213]
                %425 = vst [vmem:[%s221 + $0x194] sm:%s213] %v424
                %v426 = vld [vmem:[%s220 + $0x318] sm:%s213]
                %427 = vst [vmem:[%s221 + $0x198] sm:%s213] %v426
                %v428 = vld [vmem:[%s220 + $0x31c] sm:%s213]
                %429 = vst [vmem:[%s221 + $0x19c] sm:%s213] %v428
                %v430 = vld [vmem:[%s220 + $0x320] sm:%s213]
                %431 = vst [vmem:[%s221 + $0x1a0] sm:%s213] %v430
                %v432 = vld [vmem:[%s220 + $0x324] sm:%s213]
                %433 = vst [vmem:[%s221 + $0x1a4] sm:%s213] %v432
                %v434 = vld [vmem:[%s220 + $0x328] sm:%s213]
                %435 = vst [vmem:[%s221 + $0x1a8] sm:%s213] %v434
                %v436 = vld [vmem:[%s220 + $0x32c] sm:%s213]
                %437 = vst [vmem:[%s221 + $0x1ac] sm:%s213] %v436
                %v438 = vld [vmem:[%s220 + $0x330] sm:%s213]
                %439 = vst [vmem:[%s221 + $0x1b0] sm:%s213] %v438
                %v440 = vld [vmem:[%s220 + $0x334] sm:%s213]
                %441 = vst [vmem:[%s221 + $0x1b4] sm:%s213] %v440
                %v442 = vld [vmem:[%s220 + $0x338] sm:%s213]
                %443 = vst [vmem:[%s221 + $0x1b8] sm:%s213] %v442
                %v444 = vld [vmem:[%s220 + $0x33c] sm:%s213]
                %445 = vst [vmem:[%s221 + $0x1bc] sm:%s213] %v444
                %v446 = vld [vmem:[%s220 + $0x340] sm:%s213]
                %447 = vst [vmem:[%s221 + $0x1c0] sm:%s213] %v446
                %v448 = vld [vmem:[%s220 + $0x344] sm:%s213]
                %449 = vst [vmem:[%s221 + $0x1c4] sm:%s213] %v448
                %v450 = vld [vmem:[%s220 + $0x348] sm:%s213]
                %451 = vst [vmem:[%s221 + $0x1c8] sm:%s213] %v450
                %v452 = vld [vmem:[%s220 + $0x34c] sm:%s213]
                %453 = vst [vmem:[%s221 + $0x1cc] sm:%s213] %v452
                %v454 = vld [vmem:[%s220 + $0x350] sm:%s213]
                %455 = vst [vmem:[%s221 + $0x1d0] sm:%s213] %v454
                %v456 = vld [vmem:[%s220 + $0x354] sm:%s213]
                %457 = vst [vmem:[%s221 + $0x1d4] sm:%s213] %v456
                %v458 = vld [vmem:[%s220 + $0x358] sm:%s213]
                %459 = vst [vmem:[%s221 + $0x1d8] sm:%s213] %v458
                %v460 = vld [vmem:[%s220 + $0x35c] sm:%s213]
                %461 = vst [vmem:[%s221 + $0x1dc] sm:%s213] %v460
                %v462 = vld [vmem:[%s220 + $0x3c0] sm:%s213]
                %463 = vst [vmem:[%s221 + $0x1e0] sm:%s213] %v462
                %v464 = vld [vmem:[%s220 + $0x3c4] sm:%s213]
                %465 = vst [vmem:[%s221 + $0x1e4] sm:%s213] %v464
                %v466 = vld [vmem:[%s220 + $0x3c8] sm:%s213]
                %467 = vst [vmem:[%s221 + $0x1e8] sm:%s213] %v466
                %v468 = vld [vmem:[%s220 + $0x3cc] sm:%s213]
                %469 = vst [vmem:[%s221 + $0x1ec] sm:%s213] %v468
                %v470 = vld [vmem:[%s220 + $0x3d0] sm:%s213]
                %471 = vst [vmem:[%s221 + $0x1f0] sm:%s213] %v470
                %v472 = vld [vmem:[%s220 + $0x3d4] sm:%s213]
                %473 = vst [vmem:[%s221 + $0x1f4] sm:%s213] %v472
                %v474 = vld [vmem:[%s220 + $0x3d8] sm:%s213]
                %475 = vst [vmem:[%s221 + $0x1f8] sm:%s213] %v474
                %v476 = vld [vmem:[%s220 + $0x3dc] sm:%s213]
                %477 = vst [vmem:[%s221 + $0x1fc] sm:%s213] %v476
                %v478 = vld [vmem:[%s220 + $0x3e0] sm:%s213]
                %479 = vst [vmem:[%s221 + $0x200] sm:%s213] %v478
                %v480 = vld [vmem:[%s220 + $0x3e4] sm:%s213]
                %481 = vst [vmem:[%s221 + $0x204] sm:%s213] %v480
                %v482 = vld [vmem:[%s220 + $0x3e8] sm:%s213]
                %483 = vst [vmem:[%s221 + $0x208] sm:%s213] %v482
                %v484 = vld [vmem:[%s220 + $0x3ec] sm:%s213]
                %485 = vst [vmem:[%s221 + $0x20c] sm:%s213] %v484
                %v486 = vld [vmem:[%s220 + $0x3f0] sm:%s213]
                %487 = vst [vmem:[%s221 + $0x210] sm:%s213] %v486
                %v488 = vld [vmem:[%s220 + $0x3f4] sm:%s213]
                %489 = vst [vmem:[%s221 + $0x214] sm:%s213] %v488
                %v490 = vld [vmem:[%s220 + $0x3f8] sm:%s213]
                %491 = vst [vmem:[%s221 + $0x218] sm:%s213] %v490
                %v492 = vld [vmem:[%s220 + $0x3fc] sm:%s213]
                %493 = vst [vmem:[%s221 + $0x21c] sm:%s213] %v492
                %v494 = vld [vmem:[%s220 + $0x400] sm:%s213]
                %495 = vst [vmem:[%s221 + $0x220] sm:%s213] %v494
                %v496 = vld [vmem:[%s220 + $0x404] sm:%s213]
                %497 = vst [vmem:[%s221 + $0x224] sm:%s213] %v496
                %v498 = vld [vmem:[%s220 + $0x408] sm:%s213]
                %499 = vst [vmem:[%s221 + $0x228] sm:%s213] %v498
                %v500 = vld [vmem:[%s220 + $0x40c] sm:%s213]
                %501 = vst [vmem:[%s221 + $0x22c] sm:%s213] %v500
                %v502 = vld [vmem:[%s220 + $0x410] sm:%s213]
                %503 = vst [vmem:[%s221 + $0x230] sm:%s213] %v502
                %v504 = vld [vmem:[%s220 + $0x414] sm:%s213]
                %505 = vst [vmem:[%s221 + $0x234] sm:%s213] %v504
                %v506 = vld [vmem:[%s220 + $0x418] sm:%s213]
                %507 = vst [vmem:[%s221 + $0x238] sm:%s213] %v506
                %v508 = vld [vmem:[%s220 + $0x41c] sm:%s213]
                %509 = vst [vmem:[%s221 + $0x23c] sm:%s213] %v508
                %v510 = vld [vmem:[%s220 + $0x480] sm:%s213]
                %511 = vst [vmem:[%s221 + $0x240] sm:%s213] %v510
                %v512 = vld [vmem:[%s220 + $0x484] sm:%s213]
                %513 = vst [vmem:[%s221 + $0x244] sm:%s213] %v512
                %v514 = vld [vmem:[%s220 + $0x488] sm:%s213]
                %515 = vst [vmem:[%s221 + $0x248] sm:%s213] %v514
                %v516 = vld [vmem:[%s220 + $0x48c] sm:%s213]
                %517 = vst [vmem:[%s221 + $0x24c] sm:%s213] %v516
                %v518 = vld [vmem:[%s220 + $0x490] sm:%s213]
                %519 = vst [vmem:[%s221 + $0x250] sm:%s213] %v518
                %v520 = vld [vmem:[%s220 + $0x494] sm:%s213]
                %521 = vst [vmem:[%s221 + $0x254] sm:%s213] %v520
                %v522 = vld [vmem:[%s220 + $0x498] sm:%s213]
                %523 = vst [vmem:[%s221 + $0x258] sm:%s213] %v522
                %v524 = vld [vmem:[%s220 + $0x49c] sm:%s213]
                %525 = vst [vmem:[%s221 + $0x25c] sm:%s213] %v524
                %v526 = vld [vmem:[%s220 + $0x4a0] sm:%s213]
                %527 = vst [vmem:[%s221 + $0x260] sm:%s213] %v526
                %v528 = vld [vmem:[%s220 + $0x4a4] sm:%s213]
                %529 = vst [vmem:[%s221 + $0x264] sm:%s213] %v528
                %v530 = vld [vmem:[%s220 + $0x4a8] sm:%s213]
                %531 = vst [vmem:[%s221 + $0x268] sm:%s213] %v530
                %v532 = vld [vmem:[%s220 + $0x4ac] sm:%s213]
                %533 = vst [vmem:[%s221 + $0x26c] sm:%s213] %v532
                %v534 = vld [vmem:[%s220 + $0x4b0] sm:%s213]
                %535 = vst [vmem:[%s221 + $0x270] sm:%s213] %v534
                %v536 = vld [vmem:[%s220 + $0x4b4] sm:%s213]
                %537 = vst [vmem:[%s221 + $0x274] sm:%s213] %v536
                %v538 = vld [vmem:[%s220 + $0x4b8] sm:%s213]
                %539 = vst [vmem:[%s221 + $0x278] sm:%s213] %v538
                %v540 = vld [vmem:[%s220 + $0x4bc] sm:%s213]
                %541 = vst [vmem:[%s221 + $0x27c] sm:%s213] %v540
                %v542 = vld [vmem:[%s220 + $0x4c0] sm:%s213]
                %543 = vst [vmem:[%s221 + $0x280] sm:%s213] %v542
                %v544 = vld [vmem:[%s220 + $0x4c4] sm:%s213]
                %545 = vst [vmem:[%s221 + $0x284] sm:%s213] %v544
                %v546 = vld [vmem:[%s220 + $0x4c8] sm:%s213]
                %547 = vst [vmem:[%s221 + $0x288] sm:%s213] %v546
                %v548 = vld [vmem:[%s220 + $0x4cc] sm:%s213]
                %549 = vst [vmem:[%s221 + $0x28c] sm:%s213] %v548
                %v550 = vld [vmem:[%s220 + $0x4d0] sm:%s213]
                %551 = vst [vmem:[%s221 + $0x290] sm:%s213] %v550
                %v552 = vld [vmem:[%s220 + $0x4d4] sm:%s213]
                %553 = vst [vmem:[%s221 + $0x294] sm:%s213] %v552
                %v554 = vld [vmem:[%s220 + $0x4d8] sm:%s213]
                %555 = vst [vmem:[%s221 + $0x298] sm:%s213] %v554
                %v556 = vld [vmem:[%s220 + $0x4dc] sm:%s213]
                %557 = vst [vmem:[%s221 + $0x29c] sm:%s213] %v556
                %v558 = vld [vmem:[%s220 + $0x540] sm:%s213]
                %559 = vst [vmem:[%s221 + $0x2a0] sm:%s213] %v558
                %v560 = vld [vmem:[%s220 + $0x544] sm:%s213]
                %561 = vst [vmem:[%s221 + $0x2a4] sm:%s213] %v560
                %v562 = vld [vmem:[%s220 + $0x548] sm:%s213]
                %563 = vst [vmem:[%s221 + $0x2a8] sm:%s213] %v562
                %v564 = vld [vmem:[%s220 + $0x54c] sm:%s213]
                %565 = vst [vmem:[%s221 + $0x2ac] sm:%s213] %v564
                %v566 = vld [vmem:[%s220 + $0x550] sm:%s213]
                %567 = vst [vmem:[%s221 + $0x2b0] sm:%s213] %v566
                %v568 = vld [vmem:[%s220 + $0x554] sm:%s213]
                %569 = vst [vmem:[%s221 + $0x2b4] sm:%s213] %v568
                %v570 = vld [vmem:[%s220 + $0x558] sm:%s213]
                %571 = vst [vmem:[%s221 + $0x2b8] sm:%s213] %v570
                %v572 = vld [vmem:[%s220 + $0x55c] sm:%s213]
                %573 = vst [vmem:[%s221 + $0x2bc] sm:%s213] %v572
                %v574 = vld [vmem:[%s220 + $0x560] sm:%s213]
                %575 = vst [vmem:[%s221 + $0x2c0] sm:%s213] %v574
                %v576 = vld [vmem:[%s220 + $0x564] sm:%s213]
                %577 = vst [vmem:[%s221 + $0x2c4] sm:%s213] %v576
                %v578 = vld [vmem:[%s220 + $0x568] sm:%s213]
                %579 = vst [vmem:[%s221 + $0x2c8] sm:%s213] %v578
                %v580 = vld [vmem:[%s220 + $0x56c] sm:%s213]
                %581 = vst [vmem:[%s221 + $0x2cc] sm:%s213] %v580
                %v582 = vld [vmem:[%s220 + $0x570] sm:%s213]
                %583 = vst [vmem:[%s221 + $0x2d0] sm:%s213] %v582
                %v584 = vld [vmem:[%s220 + $0x574] sm:%s213]
                %585 = vst [vmem:[%s221 + $0x2d4] sm:%s213] %v584
                %v586 = vld [vmem:[%s220 + $0x578] sm:%s213]
                %587 = vst [vmem:[%s221 + $0x2d8] sm:%s213] %v586
                %v588 = vld [vmem:[%s220 + $0x57c] sm:%s213]
                %589 = vst [vmem:[%s221 + $0x2dc] sm:%s213] %v588
                %v590 = vld [vmem:[%s220 + $0x580] sm:%s213]
                %591 = vst [vmem:[%s221 + $0x2e0] sm:%s213] %v590
                %v592 = vld [vmem:[%s220 + $0x584] sm:%s213]
                %593 = vst [vmem:[%s221 + $0x2e4] sm:%s213] %v592
                %v594 = vld [vmem:[%s220 + $0x588] sm:%s213]
                %595 = vst [vmem:[%s221 + $0x2e8] sm:%s213] %v594
                %v596 = vld [vmem:[%s220 + $0x58c] sm:%s213]
                %597 = vst [vmem:[%s221 + $0x2ec] sm:%s213] %v596
                %v598 = vld [vmem:[%s220 + $0x590] sm:%s213]
                %599 = vst [vmem:[%s221 + $0x2f0] sm:%s213] %v598
                %v600 = vld [vmem:[%s220 + $0x594] sm:%s213]
                %601 = vst [vmem:[%s221 + $0x2f4] sm:%s213] %v600
                %v602 = vld [vmem:[%s220 + $0x598] sm:%s213]
                %603 = vst [vmem:[%s221 + $0x2f8] sm:%s213] %v602
                %v604 = vld [vmem:[%s220 + $0x59c] sm:%s213]
                %605 = vst [vmem:[%s221 + $0x2fc] sm:%s213] %v604
              $region53: #{birdclef_forward.1} parent=47 // loop_footer
                %s219 = sadd.s32 1, %s215
              $region54: #{birdclef_forward.1} parent=47 // loop_footer_branch
                %214 = sbr.rel target = $region50
              $region55: #{birdclef_forward.1} parent=47 // loop_exit
                _
            $region48: #{birdclef_forward.1} parent=39 // pred_fallthru
              _
          $region40: #{birdclef_forward.1} parent=35 // pred_fallthru
            _
          %1010 = vnop
        $region36: #{birdclef_forward.1} parent=31 // pred_fallthru
          _
      $region32: #{birdclef_forward.1} parent=5 // pred_fallthru
        _
      %p1011 = scmp.le.s32.totalorder 1, %s11
      %p1012 = scmp.lt.s32.totalorder %s11, 3
      %p1013 = pnand %p1011, %p1012
      %p1014 = pneg %p1013
      // Predicated region
      $region74: #{birdclef_forward.1} parent=5 // pred_check
        _
      $region75: #{birdclef_forward.1} parent=5 // pred_check_branch
        %1016 = sbr.rel (%p1013) target = $region77
      $region76: #{birdclef_forward.1} parent=5 // pred_region
        %s1017 = ssub.s32 %s11, 1
        %s1018 = sand.u32 %s38, 1
        %s1019 = sand.u32 %s38, 1
        %s1020 = smul.addr %s1019, 768
        %s1021 = scalar_lea.vmem [#allocation3], %s1020
        // Predicated region
        $region78: #{birdclef_forward.1} parent=76 // pred_check
          %p1022 = pneg %p51
        $region79: #{birdclef_forward.1} parent=76 // pred_check_branch
          %1024 = sbr.rel (%p1022) target = $region81
        $region80: #{birdclef_forward.1} parent=76 // pred_region
          _
        $region81: #{birdclef_forward.1} parent=76 // pred_fallthru
          _
        %s1025 = sand.u32 %s38, 1
        %s1026 = sand.u32 %s38, 1
        %s1027 = smul.addr %s1026, 768
        %s1028 = scalar_lea.vmem [#allocation3], %s1027
        %p1029 = pneg %p51
        %p1030 = pneg %p48
        %p1031 = pneg %p72
        %p1032 = pneg %p69
        %p1033 = pneg %p93
        %p1034 = pneg %p90
        %p1035 = pneg %p114
        %p1036 = pneg %p111
        %p1037 = pneg %p135
        %p1038 = pneg %p132
        %p1039 = pneg %p161
        %p1040 = pneg %p158
        %p1041 = scmp.lt.s32.totalorder %s20, 0
        %s1042 = scalar_select %p1041, %s20, 0
        %s1043 = smul.addr %s1042, 8
        %s1044 = scalar_lea.vmem %s5, %s1043
        %s1045 = smul.u32 8, %s20
        %s1046 = smul.u32 8, %s21
        %p1047 = scmp.lt.s32.totalorder %s20, 0
        %s1048 = scalar_select %p1047, %s20, 0
        %s1049 = smul.addr %s1048, 8
        %s1050 = scalar_lea.vmem %s5, %s1049
        %p1052 = scmp.eq.s32.totalorder %s21, 0
        // Predicated region
        $region82: #{birdclef_forward.1} parent=76 // pred_check
          %p1053 = pneg %p1052
        $region83: #{birdclef_forward.1} parent=76 // pred_check_branch
          %1055 = sbr.rel (%p1053) target = $region85
        $region84: #{birdclef_forward.1} parent=76 // pred_region
          %1056 = vst [vmem:[#allocation2] sm:$0xff] 0.0
        $region85: #{birdclef_forward.1} parent=76 // pred_fallthru
          _
        %v1057 = vld [vmem:[%s1021] sm:$0xf]
        %v1058 = vld [vmem:[%s1021 + $0x4] sm:$0xf]
        %v1059 = vld [vmem:[%s1021 + $0x8] sm:$0x1]
        %v1060 = vld [vmem:[%s1021 + $0xc] sm:$0xf]
        %v1061 = vld [vmem:[%s1021 + $0x10] sm:$0xf]
        %v1062 = vld [vmem:[%s1021 + $0x14] sm:$0x1]
        %v1063 = vld [vmem:[%s1021 + $0x18] sm:$0xf]
        %v1064 = vld [vmem:[%s1021 + $0x1c] sm:$0xf]
        %v1065 = vld [vmem:[%s1021 + $0x20] sm:$0x1]
        %v1066 = vld [vmem:[%s1021 + $0x24] sm:$0xf]
        %v1067 = vld [vmem:[%s1021 + $0x28] sm:$0xf]
        %v1068 = vld [vmem:[%s1021 + $0x2c] sm:$0x1]
        %v1069 = vld [vmem:[%s1021 + $0x30] sm:$0xf]
        %v1070 = vld [vmem:[%s1021 + $0x34] sm:$0xf]
        %v1071 = vld [vmem:[%s1021 + $0x38] sm:$0x1]
        %v1072 = vld [vmem:[%s1021 + $0x3c] sm:$0xf]
        %v1073 = vld [vmem:[%s1021 + $0x40] sm:$0xf]
        %v1074 = vld [vmem:[%s1021 + $0x44] sm:$0x1]
        %v1075 = vld [vmem:[%s1021 + $0x48] sm:$0xf]
        %v1076 = vld [vmem:[%s1021 + $0x4c] sm:$0xf]
        %v1077 = vld [vmem:[%s1021 + $0x50] sm:$0x1]
        %v1078 = vld [vmem:[%s1021 + $0x54] sm:$0xf]
        %v1079 = vld [vmem:[%s1021 + $0x58] sm:$0xf]
        %v1080 = vld [vmem:[%s1021 + $0x5c] sm:$0x1]
        %v1081 = vld [vmem:[%s1021 + $0x60] sm:$0xf]
        %v1082 = vld [vmem:[%s1021 + $0x64] sm:$0xf]
        %v1083 = vld [vmem:[%s1021 + $0x68] sm:$0x1]
        %v1084 = vld [vmem:[%s1021 + $0x6c] sm:$0xf]
        %v1085 = vld [vmem:[%s1021 + $0x70] sm:$0xf]
        %v1086 = vld [vmem:[%s1021 + $0x74] sm:$0x1]
        %v1087 = vld [vmem:[%s1021 + $0x78] sm:$0xf]
        %v1088 = vld [vmem:[%s1021 + $0x7c] sm:$0xf]
        %v1089 = vld [vmem:[%s1021 + $0x80] sm:$0x1]
        %v1090 = vld [vmem:[%s1021 + $0x84] sm:$0xf]
        %v1091 = vld [vmem:[%s1021 + $0x88] sm:$0xf]
        %v1092 = vld [vmem:[%s1021 + $0x8c] sm:$0x1]
        %v1093 = vld [vmem:[%s1021 + $0x90] sm:$0xf]
        %v1094 = vld [vmem:[%s1021 + $0x94] sm:$0xf]
        %v1095 = vld [vmem:[%s1021 + $0x98] sm:$0x1]
        %v1096 = vld [vmem:[%s1021 + $0x9c] sm:$0xf]
        %v1097 = vld [vmem:[%s1021 + $0xa0] sm:$0xf]
        %v1098 = vld [vmem:[%s1021 + $0xa4] sm:$0x1]
        %v1099 = vld [vmem:[%s1021 + $0xa8] sm:$0xf]
        %v1100 = vld [vmem:[%s1021 + $0xac] sm:$0xf]
        %v1101 = vld [vmem:[%s1021 + $0xb0] sm:$0x1]
        %v1102 = vld [vmem:[%s1021 + $0xb4] sm:$0xf]
        %v1103 = vld [vmem:[%s1021 + $0xb8] sm:$0xf]
        %v1104 = vld [vmem:[%s1021 + $0xbc] sm:$0x1]
        %v1105 = vld [vmem:[%s1021 + $0xc0] sm:$0xf]
        %v1106 = vld [vmem:[%s1021 + $0xc4] sm:$0xf]
        %v1107 = vld [vmem:[%s1021 + $0xc8] sm:$0x1]
        %v1108 = vld [vmem:[%s1021 + $0xcc] sm:$0xf]
        %v1109 = vld [vmem:[%s1021 + $0xd0] sm:$0xf]
        %v1110 = vld [vmem:[%s1021 + $0xd4] sm:$0x1]
        %v1111 = vld [vmem:[%s1021 + $0xd8] sm:$0xf]
        %v1112 = vld [vmem:[%s1021 + $0xdc] sm:$0xf]
        %v1113 = vld [vmem:[%s1021 + $0xe0] sm:$0x1]
        %v1114 = vld [vmem:[%s1021 + $0xe4] sm:$0xf]
        %v1115 = vld [vmem:[%s1021 + $0xe8] sm:$0xf]
        %v1116 = vld [vmem:[%s1021 + $0xec] sm:$0x1]
        %v1117 = vld [vmem:[%s1021 + $0xf0] sm:$0xf]
        %v1118 = vld [vmem:[%s1021 + $0xf4] sm:$0xf]
        %v1119 = vld [vmem:[%s1021 + $0xf8] sm:$0x1]
        %v1120 = vld [vmem:[%s1021 + $0xfc] sm:$0xf]
        %v1121 = vld [vmem:[%s1021 + $0x100] sm:$0xf]
        %v1122 = vld [vmem:[%s1021 + $0x104] sm:$0x1]
        %v1123 = vld [vmem:[%s1021 + $0x108] sm:$0xf]
        %v1124 = vld [vmem:[%s1021 + $0x10c] sm:$0xf]
        %v1125 = vld [vmem:[%s1021 + $0x110] sm:$0x1]
        %v1126 = vld [vmem:[%s1021 + $0x114] sm:$0xf]
        %v1127 = vld [vmem:[%s1021 + $0x118] sm:$0xf]
        %v1128 = vld [vmem:[%s1021 + $0x11c] sm:$0x1]
        %v1129 = vld [vmem:[%s1021 + $0x120] sm:$0xf]
        %v1130 = vld [vmem:[%s1021 + $0x124] sm:$0xf]
        %v1131 = vld [vmem:[%s1021 + $0x128] sm:$0x1]
        %v1132 = vld [vmem:[%s1021 + $0x12c] sm:$0xf]
        %v1133 = vld [vmem:[%s1021 + $0x130] sm:$0xf]
        %v1134 = vld [vmem:[%s1021 + $0x134] sm:$0x1]
        %v1135 = vld [vmem:[%s1021 + $0x138] sm:$0xf]
        %v1136 = vld [vmem:[%s1021 + $0x13c] sm:$0xf]
        %v1137 = vld [vmem:[%s1021 + $0x140] sm:$0x1]
        %v1138 = vld [vmem:[%s1021 + $0x144] sm:$0xf]
        %v1139 = vld [vmem:[%s1021 + $0x148] sm:$0xf]
        %v1140 = vld [vmem:[%s1021 + $0x14c] sm:$0x1]
        %v1141 = vld [vmem:[%s1021 + $0x150] sm:$0xf]
        %v1142 = vld [vmem:[%s1021 + $0x154] sm:$0xf]
        %v1143 = vld [vmem:[%s1021 + $0x158] sm:$0x1]
        %v1144 = vld [vmem:[%s1021 + $0x15c] sm:$0xf]
        %v1145 = vld [vmem:[%s1021 + $0x160] sm:$0xf]
        %v1146 = vld [vmem:[%s1021 + $0x164] sm:$0x1]
        %v1147 = vld [vmem:[%s1021 + $0x168] sm:$0xf]
        %v1148 = vld [vmem:[%s1021 + $0x16c] sm:$0xf]
        %v1149 = vld [vmem:[%s1021 + $0x170] sm:$0x1]
        %v1150 = vld [vmem:[%s1021 + $0x174] sm:$0xf]
        %v1151 = vld [vmem:[%s1021 + $0x178] sm:$0xf]
        %v1152 = vld [vmem:[%s1021 + $0x17c] sm:$0x1]
        %v1153 = vld [vmem:[%s1021 + $0x180] sm:$0xf]
        %v1154 = vld [vmem:[%s1021 + $0x184] sm:$0xf]
        %v1155 = vld [vmem:[%s1021 + $0x188] sm:$0x1]
        %v1156 = vld [vmem:[%s1021 + $0x18c] sm:$0xf]
        %v1157 = vld [vmem:[%s1021 + $0x190] sm:$0xf]
        %v1158 = vld [vmem:[%s1021 + $0x194] sm:$0x1]
        %v1159 = vld [vmem:[%s1021 + $0x198] sm:$0xf]
        %v1160 = vld [vmem:[%s1021 + $0x19c] sm:$0xf]
        %v1161 = vld [vmem:[%s1021 + $0x1a0] sm:$0x1]
        %v1162 = vld [vmem:[%s1021 + $0x1a4] sm:$0xf]
        %v1163 = vld [vmem:[%s1021 + $0x1a8] sm:$0xf]
        %v1164 = vld [vmem:[%s1021 + $0x1ac] sm:$0x1]
        %v1165 = vld [vmem:[%s1021 + $0x1b0] sm:$0xf]
        %v1166 = vld [vmem:[%s1021 + $0x1b4] sm:$0xf]
        %v1167 = vld [vmem:[%s1021 + $0x1b8] sm:$0x1]
        %v1168 = vld [vmem:[%s1021 + $0x1bc] sm:$0xf]
        %v1169 = vld [vmem:[%s1021 + $0x1c0] sm:$0xf]
        %v1170 = vld [vmem:[%s1021 + $0x1c4] sm:$0x1]
        %v1171 = vld [vmem:[%s1021 + $0x1c8] sm:$0xf]
        %v1172 = vld [vmem:[%s1021 + $0x1cc] sm:$0xf]
        %v1173 = vld [vmem:[%s1021 + $0x1d0] sm:$0x1]
        %v1174 = vld [vmem:[%s1021 + $0x1d4] sm:$0xf]
        %v1175 = vld [vmem:[%s1021 + $0x1d8] sm:$0xf]
        %v1176 = vld [vmem:[%s1021 + $0x1dc] sm:$0x1]
        %v1177 = vld [vmem:[%s1021 + $0x1e0] sm:$0xf]
        %v1178 = vld [vmem:[%s1021 + $0x1e4] sm:$0xf]
        %v1179 = vld [vmem:[%s1021 + $0x1e8] sm:$0x1]
        %v1180 = vld [vmem:[%s1021 + $0x1ec] sm:$0xf]
        %v1181 = vld [vmem:[%s1021 + $0x1f0] sm:$0xf]
        %v1182 = vld [vmem:[%s1021 + $0x1f4] sm:$0x1]
        %v1183 = vld [vmem:[%s1021 + $0x1f8] sm:$0xf]
        %v1184 = vld [vmem:[%s1021 + $0x1fc] sm:$0xf]
        %v1185 = vld [vmem:[%s1021 + $0x200] sm:$0x1]
        %v1186 = vld [vmem:[%s1021 + $0x204] sm:$0xf]
        %v1187 = vld [vmem:[%s1021 + $0x208] sm:$0xf]
        %v1188 = vld [vmem:[%s1021 + $0x20c] sm:$0x1]
        %v1189 = vld [vmem:[%s1021 + $0x210] sm:$0xf]
        %v1190 = vld [vmem:[%s1021 + $0x214] sm:$0xf]
        %v1191 = vld [vmem:[%s1021 + $0x218] sm:$0x1]
        %v1192 = vld [vmem:[%s1021 + $0x21c] sm:$0xf]
        %v1193 = vld [vmem:[%s1021 + $0x220] sm:$0xf]
        %v1194 = vld [vmem:[%s1021 + $0x224] sm:$0x1]
        %v1195 = vld [vmem:[%s1021 + $0x228] sm:$0xf]
        %v1196 = vld [vmem:[%s1021 + $0x22c] sm:$0xf]
        %v1197 = vld [vmem:[%s1021 + $0x230] sm:$0x1]
        %v1198 = vld [vmem:[%s1021 + $0x234] sm:$0xf]
        %v1199 = vld [vmem:[%s1021 + $0x238] sm:$0xf]
        %v1200 = vld [vmem:[%s1021 + $0x23c] sm:$0x1]
        %v1201 = vld [vmem:[%s1021 + $0x240] sm:$0xf]
        %v1202 = vld [vmem:[%s1021 + $0x244] sm:$0xf]
        %v1203 = vld [vmem:[%s1021 + $0x248] sm:$0x1]
        %v1204 = vld [vmem:[%s1021 + $0x24c] sm:$0xf]
        %v1205 = vld [vmem:[%s1021 + $0x250] sm:$0xf]
        %v1206 = vld [vmem:[%s1021 + $0x254] sm:$0x1]
        %v1207 = vld [vmem:[%s1021 + $0x258] sm:$0xf]
        %v1208 = vld [vmem:[%s1021 + $0x25c] sm:$0xf]
        %v1209 = vld [vmem:[%s1021 + $0x260] sm:$0x1]
        %v1210 = vld [vmem:[%s1021 + $0x264] sm:$0xf]
        %v1211 = vld [vmem:[%s1021 + $0x268] sm:$0xf]
        %v1212 = vld [vmem:[%s1021 + $0x26c] sm:$0x1]
        %v1213 = vld [vmem:[%s1021 + $0x270] sm:$0xf]
        %v1214 = vld [vmem:[%s1021 + $0x274] sm:$0xf]
        %v1215 = vld [vmem:[%s1021 + $0x278] sm:$0x1]
        %v1216 = vld [vmem:[%s1021 + $0x27c] sm:$0xf]
        %v1217 = vld [vmem:[%s1021 + $0x280] sm:$0xf]
        %v1218 = vld [vmem:[%s1021 + $0x284] sm:$0x1]
        %v1219 = vld [vmem:[%s1021 + $0x288] sm:$0xf]
        %v1220 = vld [vmem:[%s1021 + $0x28c] sm:$0xf]
        %v1221 = vld [vmem:[%s1021 + $0x290] sm:$0x1]
        %v1222 = vld [vmem:[%s1021 + $0x294] sm:$0xf]
        %v1223 = vld [vmem:[%s1021 + $0x298] sm:$0xf]
        %v1224 = vld [vmem:[%s1021 + $0x29c] sm:$0x1]
        %v1225 = vld [vmem:[%s1021 + $0x2a0] sm:$0xf]
        %v1226 = vld [vmem:[%s1021 + $0x2a4] sm:$0xf]
        %v1227 = vld [vmem:[%s1021 + $0x2a8] sm:$0x1]
        %v1228 = vld [vmem:[%s1021 + $0x2ac] sm:$0xf]
        %v1229 = vld [vmem:[%s1021 + $0x2b0] sm:$0xf]
        %v1230 = vld [vmem:[%s1021 + $0x2b4] sm:$0x1]
        %v1231 = vld [vmem:[%s1021 + $0x2b8] sm:$0xf]
        %v1232 = vld [vmem:[%s1021 + $0x2bc] sm:$0xf]
        %v1233 = vld [vmem:[%s1021 + $0x2c0] sm:$0x1]
        %v1234 = vld [vmem:[%s1021 + $0x2c4] sm:$0xf]
        %v1235 = vld [vmem:[%s1021 + $0x2c8] sm:$0xf]
        %v1236 = vld [vmem:[%s1021 + $0x2cc] sm:$0x1]
        %v1237 = vld [vmem:[%s1021 + $0x2d0] sm:$0xf]
        %v1238 = vld [vmem:[%s1021 + $0x2d4] sm:$0xf]
        %v1239 = vld [vmem:[%s1021 + $0x2d8] sm:$0x1]
        %v1240 = vld [vmem:[%s1021 + $0x2dc] sm:$0xf]
        %v1241 = vld [vmem:[%s1021 + $0x2e0] sm:$0xf]
        %v1242 = vld [vmem:[%s1021 + $0x2e4] sm:$0x1]
        %v1243 = vld [vmem:[%s1021 + $0x2e8] sm:$0xf]
        %v1244 = vld [vmem:[%s1021 + $0x2ec] sm:$0xf]
        %v1245 = vld [vmem:[%s1021 + $0x2f0] sm:$0x1]
        %v1246 = vld [vmem:[%s1021 + $0x2f4] sm:$0xf]
        %v1247 = vld [vmem:[%s1021 + $0x2f8] sm:$0xf]
        %v1248 = vld [vmem:[%s1021 + $0x2fc] sm:$0x1]
        %v1249 = vld [vmem:[%s1] sm:$0xf]
        %v1250 = vld [vmem:[%s1 + $0x4] sm:$0x3]
        %vm1251 = vsmask.f32 3328
        %vm1252 = vsmask.f32 7440
        %vm1253 = vmor %vm1251, %vm1252
        %v1255 = vshrl.u32 %v1057, 16
        %v1257 = vrot.slane %v1255, 4
        %v1258 = vshll.u32 %v1057, 16
        %v1260 = vrot.slane %v1258, 5
        %v1261 = vor.u32 %v1257, %v1260
        %v1262 = vrot.slane %v1261, 4
        %v1264 = vshll.u32 %v1058, 16
        %v1266 = vrot.slane %v1264, 5
        %v1267 = vsel %vm1253, %v1262, %v1266
        %v1268 = vshrl.u32 %v1058, 16
        %v1270 = vrot.slane %v1268, 4
        %v1271 = vor.u32 %v1270, %v1266
        %v1272 = vrot.slane %v1271, 4
        %v1274 = vshll.u32 %v1059, 16
        %v1276 = vrot.slane %v1274, 5
        %v1277 = vsel %vm1253, %v1272, %v1276
        %v1279 = vshrl.u32 %v1060, 16
        %v1281 = vrot.slane %v1279, 4
        %v1282 = vshll.u32 %v1060, 16
        %v1284 = vrot.slane %v1282, 5
        %v1285 = vor.u32 %v1281, %v1284
        %v1286 = vrot.slane %v1285, 4
        %v1288 = vshll.u32 %v1061, 16
        %v1290 = vrot.slane %v1288, 5
        %v1291 = vsel %vm1253, %v1286, %v1290
        %v1292 = vshrl.u32 %v1061, 16
        %v1294 = vrot.slane %v1292, 4
        %v1295 = vor.u32 %v1294, %v1290
        %v1296 = vrot.slane %v1295, 4
        %v1298 = vshll.u32 %v1062, 16
        %v1300 = vrot.slane %v1298, 5
        %v1301 = vsel %vm1253, %v1296, %v1300
        %v1303 = vshrl.u32 %v1063, 16
        %v1305 = vrot.slane %v1303, 4
        %v1306 = vshll.u32 %v1063, 16
        %v1308 = vrot.slane %v1306, 5
        %v1309 = vor.u32 %v1305, %v1308
        %v1310 = vrot.slane %v1309, 4
        %v1312 = vshll.u32 %v1064, 16
        %v1314 = vrot.slane %v1312, 5
        %v1315 = vsel %vm1253, %v1310, %v1314
        %v1316 = vshrl.u32 %v1064, 16
        %v1318 = vrot.slane %v1316, 4
        %v1319 = vor.u32 %v1318, %v1314
        %v1320 = vrot.slane %v1319, 4
        %v1322 = vshll.u32 %v1065, 16
        %v1324 = vrot.slane %v1322, 5
        %v1325 = vsel %vm1253, %v1320, %v1324
        %v1327 = vshrl.u32 %v1066, 16
        %v1329 = vrot.slane %v1327, 4
        %v1330 = vshll.u32 %v1066, 16
        %v1332 = vrot.slane %v1330, 5
        %v1333 = vor.u32 %v1329, %v1332
        %v1334 = vrot.slane %v1333, 4
        %v1336 = vshll.u32 %v1067, 16
        %v1338 = vrot.slane %v1336, 5
        %v1339 = vsel %vm1253, %v1334, %v1338
        %v1340 = vshrl.u32 %v1067, 16
        %v1342 = vrot.slane %v1340, 4
        %v1343 = vor.u32 %v1342, %v1338
        %v1344 = vrot.slane %v1343, 4
        %v1346 = vshll.u32 %v1068, 16
        %v1348 = vrot.slane %v1346, 5
        %v1349 = vsel %vm1253, %v1344, %v1348
        %v1351 = vshrl.u32 %v1069, 16
        %v1353 = vrot.slane %v1351, 4
        %v1354 = vshll.u32 %v1069, 16
        %v1356 = vrot.slane %v1354, 5
        %v1357 = vor.u32 %v1353, %v1356
        %v1358 = vrot.slane %v1357, 4
        %v1360 = vshll.u32 %v1070, 16
        %v1362 = vrot.slane %v1360, 5
        %v1363 = vsel %vm1253, %v1358, %v1362
        %v1364 = vshrl.u32 %v1070, 16
        %v1366 = vrot.slane %v1364, 4
        %v1367 = vor.u32 %v1366, %v1362
        %v1368 = vrot.slane %v1367, 4
        %v1370 = vshll.u32 %v1071, 16
        %v1372 = vrot.slane %v1370, 5
        %v1373 = vsel %vm1253, %v1368, %v1372
        %v1375 = vshrl.u32 %v1072, 16
        %v1377 = vrot.slane %v1375, 4
        %v1378 = vshll.u32 %v1072, 16
        %v1380 = vrot.slane %v1378, 5
        %v1381 = vor.u32 %v1377, %v1380
        %v1382 = vrot.slane %v1381, 4
        %v1384 = vshll.u32 %v1073, 16
        %v1386 = vrot.slane %v1384, 5
        %v1387 = vsel %vm1253, %v1382, %v1386
        %v1388 = vshrl.u32 %v1073, 16
        %v1390 = vrot.slane %v1388, 4
        %v1391 = vor.u32 %v1390, %v1386
        %v1392 = vrot.slane %v1391, 4
        %v1394 = vshll.u32 %v1074, 16
        %v1396 = vrot.slane %v1394, 5
        %v1397 = vsel %vm1253, %v1392, %v1396
        %v1399 = vshrl.u32 %v1075, 16
        %v1401 = vrot.slane %v1399, 4
        %v1402 = vshll.u32 %v1075, 16
        %v1404 = vrot.slane %v1402, 5
        %v1405 = vor.u32 %v1401, %v1404
        %v1406 = vrot.slane %v1405, 4
        %v1408 = vshll.u32 %v1076, 16
        %v1410 = vrot.slane %v1408, 5
        %v1411 = vsel %vm1253, %v1406, %v1410
        %v1412 = vshrl.u32 %v1076, 16
        %v1414 = vrot.slane %v1412, 4
        %v1415 = vor.u32 %v1414, %v1410
        %v1416 = vrot.slane %v1415, 4
        %v1418 = vshll.u32 %v1077, 16
        %v1420 = vrot.slane %v1418, 5
        %v1421 = vsel %vm1253, %v1416, %v1420
        %v1423 = vshrl.u32 %v1078, 16
        %v1425 = vrot.slane %v1423, 4
        %v1426 = vshll.u32 %v1078, 16
        %v1428 = vrot.slane %v1426, 5
        %v1429 = vor.u32 %v1425, %v1428
        %v1430 = vrot.slane %v1429, 4
        %v1432 = vshll.u32 %v1079, 16
        %v1434 = vrot.slane %v1432, 5
        %v1435 = vsel %vm1253, %v1430, %v1434
        %v1436 = vshrl.u32 %v1079, 16
        %v1438 = vrot.slane %v1436, 4
        %v1439 = vor.u32 %v1438, %v1434
        %v1440 = vrot.slane %v1439, 4
        %v1442 = vshll.u32 %v1080, 16
        %v1444 = vrot.slane %v1442, 5
        %v1445 = vsel %vm1253, %v1440, %v1444
        %v1447 = vshrl.u32 %v1081, 16
        %v1449 = vrot.slane %v1447, 4
        %v1450 = vshll.u32 %v1081, 16
        %v1452 = vrot.slane %v1450, 5
        %v1453 = vor.u32 %v1449, %v1452
        %v1454 = vrot.slane %v1453, 4
        %v1456 = vshll.u32 %v1082, 16
        %v1458 = vrot.slane %v1456, 5
        %v1459 = vsel %vm1253, %v1454, %v1458
        %v1460 = vshrl.u32 %v1082, 16
        %v1462 = vrot.slane %v1460, 4
        %v1463 = vor.u32 %v1462, %v1458
        %v1464 = vrot.slane %v1463, 4
        %v1466 = vshll.u32 %v1083, 16
        %v1468 = vrot.slane %v1466, 5
        %v1469 = vsel %vm1253, %v1464, %v1468
        %v1471 = vshrl.u32 %v1084, 16
        %v1473 = vrot.slane %v1471, 4
        %v1474 = vshll.u32 %v1084, 16
        %v1476 = vrot.slane %v1474, 5
        %v1477 = vor.u32 %v1473, %v1476
        %v1478 = vrot.slane %v1477, 4
        %v1480 = vshll.u32 %v1085, 16
        %v1482 = vrot.slane %v1480, 5
        %v1483 = vsel %vm1253, %v1478, %v1482
        %v1484 = vshrl.u32 %v1085, 16
        %v1486 = vrot.slane %v1484, 4
        %v1487 = vor.u32 %v1486, %v1482
        %v1488 = vrot.slane %v1487, 4
        %v1490 = vshll.u32 %v1086, 16
        %v1492 = vrot.slane %v1490, 5
        %v1493 = vsel %vm1253, %v1488, %v1492
        %v1495 = vshrl.u32 %v1087, 16
        %v1497 = vrot.slane %v1495, 4
        %v1498 = vshll.u32 %v1087, 16
        %v1500 = vrot.slane %v1498, 5
        %v1501 = vor.u32 %v1497, %v1500
        %v1502 = vrot.slane %v1501, 4
        %v1504 = vshll.u32 %v1088, 16
        %v1506 = vrot.slane %v1504, 5
        %v1507 = vsel %vm1253, %v1502, %v1506
        %v1508 = vshrl.u32 %v1088, 16
        %v1510 = vrot.slane %v1508, 4
        %v1511 = vor.u32 %v1510, %v1506
        %v1512 = vrot.slane %v1511, 4
        %v1514 = vshll.u32 %v1089, 16
        %v1516 = vrot.slane %v1514, 5
        %v1517 = vsel %vm1253, %v1512, %v1516
        %v1519 = vshrl.u32 %v1090, 16
        %v1521 = vrot.slane %v1519, 4
        %v1522 = vshll.u32 %v1090, 16
        %v1524 = vrot.slane %v1522, 5
        %v1525 = vor.u32 %v1521, %v1524
        %v1526 = vrot.slane %v1525, 4
        %v1528 = vshll.u32 %v1091, 16
        %v1530 = vrot.slane %v1528, 5
        %v1531 = vsel %vm1253, %v1526, %v1530
        %v1532 = vshrl.u32 %v1091, 16
        %v1534 = vrot.slane %v1532, 4
        %v1535 = vor.u32 %v1534, %v1530
        %v1536 = vrot.slane %v1535, 4
        %v1538 = vshll.u32 %v1092, 16
        %v1540 = vrot.slane %v1538, 5
        %v1541 = vsel %vm1253, %v1536, %v1540
        %v1543 = vshrl.u32 %v1093, 16
        %v1545 = vrot.slane %v1543, 4
        %v1546 = vshll.u32 %v1093, 16
        %v1548 = vrot.slane %v1546, 5
        %v1549 = vor.u32 %v1545, %v1548
        %v1550 = vrot.slane %v1549, 4
        %v1552 = vshll.u32 %v1094, 16
        %v1554 = vrot.slane %v1552, 5
        %v1555 = vsel %vm1253, %v1550, %v1554
        %v1556 = vshrl.u32 %v1094, 16
        %v1558 = vrot.slane %v1556, 4
        %v1559 = vor.u32 %v1558, %v1554
        %v1560 = vrot.slane %v1559, 4
        %v1562 = vshll.u32 %v1095, 16
        %v1564 = vrot.slane %v1562, 5
        %v1565 = vsel %vm1253, %v1560, %v1564
        %v1567 = vshrl.u32 %v1096, 16
        %v1569 = vrot.slane %v1567, 4
        %v1570 = vshll.u32 %v1096, 16
        %v1572 = vrot.slane %v1570, 5
        %v1573 = vor.u32 %v1569, %v1572
        %v1574 = vrot.slane %v1573, 4
        %v1576 = vshll.u32 %v1097, 16
        %v1578 = vrot.slane %v1576, 5
        %v1579 = vsel %vm1253, %v1574, %v1578
        %v1580 = vshrl.u32 %v1097, 16
        %v1582 = vrot.slane %v1580, 4
        %v1583 = vor.u32 %v1582, %v1578
        %v1584 = vrot.slane %v1583, 4
        %v1586 = vshll.u32 %v1098, 16
        %v1588 = vrot.slane %v1586, 5
        %v1589 = vsel %vm1253, %v1584, %v1588
        %v1591 = vshrl.u32 %v1099, 16
        %v1593 = vrot.slane %v1591, 4
        %v1594 = vshll.u32 %v1099, 16
        %v1596 = vrot.slane %v1594, 5
        %v1597 = vor.u32 %v1593, %v1596
        %v1598 = vrot.slane %v1597, 4
        %v1600 = vshll.u32 %v1100, 16
        %v1602 = vrot.slane %v1600, 5
        %v1603 = vsel %vm1253, %v1598, %v1602
        %v1604 = vshrl.u32 %v1100, 16
        %v1606 = vrot.slane %v1604, 4
        %v1607 = vor.u32 %v1606, %v1602
        %v1608 = vrot.slane %v1607, 4
        %v1610 = vshll.u32 %v1101, 16
        %v1612 = vrot.slane %v1610, 5
        %v1613 = vsel %vm1253, %v1608, %v1612
        %v1615 = vshrl.u32 %v1102, 16
        %v1617 = vrot.slane %v1615, 4
        %v1618 = vshll.u32 %v1102, 16
        %v1620 = vrot.slane %v1618, 5
        %v1621 = vor.u32 %v1617, %v1620
        %v1622 = vrot.slane %v1621, 4
        %v1624 = vshll.u32 %v1103, 16
        %v1626 = vrot.slane %v1624, 5
        %v1627 = vsel %vm1253, %v1622, %v1626
        %v1628 = vshrl.u32 %v1103, 16
        %v1630 = vrot.slane %v1628, 4
        %v1631 = vor.u32 %v1630, %v1626
        %v1632 = vrot.slane %v1631, 4
        %v1634 = vshll.u32 %v1104, 16
        %v1636 = vrot.slane %v1634, 5
        %v1637 = vsel %vm1253, %v1632, %v1636
        %v1639 = vshrl.u32 %v1105, 16
        %v1641 = vrot.slane %v1639, 4
        %v1642 = vshll.u32 %v1105, 16
        %v1644 = vrot.slane %v1642, 5
        %v1645 = vor.u32 %v1641, %v1644
        %v1646 = vrot.slane %v1645, 4
        %v1648 = vshll.u32 %v1106, 16
        %v1650 = vrot.slane %v1648, 5
        %v1651 = vsel %vm1253, %v1646, %v1650
        %v1652 = vshrl.u32 %v1106, 16
        %v1654 = vrot.slane %v1652, 4
        %v1655 = vor.u32 %v1654, %v1650
        %v1656 = vrot.slane %v1655, 4
        %v1658 = vshll.u32 %v1107, 16
        %v1660 = vrot.slane %v1658, 5
        %v1661 = vsel %vm1253, %v1656, %v1660
        %v1663 = vshrl.u32 %v1108, 16
        %v1665 = vrot.slane %v1663, 4
        %v1666 = vshll.u32 %v1108, 16
        %v1668 = vrot.slane %v1666, 5
        %v1669 = vor.u32 %v1665, %v1668
        %v1670 = vrot.slane %v1669, 4
        %v1672 = vshll.u32 %v1109, 16
        %v1674 = vrot.slane %v1672, 5
        %v1675 = vsel %vm1253, %v1670, %v1674
        %v1676 = vshrl.u32 %v1109, 16
        %v1678 = vrot.slane %v1676, 4
        %v1679 = vor.u32 %v1678, %v1674
        %v1680 = vrot.slane %v1679, 4
        %v1682 = vshll.u32 %v1110, 16
        %v1684 = vrot.slane %v1682, 5
        %v1685 = vsel %vm1253, %v1680, %v1684
        %v1687 = vshrl.u32 %v1111, 16
        %v1689 = vrot.slane %v1687, 4
        %v1690 = vshll.u32 %v1111, 16
        %v1692 = vrot.slane %v1690, 5
        %v1693 = vor.u32 %v1689, %v1692
        %v1694 = vrot.slane %v1693, 4
        %v1696 = vshll.u32 %v1112, 16
        %v1698 = vrot.slane %v1696, 5
        %v1699 = vsel %vm1253, %v1694, %v1698
        %v1700 = vshrl.u32 %v1112, 16
        %v1702 = vrot.slane %v1700, 4
        %v1703 = vor.u32 %v1702, %v1698
        %v1704 = vrot.slane %v1703, 4
        %v1706 = vshll.u32 %v1113, 16
        %v1708 = vrot.slane %v1706, 5
        %v1709 = vsel %vm1253, %v1704, %v1708
        %v1711 = vshrl.u32 %v1114, 16
        %v1713 = vrot.slane %v1711, 4
        %v1714 = vshll.u32 %v1114, 16
        %v1716 = vrot.slane %v1714, 5
        %v1717 = vor.u32 %v1713, %v1716
        %v1718 = vrot.slane %v1717, 4
        %v1720 = vshll.u32 %v1115, 16
        %v1722 = vrot.slane %v1720, 5
        %v1723 = vsel %vm1253, %v1718, %v1722
        %v1724 = vshrl.u32 %v1115, 16
        %v1726 = vrot.slane %v1724, 4
        %v1727 = vor.u32 %v1726, %v1722
        %v1728 = vrot.slane %v1727, 4
        %v1730 = vshll.u32 %v1116, 16
        %v1732 = vrot.slane %v1730, 5
        %v1733 = vsel %vm1253, %v1728, %v1732
        %v1735 = vshrl.u32 %v1117, 16
        %v1737 = vrot.slane %v1735, 4
        %v1738 = vshll.u32 %v1117, 16
        %v1740 = vrot.slane %v1738, 5
        %v1741 = vor.u32 %v1737, %v1740
        %v1742 = vrot.slane %v1741, 4
        %v1744 = vshll.u32 %v1118, 16
        %v1746 = vrot.slane %v1744, 5
        %v1747 = vsel %vm1253, %v1742, %v1746
        %v1748 = vshrl.u32 %v1118, 16
        %v1750 = vrot.slane %v1748, 4
        %v1751 = vor.u32 %v1750, %v1746
        %v1752 = vrot.slane %v1751, 4
        %v1754 = vshll.u32 %v1119, 16
        %v1756 = vrot.slane %v1754, 5
        %v1757 = vsel %vm1253, %v1752, %v1756
        %v1759 = vshrl.u32 %v1120, 16
        %v1761 = vrot.slane %v1759, 4
        %v1762 = vshll.u32 %v1120, 16
        %v1764 = vrot.slane %v1762, 5
        %v1765 = vor.u32 %v1761, %v1764
        %v1766 = vrot.slane %v1765, 4
        %v1768 = vshll.u32 %v1121, 16
        %v1770 = vrot.slane %v1768, 5
        %v1771 = vsel %vm1253, %v1766, %v1770
        %v1772 = vshrl.u32 %v1121, 16
        %v1774 = vrot.slane %v1772, 4
        %v1775 = vor.u32 %v1774, %v1770
        %v1776 = vrot.slane %v1775, 4
        %v1778 = vshll.u32 %v1122, 16
        %v1780 = vrot.slane %v1778, 5
        %v1781 = vsel %vm1253, %v1776, %v1780
        %v1783 = vshrl.u32 %v1123, 16
        %v1785 = vrot.slane %v1783, 4
        %v1786 = vshll.u32 %v1123, 16
        %v1788 = vrot.slane %v1786, 5
        %v1789 = vor.u32 %v1785, %v1788
        %v1790 = vrot.slane %v1789, 4
        %v1792 = vshll.u32 %v1124, 16
        %v1794 = vrot.slane %v1792, 5
        %v1795 = vsel %vm1253, %v1790, %v1794
        %v1796 = vshrl.u32 %v1124, 16
        %v1798 = vrot.slane %v1796, 4
        %v1799 = vor.u32 %v1798, %v1794
        %v1800 = vrot.slane %v1799, 4
        %v1802 = vshll.u32 %v1125, 16
        %v1804 = vrot.slane %v1802, 5
        %v1805 = vsel %vm1253, %v1800, %v1804
        %v1807 = vshrl.u32 %v1126, 16
        %v1809 = vrot.slane %v1807, 4
        %v1810 = vshll.u32 %v1126, 16
        %v1812 = vrot.slane %v1810, 5
        %v1813 = vor.u32 %v1809, %v1812
        %v1814 = vrot.slane %v1813, 4
        %v1816 = vshll.u32 %v1127, 16
        %v1818 = vrot.slane %v1816, 5
        %v1819 = vsel %vm1253, %v1814, %v1818
        %v1820 = vshrl.u32 %v1127, 16
        %v1822 = vrot.slane %v1820, 4
        %v1823 = vor.u32 %v1822, %v1818
        %v1824 = vrot.slane %v1823, 4
        %v1826 = vshll.u32 %v1128, 16
        %v1828 = vrot.slane %v1826, 5
        %v1829 = vsel %vm1253, %v1824, %v1828
        %v1831 = vshrl.u32 %v1129, 16
        %v1833 = vrot.slane %v1831, 4
        %v1834 = vshll.u32 %v1129, 16
        %v1836 = vrot.slane %v1834, 5
        %v1837 = vor.u32 %v1833, %v1836
        %v1838 = vrot.slane %v1837, 4
        %v1840 = vshll.u32 %v1130, 16
        %v1842 = vrot.slane %v1840, 5
        %v1843 = vsel %vm1253, %v1838, %v1842
        %v1844 = vshrl.u32 %v1130, 16
        %v1846 = vrot.slane %v1844, 4
        %v1847 = vor.u32 %v1846, %v1842
        %v1848 = vrot.slane %v1847, 4
        %v1850 = vshll.u32 %v1131, 16
        %v1852 = vrot.slane %v1850, 5
        %v1853 = vsel %vm1253, %v1848, %v1852
        %v1855 = vshrl.u32 %v1132, 16
        %v1857 = vrot.slane %v1855, 4
        %v1858 = vshll.u32 %v1132, 16
        %v1860 = vrot.slane %v1858, 5
        %v1861 = vor.u32 %v1857, %v1860
        %v1862 = vrot.slane %v1861, 4
        %v1864 = vshll.u32 %v1133, 16
        %v1866 = vrot.slane %v1864, 5
        %v1867 = vsel %vm1253, %v1862, %v1866
        %v1868 = vshrl.u32 %v1133, 16
        %v1870 = vrot.slane %v1868, 4
        %v1871 = vor.u32 %v1870, %v1866
        %v1872 = vrot.slane %v1871, 4
        %v1874 = vshll.u32 %v1134, 16
        %v1876 = vrot.slane %v1874, 5
        %v1877 = vsel %vm1253, %v1872, %v1876
        %v1879 = vshrl.u32 %v1135, 16
        %v1881 = vrot.slane %v1879, 4
        %v1882 = vshll.u32 %v1135, 16
        %v1884 = vrot.slane %v1882, 5
        %v1885 = vor.u32 %v1881, %v1884
        %v1886 = vrot.slane %v1885, 4
        %v1888 = vshll.u32 %v1136, 16
        %v1890 = vrot.slane %v1888, 5
        %v1891 = vsel %vm1253, %v1886, %v1890
        %v1892 = vshrl.u32 %v1136, 16
        %v1894 = vrot.slane %v1892, 4
        %v1895 = vor.u32 %v1894, %v1890
        %v1896 = vrot.slane %v1895, 4
        %v1898 = vshll.u32 %v1137, 16
        %v1900 = vrot.slane %v1898, 5
        %v1901 = vsel %vm1253, %v1896, %v1900
        %v1903 = vshrl.u32 %v1138, 16
        %v1905 = vrot.slane %v1903, 4
        %v1906 = vshll.u32 %v1138, 16
        %v1908 = vrot.slane %v1906, 5
        %v1909 = vor.u32 %v1905, %v1908
        %v1910 = vrot.slane %v1909, 4
        %v1912 = vshll.u32 %v1139, 16
        %v1914 = vrot.slane %v1912, 5
        %v1915 = vsel %vm1253, %v1910, %v1914
        %v1916 = vshrl.u32 %v1139, 16
        %v1918 = vrot.slane %v1916, 4
        %v1919 = vor.u32 %v1918, %v1914
        %v1920 = vrot.slane %v1919, 4
        %v1922 = vshll.u32 %v1140, 16
        %v1924 = vrot.slane %v1922, 5
        %v1925 = vsel %vm1253, %v1920, %v1924
        %v1927 = vshrl.u32 %v1141, 16
        %v1929 = vrot.slane %v1927, 4
        %v1930 = vshll.u32 %v1141, 16
        %v1932 = vrot.slane %v1930, 5
        %v1933 = vor.u32 %v1929, %v1932
        %v1934 = vrot.slane %v1933, 4
        %v1936 = vshll.u32 %v1142, 16
        %v1938 = vrot.slane %v1936, 5
        %v1939 = vsel %vm1253, %v1934, %v1938
        %v1940 = vshrl.u32 %v1142, 16
        %v1942 = vrot.slane %v1940, 4
        %v1943 = vor.u32 %v1942, %v1938
        %v1944 = vrot.slane %v1943, 4
        %v1946 = vshll.u32 %v1143, 16
        %v1948 = vrot.slane %v1946, 5
        %v1949 = vsel %vm1253, %v1944, %v1948
        %v1951 = vshrl.u32 %v1144, 16
        %v1953 = vrot.slane %v1951, 4
        %v1954 = vshll.u32 %v1144, 16
        %v1956 = vrot.slane %v1954, 5
        %v1957 = vor.u32 %v1953, %v1956
        %v1958 = vrot.slane %v1957, 4
        %v1960 = vshll.u32 %v1145, 16
        %v1962 = vrot.slane %v1960, 5
        %v1963 = vsel %vm1253, %v1958, %v1962
        %v1964 = vshrl.u32 %v1145, 16
        %v1966 = vrot.slane %v1964, 4
        %v1967 = vor.u32 %v1966, %v1962
        %v1968 = vrot.slane %v1967, 4
        %v1970 = vshll.u32 %v1146, 16
        %v1972 = vrot.slane %v1970, 5
        %v1973 = vsel %vm1253, %v1968, %v1972
        %v1975 = vshrl.u32 %v1147, 16
        %v1977 = vrot.slane %v1975, 4
        %v1978 = vshll.u32 %v1147, 16
        %v1980 = vrot.slane %v1978, 5
        %v1981 = vor.u32 %v1977, %v1980
        %v1982 = vrot.slane %v1981, 4
        %v1984 = vshll.u32 %v1148, 16
        %v1986 = vrot.slane %v1984, 5
        %v1987 = vsel %vm1253, %v1982, %v1986
        %v1988 = vshrl.u32 %v1148, 16
        %v1990 = vrot.slane %v1988, 4
        %v1991 = vor.u32 %v1990, %v1986
        %v1992 = vrot.slane %v1991, 4
        %v1994 = vshll.u32 %v1149, 16
        %v1996 = vrot.slane %v1994, 5
        %v1997 = vsel %vm1253, %v1992, %v1996
        %v1999 = vshrl.u32 %v1150, 16
        %v2001 = vrot.slane %v1999, 4
        %v2002 = vshll.u32 %v1150, 16
        %v2004 = vrot.slane %v2002, 5
        %v2005 = vor.u32 %v2001, %v2004
        %v2006 = vrot.slane %v2005, 4
        %v2008 = vshll.u32 %v1151, 16
        %v2010 = vrot.slane %v2008, 5
        %v2011 = vsel %vm1253, %v2006, %v2010
        %v2012 = vshrl.u32 %v1151, 16
        %v2014 = vrot.slane %v2012, 4
        %v2015 = vor.u32 %v2014, %v2010
        %v2016 = vrot.slane %v2015, 4
        %v2018 = vshll.u32 %v1152, 16
        %v2020 = vrot.slane %v2018, 5
        %v2021 = vsel %vm1253, %v2016, %v2020
        %v2023 = vshrl.u32 %v1153, 16
        %v2025 = vrot.slane %v2023, 4
        %v2026 = vshll.u32 %v1153, 16
        %v2028 = vrot.slane %v2026, 5
        %v2029 = vor.u32 %v2025, %v2028
        %v2030 = vrot.slane %v2029, 4
        %v2032 = vshll.u32 %v1154, 16
        %v2034 = vrot.slane %v2032, 5
        %v2035 = vsel %vm1253, %v2030, %v2034
        %v2036 = vshrl.u32 %v1154, 16
        %v2038 = vrot.slane %v2036, 4
        %v2039 = vor.u32 %v2038, %v2034
        %v2040 = vrot.slane %v2039, 4
        %v2042 = vshll.u32 %v1155, 16
        %v2044 = vrot.slane %v2042, 5
        %v2045 = vsel %vm1253, %v2040, %v2044
        %v2047 = vshrl.u32 %v1156, 16
        %v2049 = vrot.slane %v2047, 4
        %v2050 = vshll.u32 %v1156, 16
        %v2052 = vrot.slane %v2050, 5
        %v2053 = vor.u32 %v2049, %v2052
        %v2054 = vrot.slane %v2053, 4
        %v2056 = vshll.u32 %v1157, 16
        %v2058 = vrot.slane %v2056, 5
        %v2059 = vsel %vm1253, %v2054, %v2058
        %v2060 = vshrl.u32 %v1157, 16
        %v2062 = vrot.slane %v2060, 4
        %v2063 = vor.u32 %v2062, %v2058
        %v2064 = vrot.slane %v2063, 4
        %v2066 = vshll.u32 %v1158, 16
        %v2068 = vrot.slane %v2066, 5
        %v2069 = vsel %vm1253, %v2064, %v2068
        %v2071 = vshrl.u32 %v1159, 16
        %v2073 = vrot.slane %v2071, 4
        %v2074 = vshll.u32 %v1159, 16
        %v2076 = vrot.slane %v2074, 5
        %v2077 = vor.u32 %v2073, %v2076
        %v2078 = vrot.slane %v2077, 4
        %v2080 = vshll.u32 %v1160, 16
        %v2082 = vrot.slane %v2080, 5
        %v2083 = vsel %vm1253, %v2078, %v2082
        %v2084 = vshrl.u32 %v1160, 16
        %v2086 = vrot.slane %v2084, 4
        %v2087 = vor.u32 %v2086, %v2082
        %v2088 = vrot.slane %v2087, 4
        %v2090 = vshll.u32 %v1161, 16
        %v2092 = vrot.slane %v2090, 5
        %v2093 = vsel %vm1253, %v2088, %v2092
        %v2095 = vshrl.u32 %v1162, 16
        %v2097 = vrot.slane %v2095, 4
        %v2098 = vshll.u32 %v1162, 16
        %v2100 = vrot.slane %v2098, 5
        %v2101 = vor.u32 %v2097, %v2100
        %v2102 = vrot.slane %v2101, 4
        %v2104 = vshll.u32 %v1163, 16
        %v2106 = vrot.slane %v2104, 5
        %v2107 = vsel %vm1253, %v2102, %v2106
        %v2108 = vshrl.u32 %v1163, 16
        %v2110 = vrot.slane %v2108, 4
        %v2111 = vor.u32 %v2110, %v2106
        %v2112 = vrot.slane %v2111, 4
        %v2114 = vshll.u32 %v1164, 16
        %v2116 = vrot.slane %v2114, 5
        %v2117 = vsel %vm1253, %v2112, %v2116
        %v2119 = vshrl.u32 %v1165, 16
        %v2121 = vrot.slane %v2119, 4
        %v2122 = vshll.u32 %v1165, 16
        %v2124 = vrot.slane %v2122, 5
        %v2125 = vor.u32 %v2121, %v2124
        %v2126 = vrot.slane %v2125, 4
        %v2128 = vshll.u32 %v1166, 16
        %v2130 = vrot.slane %v2128, 5
        %v2131 = vsel %vm1253, %v2126, %v2130
        %v2132 = vshrl.u32 %v1166, 16
        %v2134 = vrot.slane %v2132, 4
        %v2135 = vor.u32 %v2134, %v2130
        %v2136 = vrot.slane %v2135, 4
        %v2138 = vshll.u32 %v1167, 16
        %v2140 = vrot.slane %v2138, 5
        %v2141 = vsel %vm1253, %v2136, %v2140
        %v2143 = vshrl.u32 %v1168, 16
        %v2145 = vrot.slane %v2143, 4
        %v2146 = vshll.u32 %v1168, 16
        %v2148 = vrot.slane %v2146, 5
        %v2149 = vor.u32 %v2145, %v2148
        %v2150 = vrot.slane %v2149, 4
        %v2152 = vshll.u32 %v1169, 16
        %v2154 = vrot.slane %v2152, 5
        %v2155 = vsel %vm1253, %v2150, %v2154
        %v2156 = vshrl.u32 %v1169, 16
        %v2158 = vrot.slane %v2156, 4
        %v2159 = vor.u32 %v2158, %v2154
        %v2160 = vrot.slane %v2159, 4
        %v2162 = vshll.u32 %v1170, 16
        %v2164 = vrot.slane %v2162, 5
        %v2165 = vsel %vm1253, %v2160, %v2164
        %v2167 = vshrl.u32 %v1171, 16
        %v2169 = vrot.slane %v2167, 4
        %v2170 = vshll.u32 %v1171, 16
        %v2172 = vrot.slane %v2170, 5
        %v2173 = vor.u32 %v2169, %v2172
        %v2174 = vrot.slane %v2173, 4
        %v2176 = vshll.u32 %v1172, 16
        %v2178 = vrot.slane %v2176, 5
        %v2179 = vsel %vm1253, %v2174, %v2178
        %v2180 = vshrl.u32 %v1172, 16
        %v2182 = vrot.slane %v2180, 4
        %v2183 = vor.u32 %v2182, %v2178
        %v2184 = vrot.slane %v2183, 4
        %v2186 = vshll.u32 %v1173, 16
        %v2188 = vrot.slane %v2186, 5
        %v2189 = vsel %vm1253, %v2184, %v2188
        %v2191 = vshrl.u32 %v1174, 16
        %v2193 = vrot.slane %v2191, 4
        %v2194 = vshll.u32 %v1174, 16
        %v2196 = vrot.slane %v2194, 5
        %v2197 = vor.u32 %v2193, %v2196
        %v2198 = vrot.slane %v2197, 4
        %v2200 = vshll.u32 %v1175, 16
        %v2202 = vrot.slane %v2200, 5
        %v2203 = vsel %vm1253, %v2198, %v2202
        %v2204 = vshrl.u32 %v1175, 16
        %v2206 = vrot.slane %v2204, 4
        %v2207 = vor.u32 %v2206, %v2202
        %v2208 = vrot.slane %v2207, 4
        %v2210 = vshll.u32 %v1176, 16
        %v2212 = vrot.slane %v2210, 5
        %v2213 = vsel %vm1253, %v2208, %v2212
        %v2215 = vshrl.u32 %v1177, 16
        %v2217 = vrot.slane %v2215, 4
        %v2218 = vshll.u32 %v1177, 16
        %v2220 = vrot.slane %v2218, 5
        %v2221 = vor.u32 %v2217, %v2220
        %v2222 = vrot.slane %v2221, 4
        %v2224 = vshll.u32 %v1178, 16
        %v2226 = vrot.slane %v2224, 5
        %v2227 = vsel %vm1253, %v2222, %v2226
        %v2228 = vshrl.u32 %v1178, 16
        %v2230 = vrot.slane %v2228, 4
        %v2231 = vor.u32 %v2230, %v2226
        %v2232 = vrot.slane %v2231, 4
        %v2234 = vshll.u32 %v1179, 16
        %v2236 = vrot.slane %v2234, 5
        %v2237 = vsel %vm1253, %v2232, %v2236
        %v2239 = vshrl.u32 %v1180, 16
        %v2241 = vrot.slane %v2239, 4
        %v2242 = vshll.u32 %v1180, 16
        %v2244 = vrot.slane %v2242, 5
        %v2245 = vor.u32 %v2241, %v2244
        %v2246 = vrot.slane %v2245, 4
        %v2248 = vshll.u32 %v1181, 16
        %v2250 = vrot.slane %v2248, 5
        %v2251 = vsel %vm1253, %v2246, %v2250
        %v2252 = vshrl.u32 %v1181, 16
        %v2254 = vrot.slane %v2252, 4
        %v2255 = vor.u32 %v2254, %v2250
        %v2256 = vrot.slane %v2255, 4
        %v2258 = vshll.u32 %v1182, 16
        %v2260 = vrot.slane %v2258, 5
        %v2261 = vsel %vm1253, %v2256, %v2260
        %v2263 = vshrl.u32 %v1183, 16
        %v2265 = vrot.slane %v2263, 4
        %v2266 = vshll.u32 %v1183, 16
        %v2268 = vrot.slane %v2266, 5
        %v2269 = vor.u32 %v2265, %v2268
        %v2270 = vrot.slane %v2269, 4
        %v2272 = vshll.u32 %v1184, 16
        %v2274 = vrot.slane %v2272, 5
        %v2275 = vsel %vm1253, %v2270, %v2274
        %v2276 = vshrl.u32 %v1184, 16
        %v2278 = vrot.slane %v2276, 4
        %v2279 = vor.u32 %v2278, %v2274
        %v2280 = vrot.slane %v2279, 4
        %v2282 = vshll.u32 %v1185, 16
        %v2284 = vrot.slane %v2282, 5
        %v2285 = vsel %vm1253, %v2280, %v2284
        %v2287 = vshrl.u32 %v1186, 16
        %v2289 = vrot.slane %v2287, 4
        %v2290 = vshll.u32 %v1186, 16
        %v2292 = vrot.slane %v2290, 5
        %v2293 = vor.u32 %v2289, %v2292
        %v2294 = vrot.slane %v2293, 4
        %v2296 = vshll.u32 %v1187, 16
        %v2298 = vrot.slane %v2296, 5
        %v2299 = vsel %vm1253, %v2294, %v2298
        %v2300 = vshrl.u32 %v1187, 16
        %v2302 = vrot.slane %v2300, 4
        %v2303 = vor.u32 %v2302, %v2298
        %v2304 = vrot.slane %v2303, 4
        %v2306 = vshll.u32 %v1188, 16
        %v2308 = vrot.slane %v2306, 5
        %v2309 = vsel %vm1253, %v2304, %v2308
        %v2311 = vshrl.u32 %v1189, 16
        %v2313 = vrot.slane %v2311, 4
        %v2314 = vshll.u32 %v1189, 16
        %v2316 = vrot.slane %v2314, 5
        %v2317 = vor.u32 %v2313, %v2316
        %v2318 = vrot.slane %v2317, 4
        %v2320 = vshll.u32 %v1190, 16
        %v2322 = vrot.slane %v2320, 5
        %v2323 = vsel %vm1253, %v2318, %v2322
        %v2324 = vshrl.u32 %v1190, 16
        %v2326 = vrot.slane %v2324, 4
        %v2327 = vor.u32 %v2326, %v2322
        %v2328 = vrot.slane %v2327, 4
        %v2330 = vshll.u32 %v1191, 16
        %v2332 = vrot.slane %v2330, 5
        %v2333 = vsel %vm1253, %v2328, %v2332
        %v2335 = vshrl.u32 %v1192, 16
        %v2337 = vrot.slane %v2335, 4
        %v2338 = vshll.u32 %v1192, 16
        %v2340 = vrot.slane %v2338, 5
        %v2341 = vor.u32 %v2337, %v2340
        %v2342 = vrot.slane %v2341, 4
        %v2344 = vshll.u32 %v1193, 16
        %v2346 = vrot.slane %v2344, 5
        %v2347 = vsel %vm1253, %v2342, %v2346
        %v2348 = vshrl.u32 %v1193, 16
        %v2350 = vrot.slane %v2348, 4
        %v2351 = vor.u32 %v2350, %v2346
        %v2352 = vrot.slane %v2351, 4
        %v2354 = vshll.u32 %v1194, 16
        %v2356 = vrot.slane %v2354, 5
        %v2357 = vsel %vm1253, %v2352, %v2356
        %v2359 = vshrl.u32 %v1195, 16
        %v2361 = vrot.slane %v2359, 4
        %v2362 = vshll.u32 %v1195, 16
        %v2364 = vrot.slane %v2362, 5
        %v2365 = vor.u32 %v2361, %v2364
        %v2366 = vrot.slane %v2365, 4
        %v2368 = vshll.u32 %v1196, 16
        %v2370 = vrot.slane %v2368, 5
        %v2371 = vsel %vm1253, %v2366, %v2370
        %v2372 = vshrl.u32 %v1196, 16
        %v2374 = vrot.slane %v2372, 4
        %v2375 = vor.u32 %v2374, %v2370
        %v2376 = vrot.slane %v2375, 4
        %v2378 = vshll.u32 %v1197, 16
        %v2380 = vrot.slane %v2378, 5
        %v2381 = vsel %vm1253, %v2376, %v2380
        %v2383 = vshrl.u32 %v1198, 16
        %v2385 = vrot.slane %v2383, 4
        %v2386 = vshll.u32 %v1198, 16
        %v2388 = vrot.slane %v2386, 5
        %v2389 = vor.u32 %v2385, %v2388
        %v2390 = vrot.slane %v2389, 4
        %v2392 = vshll.u32 %v1199, 16
        %v2394 = vrot.slane %v2392, 5
        %v2395 = vsel %vm1253, %v2390, %v2394
        %v2396 = vshrl.u32 %v1199, 16
        %v2398 = vrot.slane %v2396, 4
        %v2399 = vor.u32 %v2398, %v2394
        %v2400 = vrot.slane %v2399, 4
        %v2402 = vshll.u32 %v1200, 16
        %v2404 = vrot.slane %v2402, 5
        %v2405 = vsel %vm1253, %v2400, %v2404
        %v2407 = vshrl.u32 %v1201, 16
        %v2409 = vrot.slane %v2407, 4
        %v2410 = vshll.u32 %v1201, 16
        %v2412 = vrot.slane %v2410, 5
        %v2413 = vor.u32 %v2409, %v2412
        %v2414 = vrot.slane %v2413, 4
        %v2416 = vshll.u32 %v1202, 16
        %v2418 = vrot.slane %v2416, 5
        %v2419 = vsel %vm1253, %v2414, %v2418
        %v2420 = vshrl.u32 %v1202, 16
        %v2422 = vrot.slane %v2420, 4
        %v2423 = vor.u32 %v2422, %v2418
        %v2424 = vrot.slane %v2423, 4
        %v2426 = vshll.u32 %v1203, 16
        %v2428 = vrot.slane %v2426, 5
        %v2429 = vsel %vm1253, %v2424, %v2428
        %v2431 = vshrl.u32 %v1204, 16
        %v2433 = vrot.slane %v2431, 4
        %v2434 = vshll.u32 %v1204, 16
        %v2436 = vrot.slane %v2434, 5
        %v2437 = vor.u32 %v2433, %v2436
        %v2438 = vrot.slane %v2437, 4
        %v2440 = vshll.u32 %v1205, 16
        %v2442 = vrot.slane %v2440, 5
        %v2443 = vsel %vm1253, %v2438, %v2442
        %v2444 = vshrl.u32 %v1205, 16
        %v2446 = vrot.slane %v2444, 4
        %v2447 = vor.u32 %v2446, %v2442
        %v2448 = vrot.slane %v2447, 4
        %v2450 = vshll.u32 %v1206, 16
        %v2452 = vrot.slane %v2450, 5
        %v2453 = vsel %vm1253, %v2448, %v2452
        %v2455 = vshrl.u32 %v1207, 16
        %v2457 = vrot.slane %v2455, 4
        %v2458 = vshll.u32 %v1207, 16
        %v2460 = vrot.slane %v2458, 5
        %v2461 = vor.u32 %v2457, %v2460
        %v2462 = vrot.slane %v2461, 4
        %v2464 = vshll.u32 %v1208, 16
        %v2466 = vrot.slane %v2464, 5
        %v2467 = vsel %vm1253, %v2462, %v2466
        %v2468 = vshrl.u32 %v1208, 16
        %v2470 = vrot.slane %v2468, 4
        %v2471 = vor.u32 %v2470, %v2466
        %v2472 = vrot.slane %v2471, 4
        %v2474 = vshll.u32 %v1209, 16
        %v2476 = vrot.slane %v2474, 5
        %v2477 = vsel %vm1253, %v2472, %v2476
        %v2479 = vshrl.u32 %v1210, 16
        %v2481 = vrot.slane %v2479, 4
        %v2482 = vshll.u32 %v1210, 16
        %v2484 = vrot.slane %v2482, 5
        %v2485 = vor.u32 %v2481, %v2484
        %v2486 = vrot.slane %v2485, 4
        %v2488 = vshll.u32 %v1211, 16
        %v2490 = vrot.slane %v2488, 5
        %v2491 = vsel %vm1253, %v2486, %v2490
        %v2492 = vshrl.u32 %v1211, 16
        %v2494 = vrot.slane %v2492, 4
        %v2495 = vor.u32 %v2494, %v2490
        %v2496 = vrot.slane %v2495, 4
        %v2498 = vshll.u32 %v1212, 16
        %v2500 = vrot.slane %v2498, 5
        %v2501 = vsel %vm1253, %v2496, %v2500
        %v2503 = vshrl.u32 %v1213, 16
        %v2505 = vrot.slane %v2503, 4
        %v2506 = vshll.u32 %v1213, 16
        %v2508 = vrot.slane %v2506, 5
        %v2509 = vor.u32 %v2505, %v2508
        %v2510 = vrot.slane %v2509, 4
        %v2512 = vshll.u32 %v1214, 16
        %v2514 = vrot.slane %v2512, 5
        %v2515 = vsel %vm1253, %v2510, %v2514
        %v2516 = vshrl.u32 %v1214, 16
        %v2518 = vrot.slane %v2516, 4
        %v2519 = vor.u32 %v2518, %v2514
        %v2520 = vrot.slane %v2519, 4
        %v2522 = vshll.u32 %v1215, 16
        %v2524 = vrot.slane %v2522, 5
        %v2525 = vsel %vm1253, %v2520, %v2524
        %v2527 = vshrl.u32 %v1216, 16
        %v2529 = vrot.slane %v2527, 4
        %v2530 = vshll.u32 %v1216, 16
        %v2532 = vrot.slane %v2530, 5
        %v2533 = vor.u32 %v2529, %v2532
        %v2534 = vrot.slane %v2533, 4
        %v2536 = vshll.u32 %v1217, 16
        %v2538 = vrot.slane %v2536, 5
        %v2539 = vsel %vm1253, %v2534, %v2538
        %v2540 = vshrl.u32 %v1217, 16
        %v2542 = vrot.slane %v2540, 4
        %v2543 = vor.u32 %v2542, %v2538
        %v2544 = vrot.slane %v2543, 4
        %v2546 = vshll.u32 %v1218, 16
        %v2548 = vrot.slane %v2546, 5
        %v2549 = vsel %vm1253, %v2544, %v2548
        %v2551 = vshrl.u32 %v1219, 16
        %v2553 = vrot.slane %v2551, 4
        %v2554 = vshll.u32 %v1219, 16
        %v2556 = vrot.slane %v2554, 5
        %v2557 = vor.u32 %v2553, %v2556
        %v2558 = vrot.slane %v2557, 4
        %v2560 = vshll.u32 %v1220, 16
        %v2562 = vrot.slane %v2560, 5
        %v2563 = vsel %vm1253, %v2558, %v2562
        %v2564 = vshrl.u32 %v1220, 16
        %v2566 = vrot.slane %v2564, 4
        %v2567 = vor.u32 %v2566, %v2562
        %v2568 = vrot.slane %v2567, 4
        %v2570 = vshll.u32 %v1221, 16
        %v2572 = vrot.slane %v2570, 5
        %v2573 = vsel %vm1253, %v2568, %v2572
        %v2575 = vshrl.u32 %v1222, 16
        %v2577 = vrot.slane %v2575, 4
        %v2578 = vshll.u32 %v1222, 16
        %v2580 = vrot.slane %v2578, 5
        %v2581 = vor.u32 %v2577, %v2580
        %v2582 = vrot.slane %v2581, 4
        %v2584 = vshll.u32 %v1223, 16
        %v2586 = vrot.slane %v2584, 5
        %v2587 = vsel %vm1253, %v2582, %v2586
        %v2588 = vshrl.u32 %v1223, 16
        %v2590 = vrot.slane %v2588, 4
        %v2591 = vor.u32 %v2590, %v2586
        %v2592 = vrot.slane %v2591, 4
        %v2594 = vshll.u32 %v1224, 16
        %v2596 = vrot.slane %v2594, 5
        %v2597 = vsel %vm1253, %v2592, %v2596
        %v2599 = vshrl.u32 %v1225, 16
        %v2601 = vrot.slane %v2599, 4
        %v2602 = vshll.u32 %v1225, 16
        %v2604 = vrot.slane %v2602, 5
        %v2605 = vor.u32 %v2601, %v2604
        %v2606 = vrot.slane %v2605, 4
        %v2608 = vshll.u32 %v1226, 16
        %v2610 = vrot.slane %v2608, 5
        %v2611 = vsel %vm1253, %v2606, %v2610
        %v2612 = vshrl.u32 %v1226, 16
        %v2614 = vrot.slane %v2612, 4
        %v2615 = vor.u32 %v2614, %v2610
        %v2616 = vrot.slane %v2615, 4
        %v2618 = vshll.u32 %v1227, 16
        %v2620 = vrot.slane %v2618, 5
        %v2621 = vsel %vm1253, %v2616, %v2620
        %v2623 = vshrl.u32 %v1228, 16
        %v2625 = vrot.slane %v2623, 4
        %v2626 = vshll.u32 %v1228, 16
        %v2628 = vrot.slane %v2626, 5
        %v2629 = vor.u32 %v2625, %v2628
        %v2630 = vrot.slane %v2629, 4
        %v2632 = vshll.u32 %v1229, 16
        %v2634 = vrot.slane %v2632, 5
        %v2635 = vsel %vm1253, %v2630, %v2634
        %v2636 = vshrl.u32 %v1229, 16
        %v2638 = vrot.slane %v2636, 4
        %v2639 = vor.u32 %v2638, %v2634
        %v2640 = vrot.slane %v2639, 4
        %v2642 = vshll.u32 %v1230, 16
        %v2644 = vrot.slane %v2642, 5
        %v2645 = vsel %vm1253, %v2640, %v2644
        %v2647 = vshrl.u32 %v1231, 16
        %v2649 = vrot.slane %v2647, 4
        %v2650 = vshll.u32 %v1231, 16
        %v2652 = vrot.slane %v2650, 5
        %v2653 = vor.u32 %v2649, %v2652
        %v2654 = vrot.slane %v2653, 4
        %v2656 = vshll.u32 %v1232, 16
        %v2658 = vrot.slane %v2656, 5
        %v2659 = vsel %vm1253, %v2654, %v2658
        %v2660 = vshrl.u32 %v1232, 16
        %v2662 = vrot.slane %v2660, 4
        %v2663 = vor.u32 %v2662, %v2658
        %v2664 = vrot.slane %v2663, 4
        %v2666 = vshll.u32 %v1233, 16
        %v2668 = vrot.slane %v2666, 5
        %v2669 = vsel %vm1253, %v2664, %v2668
        %v2671 = vshrl.u32 %v1234, 16
        %v2673 = vrot.slane %v2671, 4
        %v2674 = vshll.u32 %v1234, 16
        %v2676 = vrot.slane %v2674, 5
        %v2677 = vor.u32 %v2673, %v2676
        %v2678 = vrot.slane %v2677, 4
        %v2680 = vshll.u32 %v1235, 16
        %v2682 = vrot.slane %v2680, 5
        %v2683 = vsel %vm1253, %v2678, %v2682
        %v2684 = vshrl.u32 %v1235, 16
        %v2686 = vrot.slane %v2684, 4
        %v2687 = vor.u32 %v2686, %v2682
        %v2688 = vrot.slane %v2687, 4
        %v2690 = vshll.u32 %v1236, 16
        %v2692 = vrot.slane %v2690, 5
        %v2693 = vsel %vm1253, %v2688, %v2692
        %v2695 = vshrl.u32 %v1237, 16
        %v2697 = vrot.slane %v2695, 4
        %v2698 = vshll.u32 %v1237, 16
        %v2700 = vrot.slane %v2698, 5
        %v2701 = vor.u32 %v2697, %v2700
        %v2702 = vrot.slane %v2701, 4
        %v2704 = vshll.u32 %v1238, 16
        %v2706 = vrot.slane %v2704, 5
        %v2707 = vsel %vm1253, %v2702, %v2706
        %v2708 = vshrl.u32 %v1238, 16
        %v2710 = vrot.slane %v2708, 4
        %v2711 = vor.u32 %v2710, %v2706
        %v2712 = vrot.slane %v2711, 4
        %v2714 = vshll.u32 %v1239, 16
        %v2716 = vrot.slane %v2714, 5
        %v2717 = vsel %vm1253, %v2712, %v2716
        %v2719 = vshrl.u32 %v1240, 16
        %v2721 = vrot.slane %v2719, 4
        %v2722 = vshll.u32 %v1240, 16
        %v2724 = vrot.slane %v2722, 5
        %v2725 = vor.u32 %v2721, %v2724
        %v2726 = vrot.slane %v2725, 4
        %v2728 = vshll.u32 %v1241, 16
        %v2730 = vrot.slane %v2728, 5
        %v2731 = vsel %vm1253, %v2726, %v2730
        %v2732 = vshrl.u32 %v1241, 16
        %v2734 = vrot.slane %v2732, 4
        %v2735 = vor.u32 %v2734, %v2730
        %v2736 = vrot.slane %v2735, 4
        %v2738 = vshll.u32 %v1242, 16
        %v2740 = vrot.slane %v2738, 5
        %v2741 = vsel %vm1253, %v2736, %v2740
        %v2743 = vshrl.u32 %v1243, 16
        %v2745 = vrot.slane %v2743, 4
        %v2746 = vshll.u32 %v1243, 16
        %v2748 = vrot.slane %v2746, 5
        %v2749 = vor.u32 %v2745, %v2748
        %v2750 = vrot.slane %v2749, 4
        %v2752 = vshll.u32 %v1244, 16
        %v2754 = vrot.slane %v2752, 5
        %v2755 = vsel %vm1253, %v2750, %v2754
        %v2756 = vshrl.u32 %v1244, 16
        %v2758 = vrot.slane %v2756, 4
        %v2759 = vor.u32 %v2758, %v2754
        %v2760 = vrot.slane %v2759, 4
        %v2762 = vshll.u32 %v1245, 16
        %v2764 = vrot.slane %v2762, 5
        %v2765 = vsel %vm1253, %v2760, %v2764
        %v2767 = vshrl.u32 %v1246, 16
        %v2769 = vrot.slane %v2767, 4
        %v2770 = vshll.u32 %v1246, 16
        %v2772 = vrot.slane %v2770, 5
        %v2773 = vor.u32 %v2769, %v2772
        %v2774 = vrot.slane %v2773, 4
        %v2776 = vshll.u32 %v1247, 16
        %v2778 = vrot.slane %v2776, 5
        %v2779 = vsel %vm1253, %v2774, %v2778
        %v2780 = vshrl.u32 %v1247, 16
        %v2782 = vrot.slane %v2780, 4
        %v2783 = vor.u32 %v2782, %v2778
        %v2784 = vrot.slane %v2783, 4
        %v2786 = vshll.u32 %v1248, 16
        %v2788 = vrot.slane %v2786, 5
        %v2789 = vsel %vm1253, %v2784, %v2788
        %s2790 = scalar_lea.vmem %s1, 8
        %v2791 = vld [vmem:[%s2790] sm:$0xf]
        %v2792 = vld [vmem:[%s2790 + $0x4] sm:$0x3]
        %v2793 = vunpack.c.l.b16 %v1267
        %v2794 = vunpack.c.l.b16 %v1277
        %v2795 = vunpack.c.l.b16 %v1291
        %v2796 = vunpack.c.l.b16 %v1301
        %v2797 = vunpack.c.l.b16 %v1315
        %v2798 = vunpack.c.l.b16 %v1325
        %v2799 = vunpack.c.l.b16 %v1339
        %v2800 = vunpack.c.l.b16 %v1349
        %v2801 = vunpack.c.l.b16 %v1363
        %v2802 = vunpack.c.l.b16 %v1373
        %v2803 = vunpack.c.l.b16 %v1387
        %v2804 = vunpack.c.l.b16 %v1397
        %v2805 = vunpack.c.l.b16 %v1411
        %v2806 = vunpack.c.l.b16 %v1421
        %v2807 = vunpack.c.l.b16 %v1435
        %v2808 = vunpack.c.l.b16 %v1445
        %v2809 = vunpack.c.l.b16 %v1459
        %v2810 = vunpack.c.l.b16 %v1469
        %v2811 = vunpack.c.l.b16 %v1483
        %v2812 = vunpack.c.l.b16 %v1493
        %v2813 = vunpack.c.l.b16 %v1507
        %v2814 = vunpack.c.l.b16 %v1517
        %v2815 = vunpack.c.l.b16 %v1531
        %v2816 = vunpack.c.l.b16 %v1541
        %v2817 = vunpack.c.l.b16 %v1555
        %v2818 = vunpack.c.l.b16 %v1565
        %v2819 = vunpack.c.l.b16 %v1579
        %v2820 = vunpack.c.l.b16 %v1589
        %v2821 = vunpack.c.l.b16 %v1603
        %v2822 = vunpack.c.l.b16 %v1613
        %v2823 = vunpack.c.l.b16 %v1627
        %v2824 = vunpack.c.l.b16 %v1637
        %v2825 = vunpack.c.l.b16 %v1651
        %v2826 = vunpack.c.l.b16 %v1661
        %v2827 = vunpack.c.l.b16 %v1675
        %v2828 = vunpack.c.l.b16 %v1685
        %v2829 = vunpack.c.l.b16 %v1699
        %v2830 = vunpack.c.l.b16 %v1709
        %v2831 = vunpack.c.l.b16 %v1723
        %v2832 = vunpack.c.l.b16 %v1733
        %v2833 = vunpack.c.l.b16 %v1747
        %v2834 = vunpack.c.l.b16 %v1757
        %v2835 = vunpack.c.l.b16 %v1771
        %v2836 = vunpack.c.l.b16 %v1781
        %v2837 = vunpack.c.l.b16 %v1795
        %v2838 = vunpack.c.l.b16 %v1805
        %v2839 = vunpack.c.l.b16 %v1819
        %v2840 = vunpack.c.l.b16 %v1829
        %v2841 = vunpack.c.l.b16 %v1843
        %v2842 = vunpack.c.l.b16 %v1853
        %v2843 = vunpack.c.l.b16 %v1867
        %v2844 = vunpack.c.l.b16 %v1877
        %v2845 = vunpack.c.l.b16 %v1891
        %v2846 = vunpack.c.l.b16 %v1901
        %v2847 = vunpack.c.l.b16 %v1915
        %v2848 = vunpack.c.l.b16 %v1925
        %v2849 = vunpack.c.l.b16 %v1939
        %v2850 = vunpack.c.l.b16 %v1949
        %v2851 = vunpack.c.l.b16 %v1963
        %v2852 = vunpack.c.l.b16 %v1973
        %v2853 = vunpack.c.l.b16 %v1987
        %v2854 = vunpack.c.l.b16 %v1997
        %v2855 = vunpack.c.l.b16 %v2011
        %v2856 = vunpack.c.l.b16 %v2021
        %v2857 = vunpack.c.l.b16 %v2035
        %v2858 = vunpack.c.l.b16 %v2045
        %v2859 = vunpack.c.l.b16 %v2059
        %v2860 = vunpack.c.l.b16 %v2069
        %v2861 = vunpack.c.l.b16 %v2083
        %v2862 = vunpack.c.l.b16 %v2093
        %v2863 = vunpack.c.l.b16 %v2107
        %v2864 = vunpack.c.l.b16 %v2117
        %v2865 = vunpack.c.l.b16 %v2131
        %v2866 = vunpack.c.l.b16 %v2141
        %v2867 = vunpack.c.l.b16 %v2155
        %v2868 = vunpack.c.l.b16 %v2165
        %v2869 = vunpack.c.l.b16 %v2179
        %v2870 = vunpack.c.l.b16 %v2189
        %v2871 = vunpack.c.l.b16 %v2203
        %v2872 = vunpack.c.l.b16 %v2213
        %v2873 = vunpack.c.l.b16 %v2227
        %v2874 = vunpack.c.l.b16 %v2237
        %v2875 = vunpack.c.l.b16 %v2251
        %v2876 = vunpack.c.l.b16 %v2261
        %v2877 = vunpack.c.l.b16 %v2275
        %v2878 = vunpack.c.l.b16 %v2285
        %v2879 = vunpack.c.l.b16 %v2299
        %v2880 = vunpack.c.l.b16 %v2309
        %v2881 = vunpack.c.l.b16 %v2323
        %v2882 = vunpack.c.l.b16 %v2333
        %v2883 = vunpack.c.l.b16 %v2347
        %v2884 = vunpack.c.l.b16 %v2357
        %v2885 = vunpack.c.l.b16 %v2371
        %v2886 = vunpack.c.l.b16 %v2381
        %v2887 = vunpack.c.l.b16 %v2395
        %v2888 = vunpack.c.l.b16 %v2405
        %v2889 = vunpack.c.l.b16 %v2419
        %v2890 = vunpack.c.l.b16 %v2429
        %v2891 = vunpack.c.l.b16 %v2443
        %v2892 = vunpack.c.l.b16 %v2453
        %v2893 = vunpack.c.l.b16 %v2467
        %v2894 = vunpack.c.l.b16 %v2477
        %v2895 = vunpack.c.l.b16 %v2491
        %v2896 = vunpack.c.l.b16 %v2501
        %v2897 = vunpack.c.l.b16 %v2515
        %v2898 = vunpack.c.l.b16 %v2525
        %v2899 = vunpack.c.l.b16 %v2539
        %v2900 = vunpack.c.l.b16 %v2549
        %v2901 = vunpack.c.l.b16 %v2563
        %v2902 = vunpack.c.l.b16 %v2573
        %v2903 = vunpack.c.l.b16 %v2587
        %v2904 = vunpack.c.l.b16 %v2597
        %v2905 = vunpack.c.l.b16 %v2611
        %v2906 = vunpack.c.l.b16 %v2621
        %v2907 = vunpack.c.l.b16 %v2635
        %v2908 = vunpack.c.l.b16 %v2645
        %v2909 = vunpack.c.l.b16 %v2659
        %v2910 = vunpack.c.l.b16 %v2669
        %v2911 = vunpack.c.l.b16 %v2683
        %v2912 = vunpack.c.l.b16 %v2693
        %v2913 = vunpack.c.l.b16 %v2707
        %v2914 = vunpack.c.l.b16 %v2717
        %v2915 = vunpack.c.l.b16 %v2731
        %v2916 = vunpack.c.l.b16 %v2741
        %v2917 = vunpack.c.l.b16 %v2755
        %v2918 = vunpack.c.l.b16 %v2765
        %v2919 = vunpack.c.l.b16 %v2779
        %v2920 = vunpack.c.l.b16 %v2789
        %v2921 = vpack.c.b16 %v2794, %v2793
        %v2922 = vpack.c.b16 %v2796, %v2795
        %v2923 = vpack.c.b16 %v2798, %v2797
        %v2924 = vpack.c.b16 %v2800, %v2799
        %v2925 = vpack.c.b16 %v2802, %v2801
        %v2926 = vpack.c.b16 %v2804, %v2803
        %v2927 = vpack.c.b16 %v2806, %v2805
        %v2928 = vpack.c.b16 %v2808, %v2807
        %v2929 = vpack.c.b16 %v2810, %v2809
        %v2930 = vpack.c.b16 %v2812, %v2811
        %v2931 = vpack.c.b16 %v2814, %v2813
        %v2932 = vpack.c.b16 %v2816, %v2815
        %v2933 = vpack.c.b16 %v2818, %v2817
        %v2934 = vpack.c.b16 %v2820, %v2819
        %v2935 = vpack.c.b16 %v2822, %v2821
        %v2936 = vpack.c.b16 %v2824, %v2823
        %v2937 = vpack.c.b16 %v2826, %v2825
        %v2938 = vpack.c.b16 %v2828, %v2827
        %v2939 = vpack.c.b16 %v2830, %v2829
        %v2940 = vpack.c.b16 %v2832, %v2831
        %v2941 = vpack.c.b16 %v2834, %v2833
        %v2942 = vpack.c.b16 %v2836, %v2835
        %v2943 = vpack.c.b16 %v2838, %v2837
        %v2944 = vpack.c.b16 %v2840, %v2839
        %v2945 = vpack.c.b16 %v2842, %v2841
        %v2946 = vpack.c.b16 %v2844, %v2843
        %v2947 = vpack.c.b16 %v2846, %v2845
        %v2948 = vpack.c.b16 %v2848, %v2847
        %v2949 = vpack.c.b16 %v2850, %v2849
        %v2950 = vpack.c.b16 %v2852, %v2851
        %v2951 = vpack.c.b16 %v2854, %v2853
        %v2952 = vpack.c.b16 %v2856, %v2855
        %v2953 = vpack.c.b16 %v2858, %v2857
        %v2954 = vpack.c.b16 %v2860, %v2859
        %v2955 = vpack.c.b16 %v2862, %v2861
        %v2956 = vpack.c.b16 %v2864, %v2863
        %v2957 = vpack.c.b16 %v2866, %v2865
        %v2958 = vpack.c.b16 %v2868, %v2867
        %v2959 = vpack.c.b16 %v2870, %v2869
        %v2960 = vpack.c.b16 %v2872, %v2871
        %v2961 = vpack.c.b16 %v2874, %v2873
        %v2962 = vpack.c.b16 %v2876, %v2875
        %v2963 = vpack.c.b16 %v2878, %v2877
        %v2964 = vpack.c.b16 %v2880, %v2879
        %v2965 = vpack.c.b16 %v2882, %v2881
        %v2966 = vpack.c.b16 %v2884, %v2883
        %v2967 = vpack.c.b16 %v2886, %v2885
        %v2968 = vpack.c.b16 %v2888, %v2887
        %v2969 = vpack.c.b16 %v2890, %v2889
        %v2970 = vpack.c.b16 %v2892, %v2891
        %v2971 = vpack.c.b16 %v2894, %v2893
        %v2972 = vpack.c.b16 %v2896, %v2895
        %v2973 = vpack.c.b16 %v2898, %v2897
        %v2974 = vpack.c.b16 %v2900, %v2899
        %v2975 = vpack.c.b16 %v2902, %v2901
        %v2976 = vpack.c.b16 %v2904, %v2903
        %v2977 = vpack.c.b16 %v2906, %v2905
        %v2978 = vpack.c.b16 %v2908, %v2907
        %v2979 = vpack.c.b16 %v2910, %v2909
        %v2980 = vpack.c.b16 %v2912, %v2911
        %v2981 = vpack.c.b16 %v2914, %v2913
        %v2982 = vpack.c.b16 %v2916, %v2915
        %v2983 = vpack.c.b16 %v2918, %v2917
        %v2984 = vpack.c.b16 %v2920, %v2919
        %v2987 = vunpack.c.l.b16 %v2791
        %v2988 = vunpack.c.l.b16 %v2792
        %v2989 = vpack.c.b16 %v2988, %v2987
        %vm2990 = vcmask 97280
        %v2992 = vsel %vm2990, %v2921, 0
        %v2995 = vsel %vm2990, %v2922, 0
        %v2998 = vsel %vm2990, %v2923, 0
        %v3001 = vsel %vm2990, %v2924, 0
        %v3004 = vsel %vm2990, %v2925, 0
        %v3007 = vsel %vm2990, %v2926, 0
        %v3010 = vsel %vm2990, %v2927, 0
        %v3013 = vsel %vm2990, %v2928, 0
        %v3016 = vsel %vm2990, %v2929, 0
        %v3019 = vsel %vm2990, %v2930, 0
        %v3022 = vsel %vm2990, %v2931, 0
        %v3025 = vsel %vm2990, %v2932, 0
        %v3028 = vsel %vm2990, %v2933, 0
        %v3031 = vsel %vm2990, %v2934, 0
        %v3034 = vsel %vm2990, %v2935, 0
        %v3037 = vsel %vm2990, %v2936, 0
        %v3040 = vsel %vm2990, %v2937, 0
        %v3043 = vsel %vm2990, %v2938, 0
        %v3046 = vsel %vm2990, %v2939, 0
        %v3049 = vsel %vm2990, %v2940, 0
        %v3052 = vsel %vm2990, %v2941, 0
        %v3055 = vsel %vm2990, %v2942, 0
        %v3058 = vsel %vm2990, %v2943, 0
        %v3061 = vsel %vm2990, %v2944, 0
        %v3064 = vsel %vm2990, %v2945, 0
        %v3067 = vsel %vm2990, %v2946, 0
        %v3070 = vsel %vm2990, %v2947, 0
        %v3073 = vsel %vm2990, %v2948, 0
        %v3076 = vsel %vm2990, %v2949, 0
        %v3079 = vsel %vm2990, %v2950, 0
        %v3082 = vsel %vm2990, %v2951, 0
        %v3085 = vsel %vm2990, %v2952, 0
        %v3088 = vsel %vm2990, %v2953, 0
        %v3091 = vsel %vm2990, %v2954, 0
        %v3094 = vsel %vm2990, %v2955, 0
        %v3097 = vsel %vm2990, %v2956, 0
        %v3100 = vsel %vm2990, %v2957, 0
        %v3103 = vsel %vm2990, %v2958, 0
        %v3106 = vsel %vm2990, %v2959, 0
        %v3109 = vsel %vm2990, %v2960, 0
        %v3112 = vsel %vm2990, %v2961, 0
        %v3115 = vsel %vm2990, %v2962, 0
        %v3118 = vsel %vm2990, %v2963, 0
        %v3121 = vsel %vm2990, %v2964, 0
        %v3124 = vsel %vm2990, %v2965, 0
        %v3127 = vsel %vm2990, %v2966, 0
        %v3130 = vsel %vm2990, %v2967, 0
        %v3133 = vsel %vm2990, %v2968, 0
        %v3136 = vsel %vm2990, %v2969, 0
        %v3139 = vsel %vm2990, %v2970, 0
        %v3142 = vsel %vm2990, %v2971, 0
        %v3145 = vsel %vm2990, %v2972, 0
        %v3148 = vsel %vm2990, %v2973, 0
        %v3151 = vsel %vm2990, %v2974, 0
        %v3154 = vsel %vm2990, %v2975, 0
        %v3157 = vsel %vm2990, %v2976, 0
        %v3160 = vsel %vm2990, %v2977, 0
        %v3163 = vsel %vm2990, %v2978, 0
        %v3166 = vsel %vm2990, %v2979, 0
        %v3169 = vsel %vm2990, %v2980, 0
        %v3172 = vsel %vm2990, %v2981, 0
        %v3175 = vsel %vm2990, %v2982, 0
        %v3178 = vsel %vm2990, %v2983, 0
        %v3181 = vsel %vm2990, %v2984, 0
        %vm3183 = vcmask 1045504
        %v3185 = vsel %vm3183, %v2989, 0
        %3187 = vmatprep.subr.bf16.mxu0 0
        %3188 = vmatpush1.bf16.msra.mxu0 0
        %3189 = vmatprep.subr.bf16.mxu0 0
        %3190 = vmatpush1.bf16.msra.mxu0 0
        %3191 = vmatprep.subr.bf16.mxu0 0
        %3192 = vmatpush1.bf16.msra.mxu0 0
        %3193 = vmatprep.subr.bf16.mxu0 0
        %3194 = vmatpush1.bf16.msra.mxu0 0
        %3195 = vmatprep.subr.bf16.mxu0 0
        %3196 = vmatpush1.bf16.msra.mxu0 0
        %3197 = vmatprep.subr.bf16.mxu0 0
        %3198 = vmatpush1.bf16.msra.mxu0 0
        %3199 = vmatprep.subr.bf16.mxu0 0
        %3200 = vmatpush1.bf16.msra.mxu0 0
        %3201 = vmatprep.subr.bf16.mxu0 0
        %3202 = vmatpush1.bf16.msra.mxu0 %v3185
        %3203 = vmatprep.subr.bf16.mxu0 0
        %3204 = vmatpush2.bf16.msra.mxu0 0
        %3205 = vmatprep.subr.bf16.mxu0 0
        %3206 = vmatpush2.bf16.msra.mxu0 0
        %3207 = vmatprep.subr.bf16.mxu0 0
        %3208 = vmatpush2.bf16.msra.mxu0 0
        %3209 = vmatprep.subr.bf16.mxu0 0
        %3210 = vmatpush2.bf16.msra.mxu0 0
        %3211 = vmatprep.subr.bf16.mxu0 0
        %3212 = vmatpush2.bf16.msra.mxu0 0
        %3213 = vmatprep.subr.bf16.mxu0 0
        %3214 = vmatpush2.bf16.msra.mxu0 0
        %3215 = vmatprep.subr.bf16.mxu0 0
        %3216 = vmatpush2.bf16.msra.mxu0 0
        %3217 = vmatprep.subr.bf16.mxu0 0
        %3218 = vmatpush2.bf16.msra.mxu0 0
        %3219 = vmatprep.mubr.bf16.mxu0 0
        %3220 = vmatmul.mubr.bf16.gmra.mxu0 %v2992
        %v3221 = vpop.f32.mrf.mxu0
        %v3222 = vadd.f32 0.0, %v3221
        %v3223 = vpop.f32.mrf.mxu0
        %v3224 = vpop.f32.mrf.mxu0
        %v3225 = vadd.f32 0.0, %v3224
        %v3226 = vpop.f32.mrf.mxu0
        %3227 = vmatprep.mubr.bf16.mxu0 0
        %3228 = vmatmul.mubr.bf16.gmra.mxu0 %v2995
        %v3229 = vpop.f32.mrf.mxu0
        %v3230 = vadd.f32 0.0, %v3229
        %v3231 = vpop.f32.mrf.mxu0
        %v3232 = vpop.f32.mrf.mxu0
        %v3233 = vadd.f32 0.0, %v3232
        %v3234 = vpop.f32.mrf.mxu0
        %3235 = vmatprep.mubr.bf16.mxu0 0
        %3236 = vmatmul.mubr.bf16.gmra.mxu0 %v2998
        %v3237 = vpop.f32.mrf.mxu0
        %v3238 = vadd.f32 0.0, %v3237
        %v3239 = vpop.f32.mrf.mxu0
        %v3240 = vpop.f32.mrf.mxu0
        %v3241 = vadd.f32 0.0, %v3240
        %v3242 = vpop.f32.mrf.mxu0
        %3243 = vmatprep.mubr.bf16.mxu0 0
        %3244 = vmatmul.mubr.bf16.gmra.mxu0 %v3001
        %v3245 = vpop.f32.mrf.mxu0
        %v3246 = vadd.f32 0.0, %v3245
        %v3247 = vpop.f32.mrf.mxu0
        %v3248 = vpop.f32.mrf.mxu0
        %v3249 = vadd.f32 0.0, %v3248
        %v3250 = vpop.f32.mrf.mxu0
        %3251 = vmatprep.mubr.bf16.mxu0 0
        %3252 = vmatmul.mubr.bf16.gmra.mxu0 %v3004
        %v3253 = vpop.f32.mrf.mxu0
        %v3254 = vadd.f32 0.0, %v3253
        %v3255 = vpop.f32.mrf.mxu0
        %v3256 = vpop.f32.mrf.mxu0
        %v3257 = vadd.f32 0.0, %v3256
        %v3258 = vpop.f32.mrf.mxu0
        %3259 = vmatprep.mubr.bf16.mxu0 0
        %3260 = vmatmul.mubr.bf16.gmra.mxu0 %v3007
        %v3261 = vpop.f32.mrf.mxu0
        %v3262 = vadd.f32 0.0, %v3261
        %v3263 = vpop.f32.mrf.mxu0
        %v3264 = vpop.f32.mrf.mxu0
        %v3265 = vadd.f32 0.0, %v3264
        %v3266 = vpop.f32.mrf.mxu0
        %3267 = vmatprep.mubr.bf16.mxu0 0
        %3268 = vmatmul.mubr.bf16.gmra.mxu0 %v3010
        %v3269 = vpop.f32.mrf.mxu0
        %v3270 = vadd.f32 0.0, %v3269
        %v3271 = vpop.f32.mrf.mxu0
        %v3272 = vpop.f32.mrf.mxu0
        %v3273 = vadd.f32 0.0, %v3272
        %v3274 = vpop.f32.mrf.mxu0
        %3275 = vmatprep.mubr.bf16.mxu0 0
        %3276 = vmatmul.mubr.bf16.gmra.mxu0 %v3013
        %v3277 = vpop.f32.mrf.mxu0
        %v3278 = vadd.f32 0.0, %v3277
        %v3279 = vpop.f32.mrf.mxu0
        %v3280 = vpop.f32.mrf.mxu0
        %v3281 = vadd.f32 0.0, %v3280
        %v3282 = vpop.f32.mrf.mxu0
        %3283 = vmatprep.mubr.bf16.mxu0 0
        %3284 = vmatmul.mubr.bf16.gmra.mxu0 %v3016
        %v3285 = vpop.f32.mrf.mxu0
        %v3286 = vadd.f32 0.0, %v3285
        %v3287 = vpop.f32.mrf.mxu0
        %v3288 = vpop.f32.mrf.mxu0
        %v3289 = vadd.f32 0.0, %v3288
        %v3290 = vpop.f32.mrf.mxu0
        %3291 = vmatprep.mubr.bf16.mxu0 0
        %3292 = vmatmul.mubr.bf16.gmra.mxu0 %v3019
        %v3293 = vpop.f32.mrf.mxu0
        %v3294 = vadd.f32 0.0, %v3293
        %v3295 = vpop.f32.mrf.mxu0
        %v3296 = vpop.f32.mrf.mxu0
        %v3297 = vadd.f32 0.0, %v3296
        %v3298 = vpop.f32.mrf.mxu0
        %3299 = vmatprep.mubr.bf16.mxu0 0
        %3300 = vmatmul.mubr.bf16.gmra.mxu0 %v3022
        %v3301 = vpop.f32.mrf.mxu0
        %v3302 = vadd.f32 0.0, %v3301
        %v3303 = vpop.f32.mrf.mxu0
        %v3304 = vpop.f32.mrf.mxu0
        %v3305 = vadd.f32 0.0, %v3304
        %v3306 = vpop.f32.mrf.mxu0
        %3307 = vmatprep.mubr.bf16.mxu0 0
        %3308 = vmatmul.mubr.bf16.gmra.mxu0 %v3025
        %v3309 = vpop.f32.mrf.mxu0
        %v3310 = vadd.f32 0.0, %v3309
        %v3311 = vpop.f32.mrf.mxu0
        %v3312 = vpop.f32.mrf.mxu0
        %v3313 = vadd.f32 0.0, %v3312
        %v3314 = vpop.f32.mrf.mxu0
        %3315 = vmatprep.mubr.bf16.mxu0 0
        %3316 = vmatmul.mubr.bf16.gmra.mxu0 %v3028
        %v3317 = vpop.f32.mrf.mxu0
        %v3318 = vadd.f32 0.0, %v3317
        %v3319 = vpop.f32.mrf.mxu0
        %v3320 = vpop.f32.mrf.mxu0
        %v3321 = vadd.f32 0.0, %v3320
        %v3322 = vpop.f32.mrf.mxu0
        %3323 = vmatprep.mubr.bf16.mxu0 0
        %3324 = vmatmul.mubr.bf16.gmra.mxu0 %v3031
        %v3325 = vpop.f32.mrf.mxu0
        %v3326 = vadd.f32 0.0, %v3325
        %v3327 = vpop.f32.mrf.mxu0
        %v3328 = vpop.f32.mrf.mxu0
        %v3329 = vadd.f32 0.0, %v3328
        %v3330 = vpop.f32.mrf.mxu0
        %3331 = vmatprep.mubr.bf16.mxu0 0
        %3332 = vmatmul.mubr.bf16.gmra.mxu0 %v3034
        %v3333 = vpop.f32.mrf.mxu0
        %v3334 = vadd.f32 0.0, %v3333
        %v3335 = vpop.f32.mrf.mxu0
        %v3336 = vpop.f32.mrf.mxu0
        %v3337 = vadd.f32 0.0, %v3336
        %v3338 = vpop.f32.mrf.mxu0
        %3339 = vmatprep.mubr.bf16.mxu0 0
        %3340 = vmatmul.mubr.bf16.gmra.mxu0 %v3037
        %v3341 = vpop.f32.mrf.mxu0
        %v3342 = vadd.f32 0.0, %v3341
        %v3343 = vpop.f32.mrf.mxu0
        %v3344 = vpop.f32.mrf.mxu0
        %v3345 = vadd.f32 0.0, %v3344
        %v3346 = vpop.f32.mrf.mxu0
        %3347 = vmatprep.mubr.bf16.mxu0 0
        %3348 = vmatmul.mubr.bf16.gmra.mxu0 %v3040
        %v3349 = vpop.f32.mrf.mxu0
        %v3350 = vadd.f32 0.0, %v3349
        %v3351 = vpop.f32.mrf.mxu0
        %v3352 = vpop.f32.mrf.mxu0
        %v3353 = vadd.f32 0.0, %v3352
        %v3354 = vpop.f32.mrf.mxu0
        %3355 = vmatprep.mubr.bf16.mxu0 0
        %3356 = vmatmul.mubr.bf16.gmra.mxu0 %v3043
        %v3357 = vpop.f32.mrf.mxu0
        %v3358 = vadd.f32 0.0, %v3357
        %v3359 = vpop.f32.mrf.mxu0
        %v3360 = vpop.f32.mrf.mxu0
        %v3361 = vadd.f32 0.0, %v3360
        %v3362 = vpop.f32.mrf.mxu0
        %3363 = vmatprep.mubr.bf16.mxu0 0
        %3364 = vmatmul.mubr.bf16.gmra.mxu0 %v3046
        %v3365 = vpop.f32.mrf.mxu0
        %v3366 = vadd.f32 0.0, %v3365
        %v3367 = vpop.f32.mrf.mxu0
        %v3368 = vpop.f32.mrf.mxu0
        %v3369 = vadd.f32 0.0, %v3368
        %v3370 = vpop.f32.mrf.mxu0
        %3371 = vmatprep.mubr.bf16.mxu0 0
        %3372 = vmatmul.mubr.bf16.gmra.mxu0 %v3049
        %v3373 = vpop.f32.mrf.mxu0
        %v3374 = vadd.f32 0.0, %v3373
        %v3375 = vpop.f32.mrf.mxu0
        %v3376 = vpop.f32.mrf.mxu0
        %v3377 = vadd.f32 0.0, %v3376
        %v3378 = vpop.f32.mrf.mxu0
        %3379 = vmatprep.mubr.bf16.mxu0 0
        %3380 = vmatmul.mubr.bf16.gmra.mxu0 %v3052
        %v3381 = vpop.f32.mrf.mxu0
        %v3382 = vadd.f32 0.0, %v3381
        %v3383 = vpop.f32.mrf.mxu0
        %v3384 = vpop.f32.mrf.mxu0
        %v3385 = vadd.f32 0.0, %v3384
        %v3386 = vpop.f32.mrf.mxu0
        %3387 = vmatprep.mubr.bf16.mxu0 0
        %3388 = vmatmul.mubr.bf16.gmra.mxu0 %v3055
        %v3389 = vpop.f32.mrf.mxu0
        %v3390 = vadd.f32 0.0, %v3389
        %v3391 = vpop.f32.mrf.mxu0
        %v3392 = vpop.f32.mrf.mxu0
        %v3393 = vadd.f32 0.0, %v3392
        %v3394 = vpop.f32.mrf.mxu0
        %3395 = vmatprep.mubr.bf16.mxu0 0
        %3396 = vmatmul.mubr.bf16.gmra.mxu0 %v3058
        %v3397 = vpop.f32.mrf.mxu0
        %v3398 = vadd.f32 0.0, %v3397
        %v3399 = vpop.f32.mrf.mxu0
        %v3400 = vpop.f32.mrf.mxu0
        %v3401 = vadd.f32 0.0, %v3400
        %v3402 = vpop.f32.mrf.mxu0
        %3403 = vmatprep.mubr.bf16.mxu0 0
        %3404 = vmatmul.mubr.bf16.gmra.mxu0 %v3061
        %v3405 = vpop.f32.mrf.mxu0
        %v3406 = vadd.f32 0.0, %v3405
        %v3407 = vpop.f32.mrf.mxu0
        %v3408 = vpop.f32.mrf.mxu0
        %v3409 = vadd.f32 0.0, %v3408
        %v3410 = vpop.f32.mrf.mxu0
        %3411 = vmatprep.mubr.bf16.mxu0 0
        %3412 = vmatmul.mubr.bf16.gmra.mxu0 %v3064
        %v3413 = vpop.f32.mrf.mxu0
        %v3414 = vadd.f32 0.0, %v3413
        %v3415 = vpop.f32.mrf.mxu0
        %v3416 = vpop.f32.mrf.mxu0
        %v3417 = vadd.f32 0.0, %v3416
        %v3418 = vpop.f32.mrf.mxu0
        %3419 = vmatprep.mubr.bf16.mxu0 0
        %3420 = vmatmul.mubr.bf16.gmra.mxu0 %v3067
        %v3421 = vpop.f32.mrf.mxu0
        %v3422 = vadd.f32 0.0, %v3421
        %v3423 = vpop.f32.mrf.mxu0
        %v3424 = vpop.f32.mrf.mxu0
        %v3425 = vadd.f32 0.0, %v3424
        %v3426 = vpop.f32.mrf.mxu0
        %3427 = vmatprep.mubr.bf16.mxu0 0
        %3428 = vmatmul.mubr.bf16.gmra.mxu0 %v3070
        %v3429 = vpop.f32.mrf.mxu0
        %v3430 = vadd.f32 0.0, %v3429
        %v3431 = vpop.f32.mrf.mxu0
        %v3432 = vpop.f32.mrf.mxu0
        %v3433 = vadd.f32 0.0, %v3432
        %v3434 = vpop.f32.mrf.mxu0
        %3435 = vmatprep.mubr.bf16.mxu0 0
        %3436 = vmatmul.mubr.bf16.gmra.mxu0 %v3073
        %v3437 = vpop.f32.mrf.mxu0
        %v3438 = vadd.f32 0.0, %v3437
        %v3439 = vpop.f32.mrf.mxu0
        %v3440 = vpop.f32.mrf.mxu0
        %v3441 = vadd.f32 0.0, %v3440
        %v3442 = vpop.f32.mrf.mxu0
        %3443 = vmatprep.mubr.bf16.mxu0 0
        %3444 = vmatmul.mubr.bf16.gmra.mxu0 %v3076
        %v3445 = vpop.f32.mrf.mxu0
        %v3446 = vadd.f32 0.0, %v3445
        %v3447 = vpop.f32.mrf.mxu0
        %v3448 = vpop.f32.mrf.mxu0
        %v3449 = vadd.f32 0.0, %v3448
        %v3450 = vpop.f32.mrf.mxu0
        %3451 = vmatprep.mubr.bf16.mxu0 0
        %3452 = vmatmul.mubr.bf16.gmra.mxu0 %v3079
        %v3453 = vpop.f32.mrf.mxu0
        %v3454 = vadd.f32 0.0, %v3453
        %v3455 = vpop.f32.mrf.mxu0
        %v3456 = vpop.f32.mrf.mxu0
        %v3457 = vadd.f32 0.0, %v3456
        %v3458 = vpop.f32.mrf.mxu0
        %3459 = vmatprep.mubr.bf16.mxu0 0
        %3460 = vmatmul.mubr.bf16.gmra.mxu0 %v3082
        %v3461 = vpop.f32.mrf.mxu0
        %v3462 = vadd.f32 0.0, %v3461
        %v3463 = vpop.f32.mrf.mxu0
        %v3464 = vpop.f32.mrf.mxu0
        %v3465 = vadd.f32 0.0, %v3464
        %v3466 = vpop.f32.mrf.mxu0
        %3467 = vmatprep.mubr.bf16.mxu0 0
        %3468 = vmatmul.mubr.bf16.gmra.mxu0 %v3085
        %v3469 = vpop.f32.mrf.mxu0
        %v3470 = vadd.f32 0.0, %v3469
        %v3471 = vpop.f32.mrf.mxu0
        %v3472 = vpop.f32.mrf.mxu0
        %v3473 = vadd.f32 0.0, %v3472
        %v3474 = vpop.f32.mrf.mxu0
        %3475 = vmatprep.mubr.bf16.mxu0 0
        %3476 = vmatmul.mubr.bf16.gmra.mxu0 %v3088
        %v3477 = vpop.f32.mrf.mxu0
        %v3478 = vadd.f32 0.0, %v3477
        %v3479 = vpop.f32.mrf.mxu0
        %v3480 = vpop.f32.mrf.mxu0
        %v3481 = vadd.f32 0.0, %v3480
        %v3482 = vpop.f32.mrf.mxu0
        %3483 = vmatprep.mubr.bf16.mxu0 0
        %3484 = vmatmul.mubr.bf16.gmra.mxu0 %v3091
        %v3485 = vpop.f32.mrf.mxu0
        %v3486 = vadd.f32 0.0, %v3485
        %v3487 = vpop.f32.mrf.mxu0
        %v3488 = vpop.f32.mrf.mxu0
        %v3489 = vadd.f32 0.0, %v3488
        %v3490 = vpop.f32.mrf.mxu0
        %3491 = vmatprep.mubr.bf16.mxu0 0
        %3492 = vmatmul.mubr.bf16.gmra.mxu0 %v3094
        %v3493 = vpop.f32.mrf.mxu0
        %v3494 = vadd.f32 0.0, %v3493
        %v3495 = vpop.f32.mrf.mxu0
        %v3496 = vpop.f32.mrf.mxu0
        %v3497 = vadd.f32 0.0, %v3496
        %v3498 = vpop.f32.mrf.mxu0
        %3499 = vmatprep.mubr.bf16.mxu0 0
        %3500 = vmatmul.mubr.bf16.gmra.mxu0 %v3097
        %v3501 = vpop.f32.mrf.mxu0
        %v3502 = vadd.f32 0.0, %v3501
        %v3503 = vpop.f32.mrf.mxu0
        %v3504 = vpop.f32.mrf.mxu0
        %v3505 = vadd.f32 0.0, %v3504
        %v3506 = vpop.f32.mrf.mxu0
        %3507 = vmatprep.mubr.bf16.mxu0 0
        %3508 = vmatmul.mubr.bf16.gmra.mxu0 %v3100
        %v3509 = vpop.f32.mrf.mxu0
        %v3510 = vadd.f32 0.0, %v3509
        %v3511 = vpop.f32.mrf.mxu0
        %v3512 = vpop.f32.mrf.mxu0
        %v3513 = vadd.f32 0.0, %v3512
        %v3514 = vpop.f32.mrf.mxu0
        %3515 = vmatprep.mubr.bf16.mxu0 0
        %3516 = vmatmul.mubr.bf16.gmra.mxu0 %v3103
        %v3517 = vpop.f32.mrf.mxu0
        %v3518 = vadd.f32 0.0, %v3517
        %v3519 = vpop.f32.mrf.mxu0
        %v3520 = vpop.f32.mrf.mxu0
        %v3521 = vadd.f32 0.0, %v3520
        %v3522 = vpop.f32.mrf.mxu0
        %3523 = vmatprep.mubr.bf16.mxu0 0
        %3524 = vmatmul.mubr.bf16.gmra.mxu0 %v3106
        %v3525 = vpop.f32.mrf.mxu0
        %v3526 = vadd.f32 0.0, %v3525
        %v3527 = vpop.f32.mrf.mxu0
        %v3528 = vpop.f32.mrf.mxu0
        %v3529 = vadd.f32 0.0, %v3528
        %v3530 = vpop.f32.mrf.mxu0
        %3531 = vmatprep.mubr.bf16.mxu0 0
        %3532 = vmatmul.mubr.bf16.gmra.mxu0 %v3109
        %v3533 = vpop.f32.mrf.mxu0
        %v3534 = vadd.f32 0.0, %v3533
        %v3535 = vpop.f32.mrf.mxu0
        %v3536 = vpop.f32.mrf.mxu0
        %v3537 = vadd.f32 0.0, %v3536
        %v3538 = vpop.f32.mrf.mxu0
        %3539 = vmatprep.mubr.bf16.mxu0 0
        %3540 = vmatmul.mubr.bf16.gmra.mxu0 %v3112
        %v3541 = vpop.f32.mrf.mxu0
        %v3542 = vadd.f32 0.0, %v3541
        %v3543 = vpop.f32.mrf.mxu0
        %v3544 = vpop.f32.mrf.mxu0
        %v3545 = vadd.f32 0.0, %v3544
        %v3546 = vpop.f32.mrf.mxu0
        %3547 = vmatprep.mubr.bf16.mxu0 0
        %3548 = vmatmul.mubr.bf16.gmra.mxu0 %v3115
        %v3549 = vpop.f32.mrf.mxu0
        %v3550 = vadd.f32 0.0, %v3549
        %v3551 = vpop.f32.mrf.mxu0
        %v3552 = vpop.f32.mrf.mxu0
        %v3553 = vadd.f32 0.0, %v3552
        %v3554 = vpop.f32.mrf.mxu0
        %3555 = vmatprep.mubr.bf16.mxu0 0
        %3556 = vmatmul.mubr.bf16.gmra.mxu0 %v3118
        %v3557 = vpop.f32.mrf.mxu0
        %v3558 = vadd.f32 0.0, %v3557
        %v3559 = vpop.f32.mrf.mxu0
        %v3560 = vpop.f32.mrf.mxu0
        %v3561 = vadd.f32 0.0, %v3560
        %v3562 = vpop.f32.mrf.mxu0
        %3563 = vmatprep.mubr.bf16.mxu0 0
        %3564 = vmatmul.mubr.bf16.gmra.mxu0 %v3121
        %v3565 = vpop.f32.mrf.mxu0
        %v3566 = vadd.f32 0.0, %v3565
        %v3567 = vpop.f32.mrf.mxu0
        %v3568 = vpop.f32.mrf.mxu0
        %v3569 = vadd.f32 0.0, %v3568
        %v3570 = vpop.f32.mrf.mxu0
        %3571 = vmatprep.mubr.bf16.mxu0 0
        %3572 = vmatmul.mubr.bf16.gmra.mxu0 %v3124
        %v3573 = vpop.f32.mrf.mxu0
        %v3574 = vadd.f32 0.0, %v3573
        %v3575 = vpop.f32.mrf.mxu0
        %v3576 = vpop.f32.mrf.mxu0
        %v3577 = vadd.f32 0.0, %v3576
        %v3578 = vpop.f32.mrf.mxu0
        %3579 = vmatprep.mubr.bf16.mxu0 0
        %3580 = vmatmul.mubr.bf16.gmra.mxu0 %v3127
        %v3581 = vpop.f32.mrf.mxu0
        %v3582 = vadd.f32 0.0, %v3581
        %v3583 = vpop.f32.mrf.mxu0
        %v3584 = vpop.f32.mrf.mxu0
        %v3585 = vadd.f32 0.0, %v3584
        %v3586 = vpop.f32.mrf.mxu0
        %3587 = vmatprep.mubr.bf16.mxu0 0
        %3588 = vmatmul.mubr.bf16.gmra.mxu0 %v3130
        %v3589 = vpop.f32.mrf.mxu0
        %v3590 = vadd.f32 0.0, %v3589
        %v3591 = vpop.f32.mrf.mxu0
        %v3592 = vpop.f32.mrf.mxu0
        %v3593 = vadd.f32 0.0, %v3592
        %v3594 = vpop.f32.mrf.mxu0
        %3595 = vmatprep.mubr.bf16.mxu0 0
        %3596 = vmatmul.mubr.bf16.gmra.mxu0 %v3133
        %v3597 = vpop.f32.mrf.mxu0
        %v3598 = vadd.f32 0.0, %v3597
        %v3599 = vpop.f32.mrf.mxu0
        %v3600 = vpop.f32.mrf.mxu0
        %v3601 = vadd.f32 0.0, %v3600
        %v3602 = vpop.f32.mrf.mxu0
        %3603 = vmatprep.mubr.bf16.mxu0 0
        %3604 = vmatmul.mubr.bf16.gmra.mxu0 %v3136
        %v3605 = vpop.f32.mrf.mxu0
        %v3606 = vadd.f32 0.0, %v3605
        %v3607 = vpop.f32.mrf.mxu0
        %v3608 = vpop.f32.mrf.mxu0
        %v3609 = vadd.f32 0.0, %v3608
        %v3610 = vpop.f32.mrf.mxu0
        %3611 = vmatprep.mubr.bf16.mxu0 0
        %3612 = vmatmul.mubr.bf16.gmra.mxu0 %v3139
        %v3613 = vpop.f32.mrf.mxu0
        %v3614 = vadd.f32 0.0, %v3613
        %v3615 = vpop.f32.mrf.mxu0
        %v3616 = vpop.f32.mrf.mxu0
        %v3617 = vadd.f32 0.0, %v3616
        %v3618 = vpop.f32.mrf.mxu0
        %3619 = vmatprep.mubr.bf16.mxu0 0
        %3620 = vmatmul.mubr.bf16.gmra.mxu0 %v3142
        %v3621 = vpop.f32.mrf.mxu0
        %v3622 = vadd.f32 0.0, %v3621
        %v3623 = vpop.f32.mrf.mxu0
        %v3624 = vpop.f32.mrf.mxu0
        %v3625 = vadd.f32 0.0, %v3624
        %v3626 = vpop.f32.mrf.mxu0
        %3627 = vmatprep.mubr.bf16.mxu0 0
        %3628 = vmatmul.mubr.bf16.gmra.mxu0 %v3145
        %v3629 = vpop.f32.mrf.mxu0
        %v3630 = vadd.f32 0.0, %v3629
        %v3631 = vpop.f32.mrf.mxu0
        %v3632 = vpop.f32.mrf.mxu0
        %v3633 = vadd.f32 0.0, %v3632
        %v3634 = vpop.f32.mrf.mxu0
        %3635 = vmatprep.mubr.bf16.mxu0 0
        %3636 = vmatmul.mubr.bf16.gmra.mxu0 %v3148
        %v3637 = vpop.f32.mrf.mxu0
        %v3638 = vadd.f32 0.0, %v3637
        %v3639 = vpop.f32.mrf.mxu0
        %v3640 = vpop.f32.mrf.mxu0
        %v3641 = vadd.f32 0.0, %v3640
        %v3642 = vpop.f32.mrf.mxu0
        %3643 = vmatprep.mubr.bf16.mxu0 0
        %3644 = vmatmul.mubr.bf16.gmra.mxu0 %v3151
        %v3645 = vpop.f32.mrf.mxu0
        %v3646 = vadd.f32 0.0, %v3645
        %v3647 = vpop.f32.mrf.mxu0
        %v3648 = vpop.f32.mrf.mxu0
        %v3649 = vadd.f32 0.0, %v3648
        %v3650 = vpop.f32.mrf.mxu0
        %3651 = vmatprep.mubr.bf16.mxu0 0
        %3652 = vmatmul.mubr.bf16.gmra.mxu0 %v3154
        %v3653 = vpop.f32.mrf.mxu0
        %v3654 = vadd.f32 0.0, %v3653
        %v3655 = vpop.f32.mrf.mxu0
        %v3656 = vpop.f32.mrf.mxu0
        %v3657 = vadd.f32 0.0, %v3656
        %v3658 = vpop.f32.mrf.mxu0
        %3659 = vmatprep.mubr.bf16.mxu0 0
        %3660 = vmatmul.mubr.bf16.gmra.mxu0 %v3157
        %v3661 = vpop.f32.mrf.mxu0
        %v3662 = vadd.f32 0.0, %v3661
        %v3663 = vpop.f32.mrf.mxu0
        %v3664 = vpop.f32.mrf.mxu0
        %v3665 = vadd.f32 0.0, %v3664
        %v3666 = vpop.f32.mrf.mxu0
        %3667 = vmatprep.mubr.bf16.mxu0 0
        %3668 = vmatmul.mubr.bf16.gmra.mxu0 %v3160
        %v3669 = vpop.f32.mrf.mxu0
        %v3670 = vadd.f32 0.0, %v3669
        %v3671 = vpop.f32.mrf.mxu0
        %v3672 = vpop.f32.mrf.mxu0
        %v3673 = vadd.f32 0.0, %v3672
        %v3674 = vpop.f32.mrf.mxu0
        %3675 = vmatprep.mubr.bf16.mxu0 0
        %3676 = vmatmul.mubr.bf16.gmra.mxu0 %v3163
        %v3677 = vpop.f32.mrf.mxu0
        %v3678 = vadd.f32 0.0, %v3677
        %v3679 = vpop.f32.mrf.mxu0
        %v3680 = vpop.f32.mrf.mxu0
        %v3681 = vadd.f32 0.0, %v3680
        %v3682 = vpop.f32.mrf.mxu0
        %3683 = vmatprep.mubr.bf16.mxu0 0
        %3684 = vmatmul.mubr.bf16.gmra.mxu0 %v3166
        %v3685 = vpop.f32.mrf.mxu0
        %v3686 = vadd.f32 0.0, %v3685
        %v3687 = vpop.f32.mrf.mxu0
        %v3688 = vpop.f32.mrf.mxu0
        %v3689 = vadd.f32 0.0, %v3688
        %v3690 = vpop.f32.mrf.mxu0
        %3691 = vmatprep.mubr.bf16.mxu0 0
        %3692 = vmatmul.mubr.bf16.gmra.mxu0 %v3169
        %v3693 = vpop.f32.mrf.mxu0
        %v3694 = vadd.f32 0.0, %v3693
        %v3695 = vpop.f32.mrf.mxu0
        %v3696 = vpop.f32.mrf.mxu0
        %v3697 = vadd.f32 0.0, %v3696
        %v3698 = vpop.f32.mrf.mxu0
        %3699 = vmatprep.mubr.bf16.mxu0 0
        %3700 = vmatmul.mubr.bf16.gmra.mxu0 %v3172
        %v3701 = vpop.f32.mrf.mxu0
        %v3702 = vadd.f32 0.0, %v3701
        %v3703 = vpop.f32.mrf.mxu0
        %v3704 = vpop.f32.mrf.mxu0
        %v3705 = vadd.f32 0.0, %v3704
        %v3706 = vpop.f32.mrf.mxu0
        %3707 = vmatprep.mubr.bf16.mxu0 0
        %3708 = vmatmul.mubr.bf16.gmra.mxu0 %v3175
        %v3709 = vpop.f32.mrf.mxu0
        %v3710 = vadd.f32 0.0, %v3709
        %v3711 = vpop.f32.mrf.mxu0
        %v3712 = vpop.f32.mrf.mxu0
        %v3713 = vadd.f32 0.0, %v3712
        %v3714 = vpop.f32.mrf.mxu0
        %3715 = vmatprep.mubr.bf16.mxu0 0
        %3716 = vmatmul.mubr.bf16.gmra.mxu0 %v3178
        %v3717 = vpop.f32.mrf.mxu0
        %v3718 = vadd.f32 0.0, %v3717
        %v3719 = vpop.f32.mrf.mxu0
        %v3720 = vpop.f32.mrf.mxu0
        %v3721 = vadd.f32 0.0, %v3720
        %v3722 = vpop.f32.mrf.mxu0
        %3723 = vmatprep.mubr.bf16.mxu0 0
        %3724 = vmatmul.mubr.bf16.gmra.mxu0 %v3181
        %v3725 = vpop.f32.mrf.mxu0
        %v3726 = vadd.f32 0.0, %v3725
        %v3727 = vpop.f32.mrf.mxu0
        %v3728 = vpop.f32.mrf.mxu0
        %v3729 = vadd.f32 0.0, %v3728
        %v3730 = vpop.f32.mrf.mxu0
        %3731 = vdwg.mxu0
        %v3860 = vunpack.c.l.b16 %v1057
        %v3861 = vunpack.c.l.b16 %v1058
        %v3862 = vunpack.c.l.b16 %v1060
        %v3863 = vunpack.c.l.b16 %v1061
        %v3864 = vunpack.c.l.b16 %v1063
        %v3865 = vunpack.c.l.b16 %v1064
        %v3866 = vunpack.c.l.b16 %v1066
        %v3867 = vunpack.c.l.b16 %v1067
        %v3868 = vunpack.c.l.b16 %v1069
        %v3869 = vunpack.c.l.b16 %v1070
        %v3870 = vunpack.c.l.b16 %v1072
        %v3871 = vunpack.c.l.b16 %v1073
        %v3872 = vunpack.c.l.b16 %v1075
        %v3873 = vunpack.c.l.b16 %v1076
        %v3874 = vunpack.c.l.b16 %v1078
        %v3875 = vunpack.c.l.b16 %v1079
        %v3876 = vunpack.c.l.b16 %v1081
        %v3877 = vunpack.c.l.b16 %v1082
        %v3878 = vunpack.c.l.b16 %v1084
        %v3879 = vunpack.c.l.b16 %v1085
        %v3880 = vunpack.c.l.b16 %v1087
        %v3881 = vunpack.c.l.b16 %v1088
        %v3882 = vunpack.c.l.b16 %v1090
        %v3883 = vunpack.c.l.b16 %v1091
        %v3884 = vunpack.c.l.b16 %v1093
        %v3885 = vunpack.c.l.b16 %v1094
        %v3886 = vunpack.c.l.b16 %v1096
        %v3887 = vunpack.c.l.b16 %v1097
        %v3888 = vunpack.c.l.b16 %v1099
        %v3889 = vunpack.c.l.b16 %v1100
        %v3890 = vunpack.c.l.b16 %v1102
        %v3891 = vunpack.c.l.b16 %v1103
        %v3892 = vunpack.c.l.b16 %v1105
        %v3893 = vunpack.c.l.b16 %v1106
        %v3894 = vunpack.c.l.b16 %v1108
        %v3895 = vunpack.c.l.b16 %v1109
        %v3896 = vunpack.c.l.b16 %v1111
        %v3897 = vunpack.c.l.b16 %v1112
        %v3898 = vunpack.c.l.b16 %v1114
        %v3899 = vunpack.c.l.b16 %v1115
        %v3900 = vunpack.c.l.b16 %v1117
        %v3901 = vunpack.c.l.b16 %v1118
        %v3902 = vunpack.c.l.b16 %v1120
        %v3903 = vunpack.c.l.b16 %v1121
        %v3904 = vunpack.c.l.b16 %v1123
        %v3905 = vunpack.c.l.b16 %v1124
        %v3906 = vunpack.c.l.b16 %v1126
        %v3907 = vunpack.c.l.b16 %v1127
        %v3908 = vunpack.c.l.b16 %v1129
        %v3909 = vunpack.c.l.b16 %v1130
        %v3910 = vunpack.c.l.b16 %v1132
        %v3911 = vunpack.c.l.b16 %v1133
        %v3912 = vunpack.c.l.b16 %v1135
        %v3913 = vunpack.c.l.b16 %v1136
        %v3914 = vunpack.c.l.b16 %v1138
        %v3915 = vunpack.c.l.b16 %v1139
        %v3916 = vunpack.c.l.b16 %v1141
        %v3917 = vunpack.c.l.b16 %v1142
        %v3918 = vunpack.c.l.b16 %v1144
        %v3919 = vunpack.c.l.b16 %v1145
        %v3920 = vunpack.c.l.b16 %v1147
        %v3921 = vunpack.c.l.b16 %v1148
        %v3922 = vunpack.c.l.b16 %v1150
        %v3923 = vunpack.c.l.b16 %v1151
        %v3924 = vunpack.c.l.b16 %v1153
        %v3925 = vunpack.c.l.b16 %v1154
        %v3926 = vunpack.c.l.b16 %v1156
        %v3927 = vunpack.c.l.b16 %v1157
        %v3928 = vunpack.c.l.b16 %v1159
        %v3929 = vunpack.c.l.b16 %v1160
        %v3930 = vunpack.c.l.b16 %v1162
        %v3931 = vunpack.c.l.b16 %v1163
        %v3932 = vunpack.c.l.b16 %v1165
        %v3933 = vunpack.c.l.b16 %v1166
        %v3934 = vunpack.c.l.b16 %v1168
        %v3935 = vunpack.c.l.b16 %v1169
        %v3936 = vunpack.c.l.b16 %v1171
        %v3937 = vunpack.c.l.b16 %v1172
        %v3938 = vunpack.c.l.b16 %v1174
        %v3939 = vunpack.c.l.b16 %v1175
        %v3940 = vunpack.c.l.b16 %v1177
        %v3941 = vunpack.c.l.b16 %v1178
        %v3942 = vunpack.c.l.b16 %v1180
        %v3943 = vunpack.c.l.b16 %v1181
        %v3944 = vunpack.c.l.b16 %v1183
        %v3945 = vunpack.c.l.b16 %v1184
        %v3946 = vunpack.c.l.b16 %v1186
        %v3947 = vunpack.c.l.b16 %v1187
        %v3948 = vunpack.c.l.b16 %v1189
        %v3949 = vunpack.c.l.b16 %v1190
        %v3950 = vunpack.c.l.b16 %v1192
        %v3951 = vunpack.c.l.b16 %v1193
        %v3952 = vunpack.c.l.b16 %v1195
        %v3953 = vunpack.c.l.b16 %v1196
        %v3954 = vunpack.c.l.b16 %v1198
        %v3955 = vunpack.c.l.b16 %v1199
        %v3956 = vunpack.c.l.b16 %v1201
        %v3957 = vunpack.c.l.b16 %v1202
        %v3958 = vunpack.c.l.b16 %v1204
        %v3959 = vunpack.c.l.b16 %v1205
        %v3960 = vunpack.c.l.b16 %v1207
        %v3961 = vunpack.c.l.b16 %v1208
        %v3962 = vunpack.c.l.b16 %v1210
        %v3963 = vunpack.c.l.b16 %v1211
        %v3964 = vunpack.c.l.b16 %v1213
        %v3965 = vunpack.c.l.b16 %v1214
        %v3966 = vunpack.c.l.b16 %v1216
        %v3967 = vunpack.c.l.b16 %v1217
        %v3968 = vunpack.c.l.b16 %v1219
        %v3969 = vunpack.c.l.b16 %v1220
        %v3970 = vunpack.c.l.b16 %v1222
        %v3971 = vunpack.c.l.b16 %v1223
        %v3972 = vunpack.c.l.b16 %v1225
        %v3973 = vunpack.c.l.b16 %v1226
        %v3974 = vunpack.c.l.b16 %v1228
        %v3975 = vunpack.c.l.b16 %v1229
        %v3976 = vunpack.c.l.b16 %v1231
        %v3977 = vunpack.c.l.b16 %v1232
        %v3978 = vunpack.c.l.b16 %v1234
        %v3979 = vunpack.c.l.b16 %v1235
        %v3980 = vunpack.c.l.b16 %v1237
        %v3981 = vunpack.c.l.b16 %v1238
        %v3982 = vunpack.c.l.b16 %v1240
        %v3983 = vunpack.c.l.b16 %v1241
        %v3984 = vunpack.c.l.b16 %v1243
        %v3985 = vunpack.c.l.b16 %v1244
        %v3986 = vunpack.c.l.b16 %v1246
        %v3987 = vunpack.c.l.b16 %v1247
        %v3988 = vpack.c.b16 %v3861, %v3860
        %v3989 = vpack.c.b16 %v3863, %v3862
        %v3990 = vpack.c.b16 %v3865, %v3864
        %v3991 = vpack.c.b16 %v3867, %v3866
        %v3992 = vpack.c.b16 %v3869, %v3868
        %v3993 = vpack.c.b16 %v3871, %v3870
        %v3994 = vpack.c.b16 %v3873, %v3872
        %v3995 = vpack.c.b16 %v3875, %v3874
        %v3996 = vpack.c.b16 %v3877, %v3876
        %v3997 = vpack.c.b16 %v3879, %v3878
        %v3998 = vpack.c.b16 %v3881, %v3880
        %v3999 = vpack.c.b16 %v3883, %v3882
        %v4000 = vpack.c.b16 %v3885, %v3884
        %v4001 = vpack.c.b16 %v3887, %v3886
        %v4002 = vpack.c.b16 %v3889, %v3888
        %v4003 = vpack.c.b16 %v3891, %v3890
        %v4004 = vpack.c.b16 %v3893, %v3892
        %v4005 = vpack.c.b16 %v3895, %v3894
        %v4006 = vpack.c.b16 %v3897, %v3896
        %v4007 = vpack.c.b16 %v3899, %v3898
        %v4008 = vpack.c.b16 %v3901, %v3900
        %v4009 = vpack.c.b16 %v3903, %v3902
        %v4010 = vpack.c.b16 %v3905, %v3904
        %v4011 = vpack.c.b16 %v3907, %v3906
        %v4012 = vpack.c.b16 %v3909, %v3908
        %v4013 = vpack.c.b16 %v3911, %v3910
        %v4014 = vpack.c.b16 %v3913, %v3912
        %v4015 = vpack.c.b16 %v3915, %v3914
        %v4016 = vpack.c.b16 %v3917, %v3916
        %v4017 = vpack.c.b16 %v3919, %v3918
        %v4018 = vpack.c.b16 %v3921, %v3920
        %v4019 = vpack.c.b16 %v3923, %v3922
        %v4020 = vpack.c.b16 %v3925, %v3924
        %v4021 = vpack.c.b16 %v3927, %v3926
        %v4022 = vpack.c.b16 %v3929, %v3928
        %v4023 = vpack.c.b16 %v3931, %v3930
        %v4024 = vpack.c.b16 %v3933, %v3932
        %v4025 = vpack.c.b16 %v3935, %v3934
        %v4026 = vpack.c.b16 %v3937, %v3936
        %v4027 = vpack.c.b16 %v3939, %v3938
        %v4028 = vpack.c.b16 %v3941, %v3940
        %v4029 = vpack.c.b16 %v3943, %v3942
        %v4030 = vpack.c.b16 %v3945, %v3944
        %v4031 = vpack.c.b16 %v3947, %v3946
        %v4032 = vpack.c.b16 %v3949, %v3948
        %v4033 = vpack.c.b16 %v3951, %v3950
        %v4034 = vpack.c.b16 %v3953, %v3952
        %v4035 = vpack.c.b16 %v3955, %v3954
        %v4036 = vpack.c.b16 %v3957, %v3956
        %v4037 = vpack.c.b16 %v3959, %v3958
        %v4038 = vpack.c.b16 %v3961, %v3960
        %v4039 = vpack.c.b16 %v3963, %v3962
        %v4040 = vpack.c.b16 %v3965, %v3964
        %v4041 = vpack.c.b16 %v3967, %v3966
        %v4042 = vpack.c.b16 %v3969, %v3968
        %v4043 = vpack.c.b16 %v3971, %v3970
        %v4044 = vpack.c.b16 %v3973, %v3972
        %v4045 = vpack.c.b16 %v3975, %v3974
        %v4046 = vpack.c.b16 %v3977, %v3976
        %v4047 = vpack.c.b16 %v3979, %v3978
        %v4048 = vpack.c.b16 %v3981, %v3980
        %v4049 = vpack.c.b16 %v3983, %v3982
        %v4050 = vpack.c.b16 %v3985, %v3984
        %v4051 = vpack.c.b16 %v3987, %v3986
        %v4054 = vunpack.c.l.b16 %v1249
        %v4055 = vunpack.c.l.b16 %v1250
        %v4056 = vpack.c.b16 %v4055, %v4054
        %v4058 = vsel %vm2990, %v3988, 0
        %v4061 = vsel %vm2990, %v3989, 0
        %v4064 = vsel %vm2990, %v3990, 0
        %v4067 = vsel %vm2990, %v3991, 0
        %v4070 = vsel %vm2990, %v3992, 0
        %v4073 = vsel %vm2990, %v3993, 0
        %v4076 = vsel %vm2990, %v3994, 0
        %v4079 = vsel %vm2990, %v3995, 0
        %v4082 = vsel %vm2990, %v3996, 0
        %v4085 = vsel %vm2990, %v3997, 0
        %v4088 = vsel %vm2990, %v3998, 0
        %v4091 = vsel %vm2990, %v3999, 0
        %v4094 = vsel %vm2990, %v4000, 0
        %v4097 = vsel %vm2990, %v4001, 0
        %v4100 = vsel %vm2990, %v4002, 0
        %v4103 = vsel %vm2990, %v4003, 0
        %v4106 = vsel %vm2990, %v4004, 0
        %v4109 = vsel %vm2990, %v4005, 0
        %v4112 = vsel %vm2990, %v4006, 0
        %v4115 = vsel %vm2990, %v4007, 0
        %v4118 = vsel %vm2990, %v4008, 0
        %v4121 = vsel %vm2990, %v4009, 0
        %v4124 = vsel %vm2990, %v4010, 0
        %v4127 = vsel %vm2990, %v4011, 0
        %v4130 = vsel %vm2990, %v4012, 0
        %v4133 = vsel %vm2990, %v4013, 0
        %v4136 = vsel %vm2990, %v4014, 0
        %v4139 = vsel %vm2990, %v4015, 0
        %v4142 = vsel %vm2990, %v4016, 0
        %v4145 = vsel %vm2990, %v4017, 0
        %v4148 = vsel %vm2990, %v4018, 0
        %v4151 = vsel %vm2990, %v4019, 0
        %v4154 = vsel %vm2990, %v4020, 0
        %v4157 = vsel %vm2990, %v4021, 0
        %v4160 = vsel %vm2990, %v4022, 0
        %v4163 = vsel %vm2990, %v4023, 0
        %v4166 = vsel %vm2990, %v4024, 0
        %v4169 = vsel %vm2990, %v4025, 0
        %v4172 = vsel %vm2990, %v4026, 0
        %v4175 = vsel %vm2990, %v4027, 0
        %v4178 = vsel %vm2990, %v4028, 0
        %v4181 = vsel %vm2990, %v4029, 0
        %v4184 = vsel %vm2990, %v4030, 0
        %v4187 = vsel %vm2990, %v4031, 0
        %v4190 = vsel %vm2990, %v4032, 0
        %v4193 = vsel %vm2990, %v4033, 0
        %v4196 = vsel %vm2990, %v4034, 0
        %v4199 = vsel %vm2990, %v4035, 0
        %v4202 = vsel %vm2990, %v4036, 0
        %v4205 = vsel %vm2990, %v4037, 0
        %v4208 = vsel %vm2990, %v4038, 0
        %v4211 = vsel %vm2990, %v4039, 0
        %v4214 = vsel %vm2990, %v4040, 0
        %v4217 = vsel %vm2990, %v4041, 0
        %v4220 = vsel %vm2990, %v4042, 0
        %v4223 = vsel %vm2990, %v4043, 0
        %v4226 = vsel %vm2990, %v4044, 0
        %v4229 = vsel %vm2990, %v4045, 0
        %v4232 = vsel %vm2990, %v4046, 0
        %v4235 = vsel %vm2990, %v4047, 0
        %v4238 = vsel %vm2990, %v4048, 0
        %v4241 = vsel %vm2990, %v4049, 0
        %v4244 = vsel %vm2990, %v4050, 0
        %v4247 = vsel %vm2990, %v4051, 0
        %v4250 = vsel %vm3183, %v4056, 0
        %4252 = vmatprep.subr.bf16.mxu0 0
        %4253 = vmatpush1.bf16.msra.mxu0 0
        %4254 = vmatprep.subr.bf16.mxu0 0
        %4255 = vmatpush1.bf16.msra.mxu0 0
        %4256 = vmatprep.subr.bf16.mxu0 0
        %4257 = vmatpush1.bf16.msra.mxu0 0
        %4258 = vmatprep.subr.bf16.mxu0 0
        %4259 = vmatpush1.bf16.msra.mxu0 0
        %4260 = vmatprep.subr.bf16.mxu0 0
        %4261 = vmatpush1.bf16.msra.mxu0 0
        %4262 = vmatprep.subr.bf16.mxu0 0
        %4263 = vmatpush1.bf16.msra.mxu0 0
        %4264 = vmatprep.subr.bf16.mxu0 0
        %4265 = vmatpush1.bf16.msra.mxu0 0
        %4266 = vmatprep.subr.bf16.mxu0 0
        %4267 = vmatpush1.bf16.msra.mxu0 %v4250
        %4268 = vmatprep.subr.bf16.mxu0 0
        %4269 = vmatpush2.bf16.msra.mxu0 0
        %4270 = vmatprep.subr.bf16.mxu0 0
        %4271 = vmatpush2.bf16.msra.mxu0 0
        %4272 = vmatprep.subr.bf16.mxu0 0
        %4273 = vmatpush2.bf16.msra.mxu0 0
        %4274 = vmatprep.subr.bf16.mxu0 0
        %4275 = vmatpush2.bf16.msra.mxu0 0
        %4276 = vmatprep.subr.bf16.mxu0 0
        %4277 = vmatpush2.bf16.msra.mxu0 0
        %4278 = vmatprep.subr.bf16.mxu0 0
        %4279 = vmatpush2.bf16.msra.mxu0 0
        %4280 = vmatprep.subr.bf16.mxu0 0
        %4281 = vmatpush2.bf16.msra.mxu0 0
        %4282 = vmatprep.subr.bf16.mxu0 0
        %4283 = vmatpush2.bf16.msra.mxu0 0
        %4284 = vmatprep.mubr.bf16.mxu0 0
        %4285 = vmatmul.mubr.bf16.gmra.mxu0 %v4058
        %v4286 = vpop.f32.mrf.mxu0
        %v4287 = vadd.f32 %v3222, %v4286
        %v4288 = vpop.f32.mrf.mxu0
        %v4289 = vpop.f32.mrf.mxu0
        %v4290 = vadd.f32 %v3225, %v4289
        %v4291 = vpop.f32.mrf.mxu0
        %4292 = vmatprep.mubr.bf16.mxu0 0
        %4293 = vmatmul.mubr.bf16.gmra.mxu0 %v4061
        %v4294 = vpop.f32.mrf.mxu0
        %v4295 = vadd.f32 %v3230, %v4294
        %v4296 = vpop.f32.mrf.mxu0
        %v4297 = vpop.f32.mrf.mxu0
        %v4298 = vadd.f32 %v3233, %v4297
        %v4299 = vpop.f32.mrf.mxu0
        %4300 = vmatprep.mubr.bf16.mxu0 0
        %4301 = vmatmul.mubr.bf16.gmra.mxu0 %v4064
        %v4302 = vpop.f32.mrf.mxu0
        %v4303 = vadd.f32 %v3238, %v4302
        %v4304 = vpop.f32.mrf.mxu0
        %v4305 = vpop.f32.mrf.mxu0
        %v4306 = vadd.f32 %v3241, %v4305
        %v4307 = vpop.f32.mrf.mxu0
        %4308 = vmatprep.mubr.bf16.mxu0 0
        %4309 = vmatmul.mubr.bf16.gmra.mxu0 %v4067
        %v4310 = vpop.f32.mrf.mxu0
        %v4311 = vadd.f32 %v3246, %v4310
        %v4312 = vpop.f32.mrf.mxu0
        %v4313 = vpop.f32.mrf.mxu0
        %v4314 = vadd.f32 %v3249, %v4313
        %v4315 = vpop.f32.mrf.mxu0
        %4316 = vmatprep.mubr.bf16.mxu0 0
        %4317 = vmatmul.mubr.bf16.gmra.mxu0 %v4070
        %v4318 = vpop.f32.mrf.mxu0
        %v4319 = vadd.f32 %v3254, %v4318
        %v4320 = vpop.f32.mrf.mxu0
        %v4321 = vpop.f32.mrf.mxu0
        %v4322 = vadd.f32 %v3257, %v4321
        %v4323 = vpop.f32.mrf.mxu0
        %4324 = vmatprep.mubr.bf16.mxu0 0
        %4325 = vmatmul.mubr.bf16.gmra.mxu0 %v4073
        %v4326 = vpop.f32.mrf.mxu0
        %v4327 = vadd.f32 %v3262, %v4326
        %v4328 = vpop.f32.mrf.mxu0
        %v4329 = vpop.f32.mrf.mxu0
        %v4330 = vadd.f32 %v3265, %v4329
        %v4331 = vpop.f32.mrf.mxu0
        %4332 = vmatprep.mubr.bf16.mxu0 0
        %4333 = vmatmul.mubr.bf16.gmra.mxu0 %v4076
        %v4334 = vpop.f32.mrf.mxu0
        %v4335 = vadd.f32 %v3270, %v4334
        %v4336 = vpop.f32.mrf.mxu0
        %v4337 = vpop.f32.mrf.mxu0
        %v4338 = vadd.f32 %v3273, %v4337
        %v4339 = vpop.f32.mrf.mxu0
        %4340 = vmatprep.mubr.bf16.mxu0 0
        %4341 = vmatmul.mubr.bf16.gmra.mxu0 %v4079
        %v4342 = vpop.f32.mrf.mxu0
        %v4343 = vadd.f32 %v3278, %v4342
        %v4344 = vpop.f32.mrf.mxu0
        %v4345 = vpop.f32.mrf.mxu0
        %v4346 = vadd.f32 %v3281, %v4345
        %v4347 = vpop.f32.mrf.mxu0
        %4348 = vmatprep.mubr.bf16.mxu0 0
        %4349 = vmatmul.mubr.bf16.gmra.mxu0 %v4082
        %v4350 = vpop.f32.mrf.mxu0
        %v4351 = vadd.f32 %v3286, %v4350
        %v4352 = vpop.f32.mrf.mxu0
        %v4353 = vpop.f32.mrf.mxu0
        %v4354 = vadd.f32 %v3289, %v4353
        %v4355 = vpop.f32.mrf.mxu0
        %4356 = vmatprep.mubr.bf16.mxu0 0
        %4357 = vmatmul.mubr.bf16.gmra.mxu0 %v4085
        %v4358 = vpop.f32.mrf.mxu0
        %v4359 = vadd.f32 %v3294, %v4358
        %v4360 = vpop.f32.mrf.mxu0
        %v4361 = vpop.f32.mrf.mxu0
        %v4362 = vadd.f32 %v3297, %v4361
        %v4363 = vpop.f32.mrf.mxu0
        %4364 = vmatprep.mubr.bf16.mxu0 0
        %4365 = vmatmul.mubr.bf16.gmra.mxu0 %v4088
        %v4366 = vpop.f32.mrf.mxu0
        %v4367 = vadd.f32 %v3302, %v4366
        %v4368 = vpop.f32.mrf.mxu0
        %v4369 = vpop.f32.mrf.mxu0
        %v4370 = vadd.f32 %v3305, %v4369
        %v4371 = vpop.f32.mrf.mxu0
        %4372 = vmatprep.mubr.bf16.mxu0 0
        %4373 = vmatmul.mubr.bf16.gmra.mxu0 %v4091
        %v4374 = vpop.f32.mrf.mxu0
        %v4375 = vadd.f32 %v3310, %v4374
        %v4376 = vpop.f32.mrf.mxu0
        %v4377 = vpop.f32.mrf.mxu0
        %v4378 = vadd.f32 %v3313, %v4377
        %v4379 = vpop.f32.mrf.mxu0
        %4380 = vmatprep.mubr.bf16.mxu0 0
        %4381 = vmatmul.mubr.bf16.gmra.mxu0 %v4094
        %v4382 = vpop.f32.mrf.mxu0
        %v4383 = vadd.f32 %v3318, %v4382
        %v4384 = vpop.f32.mrf.mxu0
        %v4385 = vpop.f32.mrf.mxu0
        %v4386 = vadd.f32 %v3321, %v4385
        %v4387 = vpop.f32.mrf.mxu0
        %4388 = vmatprep.mubr.bf16.mxu0 0
        %4389 = vmatmul.mubr.bf16.gmra.mxu0 %v4097
        %v4390 = vpop.f32.mrf.mxu0
        %v4391 = vadd.f32 %v3326, %v4390
        %v4392 = vpop.f32.mrf.mxu0
        %v4393 = vpop.f32.mrf.mxu0
        %v4394 = vadd.f32 %v3329, %v4393
        %v4395 = vpop.f32.mrf.mxu0
        %4396 = vmatprep.mubr.bf16.mxu0 0
        %4397 = vmatmul.mubr.bf16.gmra.mxu0 %v4100
        %v4398 = vpop.f32.mrf.mxu0
        %v4399 = vadd.f32 %v3334, %v4398
        %v4400 = vpop.f32.mrf.mxu0
        %v4401 = vpop.f32.mrf.mxu0
        %v4402 = vadd.f32 %v3337, %v4401
        %v4403 = vpop.f32.mrf.mxu0
        %4404 = vmatprep.mubr.bf16.mxu0 0
        %4405 = vmatmul.mubr.bf16.gmra.mxu0 %v4103
        %v4406 = vpop.f32.mrf.mxu0
        %v4407 = vadd.f32 %v3342, %v4406
        %v4408 = vpop.f32.mrf.mxu0
        %v4409 = vpop.f32.mrf.mxu0
        %v4410 = vadd.f32 %v3345, %v4409
        %v4411 = vpop.f32.mrf.mxu0
        %4412 = vmatprep.mubr.bf16.mxu0 0
        %4413 = vmatmul.mubr.bf16.gmra.mxu0 %v4106
        %v4414 = vpop.f32.mrf.mxu0
        %v4415 = vadd.f32 %v3350, %v4414
        %v4416 = vpop.f32.mrf.mxu0
        %v4417 = vpop.f32.mrf.mxu0
        %v4418 = vadd.f32 %v3353, %v4417
        %v4419 = vpop.f32.mrf.mxu0
        %4420 = vmatprep.mubr.bf16.mxu0 0
        %4421 = vmatmul.mubr.bf16.gmra.mxu0 %v4109
        %v4422 = vpop.f32.mrf.mxu0
        %v4423 = vadd.f32 %v3358, %v4422
        %v4424 = vpop.f32.mrf.mxu0
        %v4425 = vpop.f32.mrf.mxu0
        %v4426 = vadd.f32 %v3361, %v4425
        %v4427 = vpop.f32.mrf.mxu0
        %4428 = vmatprep.mubr.bf16.mxu0 0
        %4429 = vmatmul.mubr.bf16.gmra.mxu0 %v4112
        %v4430 = vpop.f32.mrf.mxu0
        %v4431 = vadd.f32 %v3366, %v4430
        %v4432 = vpop.f32.mrf.mxu0
        %v4433 = vpop.f32.mrf.mxu0
        %v4434 = vadd.f32 %v3369, %v4433
        %v4435 = vpop.f32.mrf.mxu0
        %4436 = vmatprep.mubr.bf16.mxu0 0
        %4437 = vmatmul.mubr.bf16.gmra.mxu0 %v4115
        %v4438 = vpop.f32.mrf.mxu0
        %v4439 = vadd.f32 %v3374, %v4438
        %v4440 = vpop.f32.mrf.mxu0
        %v4441 = vpop.f32.mrf.mxu0
        %v4442 = vadd.f32 %v3377, %v4441
        %v4443 = vpop.f32.mrf.mxu0
        %4444 = vmatprep.mubr.bf16.mxu0 0
        %4445 = vmatmul.mubr.bf16.gmra.mxu0 %v4118
        %v4446 = vpop.f32.mrf.mxu0
        %v4447 = vadd.f32 %v3382, %v4446
        %v4448 = vpop.f32.mrf.mxu0
        %v4449 = vpop.f32.mrf.mxu0
        %v4450 = vadd.f32 %v3385, %v4449
        %v4451 = vpop.f32.mrf.mxu0
        %4452 = vmatprep.mubr.bf16.mxu0 0
        %4453 = vmatmul.mubr.bf16.gmra.mxu0 %v4121
        %v4454 = vpop.f32.mrf.mxu0
        %v4455 = vadd.f32 %v3390, %v4454
        %v4456 = vpop.f32.mrf.mxu0
        %v4457 = vpop.f32.mrf.mxu0
        %v4458 = vadd.f32 %v3393, %v4457
        %v4459 = vpop.f32.mrf.mxu0
        %4460 = vmatprep.mubr.bf16.mxu0 0
        %4461 = vmatmul.mubr.bf16.gmra.mxu0 %v4124
        %v4462 = vpop.f32.mrf.mxu0
        %v4463 = vadd.f32 %v3398, %v4462
        %v4464 = vpop.f32.mrf.mxu0
        %v4465 = vpop.f32.mrf.mxu0
        %v4466 = vadd.f32 %v3401, %v4465
        %v4467 = vpop.f32.mrf.mxu0
        %4468 = vmatprep.mubr.bf16.mxu0 0
        %4469 = vmatmul.mubr.bf16.gmra.mxu0 %v4127
        %v4470 = vpop.f32.mrf.mxu0
        %v4471 = vadd.f32 %v3406, %v4470
        %v4472 = vpop.f32.mrf.mxu0
        %v4473 = vpop.f32.mrf.mxu0
        %v4474 = vadd.f32 %v3409, %v4473
        %v4475 = vpop.f32.mrf.mxu0
        %4476 = vmatprep.mubr.bf16.mxu0 0
        %4477 = vmatmul.mubr.bf16.gmra.mxu0 %v4130
        %v4478 = vpop.f32.mrf.mxu0
        %v4479 = vadd.f32 %v3414, %v4478
        %v4480 = vpop.f32.mrf.mxu0
        %v4481 = vpop.f32.mrf.mxu0
        %v4482 = vadd.f32 %v3417, %v4481
        %v4483 = vpop.f32.mrf.mxu0
        %4484 = vmatprep.mubr.bf16.mxu0 0
        %4485 = vmatmul.mubr.bf16.gmra.mxu0 %v4133
        %v4486 = vpop.f32.mrf.mxu0
        %v4487 = vadd.f32 %v3422, %v4486
        %v4488 = vpop.f32.mrf.mxu0
        %v4489 = vpop.f32.mrf.mxu0
        %v4490 = vadd.f32 %v3425, %v4489
        %v4491 = vpop.f32.mrf.mxu0
        %4492 = vmatprep.mubr.bf16.mxu0 0
        %4493 = vmatmul.mubr.bf16.gmra.mxu0 %v4136
        %v4494 = vpop.f32.mrf.mxu0
        %v4495 = vadd.f32 %v3430, %v4494
        %v4496 = vpop.f32.mrf.mxu0
        %v4497 = vpop.f32.mrf.mxu0
        %v4498 = vadd.f32 %v3433, %v4497
        %v4499 = vpop.f32.mrf.mxu0
        %4500 = vmatprep.mubr.bf16.mxu0 0
        %4501 = vmatmul.mubr.bf16.gmra.mxu0 %v4139
        %v4502 = vpop.f32.mrf.mxu0
        %v4503 = vadd.f32 %v3438, %v4502
        %v4504 = vpop.f32.mrf.mxu0
        %v4505 = vpop.f32.mrf.mxu0
        %v4506 = vadd.f32 %v3441, %v4505
        %v4507 = vpop.f32.mrf.mxu0
        %4508 = vmatprep.mubr.bf16.mxu0 0
        %4509 = vmatmul.mubr.bf16.gmra.mxu0 %v4142
        %v4510 = vpop.f32.mrf.mxu0
        %v4511 = vadd.f32 %v3446, %v4510
        %v4512 = vpop.f32.mrf.mxu0
        %v4513 = vpop.f32.mrf.mxu0
        %v4514 = vadd.f32 %v3449, %v4513
        %v4515 = vpop.f32.mrf.mxu0
        %4516 = vmatprep.mubr.bf16.mxu0 0
        %4517 = vmatmul.mubr.bf16.gmra.mxu0 %v4145
        %v4518 = vpop.f32.mrf.mxu0
        %v4519 = vadd.f32 %v3454, %v4518
        %v4520 = vpop.f32.mrf.mxu0
        %v4521 = vpop.f32.mrf.mxu0
        %v4522 = vadd.f32 %v3457, %v4521
        %v4523 = vpop.f32.mrf.mxu0
        %4524 = vmatprep.mubr.bf16.mxu0 0
        %4525 = vmatmul.mubr.bf16.gmra.mxu0 %v4148
        %v4526 = vpop.f32.mrf.mxu0
        %v4527 = vadd.f32 %v3462, %v4526
        %v4528 = vpop.f32.mrf.mxu0
        %v4529 = vpop.f32.mrf.mxu0
        %v4530 = vadd.f32 %v3465, %v4529
        %v4531 = vpop.f32.mrf.mxu0
        %4532 = vmatprep.mubr.bf16.mxu0 0
        %4533 = vmatmul.mubr.bf16.gmra.mxu0 %v4151
        %v4534 = vpop.f32.mrf.mxu0
        %v4535 = vadd.f32 %v3470, %v4534
        %v4536 = vpop.f32.mrf.mxu0
        %v4537 = vpop.f32.mrf.mxu0
        %v4538 = vadd.f32 %v3473, %v4537
        %v4539 = vpop.f32.mrf.mxu0
        %4540 = vmatprep.mubr.bf16.mxu0 0
        %4541 = vmatmul.mubr.bf16.gmra.mxu0 %v4154
        %v4542 = vpop.f32.mrf.mxu0
        %v4543 = vadd.f32 %v3478, %v4542
        %v4544 = vpop.f32.mrf.mxu0
        %v4545 = vpop.f32.mrf.mxu0
        %v4546 = vadd.f32 %v3481, %v4545
        %v4547 = vpop.f32.mrf.mxu0
        %4548 = vmatprep.mubr.bf16.mxu0 0
        %4549 = vmatmul.mubr.bf16.gmra.mxu0 %v4157
        %v4550 = vpop.f32.mrf.mxu0
        %v4551 = vadd.f32 %v3486, %v4550
        %v4552 = vpop.f32.mrf.mxu0
        %v4553 = vpop.f32.mrf.mxu0
        %v4554 = vadd.f32 %v3489, %v4553
        %v4555 = vpop.f32.mrf.mxu0
        %4556 = vmatprep.mubr.bf16.mxu0 0
        %4557 = vmatmul.mubr.bf16.gmra.mxu0 %v4160
        %v4558 = vpop.f32.mrf.mxu0
        %v4559 = vadd.f32 %v3494, %v4558
        %v4560 = vpop.f32.mrf.mxu0
        %v4561 = vpop.f32.mrf.mxu0
        %v4562 = vadd.f32 %v3497, %v4561
        %v4563 = vpop.f32.mrf.mxu0
        %4564 = vmatprep.mubr.bf16.mxu0 0
        %4565 = vmatmul.mubr.bf16.gmra.mxu0 %v4163
        %v4566 = vpop.f32.mrf.mxu0
        %v4567 = vadd.f32 %v3502, %v4566
        %v4568 = vpop.f32.mrf.mxu0
        %v4569 = vpop.f32.mrf.mxu0
        %v4570 = vadd.f32 %v3505, %v4569
        %v4571 = vpop.f32.mrf.mxu0
        %4572 = vmatprep.mubr.bf16.mxu0 0
        %4573 = vmatmul.mubr.bf16.gmra.mxu0 %v4166
        %v4574 = vpop.f32.mrf.mxu0
        %v4575 = vadd.f32 %v3510, %v4574
        %v4576 = vpop.f32.mrf.mxu0
        %v4577 = vpop.f32.mrf.mxu0
        %v4578 = vadd.f32 %v3513, %v4577
        %v4579 = vpop.f32.mrf.mxu0
        %4580 = vmatprep.mubr.bf16.mxu0 0
        %4581 = vmatmul.mubr.bf16.gmra.mxu0 %v4169
        %v4582 = vpop.f32.mrf.mxu0
        %v4583 = vadd.f32 %v3518, %v4582
        %v4584 = vpop.f32.mrf.mxu0
        %v4585 = vpop.f32.mrf.mxu0
        %v4586 = vadd.f32 %v3521, %v4585
        %v4587 = vpop.f32.mrf.mxu0
        %4588 = vmatprep.mubr.bf16.mxu0 0
        %4589 = vmatmul.mubr.bf16.gmra.mxu0 %v4172
        %v4590 = vpop.f32.mrf.mxu0
        %v4591 = vadd.f32 %v3526, %v4590
        %v4592 = vpop.f32.mrf.mxu0
        %v4593 = vpop.f32.mrf.mxu0
        %v4594 = vadd.f32 %v3529, %v4593
        %v4595 = vpop.f32.mrf.mxu0
        %4596 = vmatprep.mubr.bf16.mxu0 0
        %4597 = vmatmul.mubr.bf16.gmra.mxu0 %v4175
        %v4598 = vpop.f32.mrf.mxu0
        %v4599 = vadd.f32 %v3534, %v4598
        %v4600 = vpop.f32.mrf.mxu0
        %v4601 = vpop.f32.mrf.mxu0
        %v4602 = vadd.f32 %v3537, %v4601
        %v4603 = vpop.f32.mrf.mxu0
        %4604 = vmatprep.mubr.bf16.mxu0 0
        %4605 = vmatmul.mubr.bf16.gmra.mxu0 %v4178
        %v4606 = vpop.f32.mrf.mxu0
        %v4607 = vadd.f32 %v3542, %v4606
        %v4608 = vpop.f32.mrf.mxu0
        %v4609 = vpop.f32.mrf.mxu0
        %v4610 = vadd.f32 %v3545, %v4609
        %v4611 = vpop.f32.mrf.mxu0
        %4612 = vmatprep.mubr.bf16.mxu0 0
        %4613 = vmatmul.mubr.bf16.gmra.mxu0 %v4181
        %v4614 = vpop.f32.mrf.mxu0
        %v4615 = vadd.f32 %v3550, %v4614
        %v4616 = vpop.f32.mrf.mxu0
        %v4617 = vpop.f32.mrf.mxu0
        %v4618 = vadd.f32 %v3553, %v4617
        %v4619 = vpop.f32.mrf.mxu0
        %4620 = vmatprep.mubr.bf16.mxu0 0
        %4621 = vmatmul.mubr.bf16.gmra.mxu0 %v4184
        %v4622 = vpop.f32.mrf.mxu0
        %v4623 = vadd.f32 %v3558, %v4622
        %v4624 = vpop.f32.mrf.mxu0
        %v4625 = vpop.f32.mrf.mxu0
        %v4626 = vadd.f32 %v3561, %v4625
        %v4627 = vpop.f32.mrf.mxu0
        %4628 = vmatprep.mubr.bf16.mxu0 0
        %4629 = vmatmul.mubr.bf16.gmra.mxu0 %v4187
        %v4630 = vpop.f32.mrf.mxu0
        %v4631 = vadd.f32 %v3566, %v4630
        %v4632 = vpop.f32.mrf.mxu0
        %v4633 = vpop.f32.mrf.mxu0
        %v4634 = vadd.f32 %v3569, %v4633
        %v4635 = vpop.f32.mrf.mxu0
        %4636 = vmatprep.mubr.bf16.mxu0 0
        %4637 = vmatmul.mubr.bf16.gmra.mxu0 %v4190
        %v4638 = vpop.f32.mrf.mxu0
        %v4639 = vadd.f32 %v3574, %v4638
        %v4640 = vpop.f32.mrf.mxu0
        %v4641 = vpop.f32.mrf.mxu0
        %v4642 = vadd.f32 %v3577, %v4641
        %v4643 = vpop.f32.mrf.mxu0
        %4644 = vmatprep.mubr.bf16.mxu0 0
        %4645 = vmatmul.mubr.bf16.gmra.mxu0 %v4193
        %v4646 = vpop.f32.mrf.mxu0
        %v4647 = vadd.f32 %v3582, %v4646
        %v4648 = vpop.f32.mrf.mxu0
        %v4649 = vpop.f32.mrf.mxu0
        %v4650 = vadd.f32 %v3585, %v4649
        %v4651 = vpop.f32.mrf.mxu0
        %4652 = vmatprep.mubr.bf16.mxu0 0
        %4653 = vmatmul.mubr.bf16.gmra.mxu0 %v4196
        %v4654 = vpop.f32.mrf.mxu0
        %v4655 = vadd.f32 %v3590, %v4654
        %v4656 = vpop.f32.mrf.mxu0
        %v4657 = vpop.f32.mrf.mxu0
        %v4658 = vadd.f32 %v3593, %v4657
        %v4659 = vpop.f32.mrf.mxu0
        %4660 = vmatprep.mubr.bf16.mxu0 0
        %4661 = vmatmul.mubr.bf16.gmra.mxu0 %v4199
        %v4662 = vpop.f32.mrf.mxu0
        %v4663 = vadd.f32 %v3598, %v4662
        %v4664 = vpop.f32.mrf.mxu0
        %v4665 = vpop.f32.mrf.mxu0
        %v4666 = vadd.f32 %v3601, %v4665
        %v4667 = vpop.f32.mrf.mxu0
        %4668 = vmatprep.mubr.bf16.mxu0 0
        %4669 = vmatmul.mubr.bf16.gmra.mxu0 %v4202
        %v4670 = vpop.f32.mrf.mxu0
        %v4671 = vadd.f32 %v3606, %v4670
        %v4672 = vpop.f32.mrf.mxu0
        %v4673 = vpop.f32.mrf.mxu0
        %v4674 = vadd.f32 %v3609, %v4673
        %v4675 = vpop.f32.mrf.mxu0
        %4676 = vmatprep.mubr.bf16.mxu0 0
        %4677 = vmatmul.mubr.bf16.gmra.mxu0 %v4205
        %v4678 = vpop.f32.mrf.mxu0
        %v4679 = vadd.f32 %v3614, %v4678
        %v4680 = vpop.f32.mrf.mxu0
        %v4681 = vpop.f32.mrf.mxu0
        %v4682 = vadd.f32 %v3617, %v4681
        %v4683 = vpop.f32.mrf.mxu0
        %4684 = vmatprep.mubr.bf16.mxu0 0
        %4685 = vmatmul.mubr.bf16.gmra.mxu0 %v4208
        %v4686 = vpop.f32.mrf.mxu0
        %v4687 = vadd.f32 %v3622, %v4686
        %v4688 = vpop.f32.mrf.mxu0
        %v4689 = vpop.f32.mrf.mxu0
        %v4690 = vadd.f32 %v3625, %v4689
        %v4691 = vpop.f32.mrf.mxu0
        %4692 = vmatprep.mubr.bf16.mxu0 0
        %4693 = vmatmul.mubr.bf16.gmra.mxu0 %v4211
        %v4694 = vpop.f32.mrf.mxu0
        %v4695 = vadd.f32 %v3630, %v4694
        %v4696 = vpop.f32.mrf.mxu0
        %v4697 = vpop.f32.mrf.mxu0
        %v4698 = vadd.f32 %v3633, %v4697
        %v4699 = vpop.f32.mrf.mxu0
        %4700 = vmatprep.mubr.bf16.mxu0 0
        %4701 = vmatmul.mubr.bf16.gmra.mxu0 %v4214
        %v4702 = vpop.f32.mrf.mxu0
        %v4703 = vadd.f32 %v3638, %v4702
        %v4704 = vpop.f32.mrf.mxu0
        %v4705 = vpop.f32.mrf.mxu0
        %v4706 = vadd.f32 %v3641, %v4705
        %v4707 = vpop.f32.mrf.mxu0
        %4708 = vmatprep.mubr.bf16.mxu0 0
        %4709 = vmatmul.mubr.bf16.gmra.mxu0 %v4217
        %v4710 = vpop.f32.mrf.mxu0
        %v4711 = vadd.f32 %v3646, %v4710
        %v4712 = vpop.f32.mrf.mxu0
        %v4713 = vpop.f32.mrf.mxu0
        %v4714 = vadd.f32 %v3649, %v4713
        %v4715 = vpop.f32.mrf.mxu0
        %4716 = vmatprep.mubr.bf16.mxu0 0
        %4717 = vmatmul.mubr.bf16.gmra.mxu0 %v4220
        %v4718 = vpop.f32.mrf.mxu0
        %v4719 = vadd.f32 %v3654, %v4718
        %v4720 = vpop.f32.mrf.mxu0
        %v4721 = vpop.f32.mrf.mxu0
        %v4722 = vadd.f32 %v3657, %v4721
        %v4723 = vpop.f32.mrf.mxu0
        %4724 = vmatprep.mubr.bf16.mxu0 0
        %4725 = vmatmul.mubr.bf16.gmra.mxu0 %v4223
        %v4726 = vpop.f32.mrf.mxu0
        %v4727 = vadd.f32 %v3662, %v4726
        %v4728 = vpop.f32.mrf.mxu0
        %v4729 = vpop.f32.mrf.mxu0
        %v4730 = vadd.f32 %v3665, %v4729
        %v4731 = vpop.f32.mrf.mxu0
        %4732 = vmatprep.mubr.bf16.mxu0 0
        %4733 = vmatmul.mubr.bf16.gmra.mxu0 %v4226
        %v4734 = vpop.f32.mrf.mxu0
        %v4735 = vadd.f32 %v3670, %v4734
        %v4736 = vpop.f32.mrf.mxu0
        %v4737 = vpop.f32.mrf.mxu0
        %v4738 = vadd.f32 %v3673, %v4737
        %v4739 = vpop.f32.mrf.mxu0
        %4740 = vmatprep.mubr.bf16.mxu0 0
        %4741 = vmatmul.mubr.bf16.gmra.mxu0 %v4229
        %v4742 = vpop.f32.mrf.mxu0
        %v4743 = vadd.f32 %v3678, %v4742
        %v4744 = vpop.f32.mrf.mxu0
        %v4745 = vpop.f32.mrf.mxu0
        %v4746 = vadd.f32 %v3681, %v4745
        %v4747 = vpop.f32.mrf.mxu0
        %4748 = vmatprep.mubr.bf16.mxu0 0
        %4749 = vmatmul.mubr.bf16.gmra.mxu0 %v4232
        %v4750 = vpop.f32.mrf.mxu0
        %v4751 = vadd.f32 %v3686, %v4750
        %v4752 = vpop.f32.mrf.mxu0
        %v4753 = vpop.f32.mrf.mxu0
        %v4754 = vadd.f32 %v3689, %v4753
        %v4755 = vpop.f32.mrf.mxu0
        %4756 = vmatprep.mubr.bf16.mxu0 0
        %4757 = vmatmul.mubr.bf16.gmra.mxu0 %v4235
        %v4758 = vpop.f32.mrf.mxu0
        %v4759 = vadd.f32 %v3694, %v4758
        %v4760 = vpop.f32.mrf.mxu0
        %v4761 = vpop.f32.mrf.mxu0
        %v4762 = vadd.f32 %v3697, %v4761
        %v4763 = vpop.f32.mrf.mxu0
        %4764 = vmatprep.mubr.bf16.mxu0 0
        %4765 = vmatmul.mubr.bf16.gmra.mxu0 %v4238
        %v4766 = vpop.f32.mrf.mxu0
        %v4767 = vadd.f32 %v3702, %v4766
        %v4768 = vpop.f32.mrf.mxu0
        %v4769 = vpop.f32.mrf.mxu0
        %v4770 = vadd.f32 %v3705, %v4769
        %v4771 = vpop.f32.mrf.mxu0
        %4772 = vmatprep.mubr.bf16.mxu0 0
        %4773 = vmatmul.mubr.bf16.gmra.mxu0 %v4241
        %v4774 = vpop.f32.mrf.mxu0
        %v4775 = vadd.f32 %v3710, %v4774
        %v4776 = vpop.f32.mrf.mxu0
        %v4777 = vpop.f32.mrf.mxu0
        %v4778 = vadd.f32 %v3713, %v4777
        %v4779 = vpop.f32.mrf.mxu0
        %4780 = vmatprep.mubr.bf16.mxu0 0
        %4781 = vmatmul.mubr.bf16.gmra.mxu0 %v4244
        %v4782 = vpop.f32.mrf.mxu0
        %v4783 = vadd.f32 %v3718, %v4782
        %v4784 = vpop.f32.mrf.mxu0
        %v4785 = vpop.f32.mrf.mxu0
        %v4786 = vadd.f32 %v3721, %v4785
        %v4787 = vpop.f32.mrf.mxu0
        %4788 = vmatprep.mubr.bf16.mxu0 0
        %4789 = vmatmul.mubr.bf16.gmra.mxu0 %v4247
        %v4790 = vpop.f32.mrf.mxu0
        %v4791 = vadd.f32 %v3726, %v4790
        %v4792 = vpop.f32.mrf.mxu0
        %v4793 = vpop.f32.mrf.mxu0
        %v4794 = vadd.f32 %v3729, %v4793
        %v4795 = vpop.f32.mrf.mxu0
        %4796 = vdwg.mxu0
        %vm4861 = vcmask 1042432
        %vm4862 = vcmask 1046532
        %vm4863 = vmor %vm4861, %vm4862
        %v4864 = vrot.slane %v1057, 5
        %v4865 = vrot.slane %v4864, 4
        %v4866 = vrot.slane %v1058, 5
        %v4867 = vsel %vm4863, %v4865, %v4866
        %v4868 = vrot.slane %v4866, 4
        %v4869 = vrot.slane %v1059, 5
        %v4870 = vsel %vm4863, %v4868, %v4869
        %v4871 = vrot.slane %v1060, 5
        %v4872 = vrot.slane %v4871, 4
        %v4873 = vrot.slane %v1061, 5
        %v4874 = vsel %vm4863, %v4872, %v4873
        %v4875 = vrot.slane %v4873, 4
        %v4876 = vrot.slane %v1062, 5
        %v4877 = vsel %vm4863, %v4875, %v4876
        %v4878 = vrot.slane %v1063, 5
        %v4879 = vrot.slane %v4878, 4
        %v4880 = vrot.slane %v1064, 5
        %v4881 = vsel %vm4863, %v4879, %v4880
        %v4882 = vrot.slane %v4880, 4
        %v4883 = vrot.slane %v1065, 5
        %v4884 = vsel %vm4863, %v4882, %v4883
        %v4885 = vrot.slane %v1066, 5
        %v4886 = vrot.slane %v4885, 4
        %v4887 = vrot.slane %v1067, 5
        %v4888 = vsel %vm4863, %v4886, %v4887
        %v4889 = vrot.slane %v4887, 4
        %v4890 = vrot.slane %v1068, 5
        %v4891 = vsel %vm4863, %v4889, %v4890
        %v4892 = vrot.slane %v1069, 5
        %v4893 = vrot.slane %v4892, 4
        %v4894 = vrot.slane %v1070, 5
        %v4895 = vsel %vm4863, %v4893, %v4894
        %v4896 = vrot.slane %v4894, 4
        %v4897 = vrot.slane %v1071, 5
        %v4898 = vsel %vm4863, %v4896, %v4897
        %v4899 = vrot.slane %v1072, 5
        %v4900 = vrot.slane %v4899, 4
        %v4901 = vrot.slane %v1073, 5
        %v4902 = vsel %vm4863, %v4900, %v4901
        %v4903 = vrot.slane %v4901, 4
        %v4904 = vrot.slane %v1074, 5
        %v4905 = vsel %vm4863, %v4903, %v4904
        %v4906 = vrot.slane %v1075, 5
        %v4907 = vrot.slane %v4906, 4
        %v4908 = vrot.slane %v1076, 5
        %v4909 = vsel %vm4863, %v4907, %v4908
        %v4910 = vrot.slane %v4908, 4
        %v4911 = vrot.slane %v1077, 5
        %v4912 = vsel %vm4863, %v4910, %v4911
        %v4913 = vrot.slane %v1078, 5
        %v4914 = vrot.slane %v4913, 4
        %v4915 = vrot.slane %v1079, 5
        %v4916 = vsel %vm4863, %v4914, %v4915
        %v4917 = vrot.slane %v4915, 4
        %v4918 = vrot.slane %v1080, 5
        %v4919 = vsel %vm4863, %v4917, %v4918
        %v4920 = vrot.slane %v1081, 5
        %v4921 = vrot.slane %v4920, 4
        %v4922 = vrot.slane %v1082, 5
        %v4923 = vsel %vm4863, %v4921, %v4922
        %v4924 = vrot.slane %v4922, 4
        %v4925 = vrot.slane %v1083, 5
        %v4926 = vsel %vm4863, %v4924, %v4925
        %v4927 = vrot.slane %v1084, 5
        %v4928 = vrot.slane %v4927, 4
        %v4929 = vrot.slane %v1085, 5
        %v4930 = vsel %vm4863, %v4928, %v4929
        %v4931 = vrot.slane %v4929, 4
        %v4932 = vrot.slane %v1086, 5
        %v4933 = vsel %vm4863, %v4931, %v4932
        %v4934 = vrot.slane %v1087, 5
        %v4935 = vrot.slane %v4934, 4
        %v4936 = vrot.slane %v1088, 5
        %v4937 = vsel %vm4863, %v4935, %v4936
        %v4938 = vrot.slane %v4936, 4
        %v4939 = vrot.slane %v1089, 5
        %v4940 = vsel %vm4863, %v4938, %v4939
        %v4941 = vrot.slane %v1090, 5
        %v4942 = vrot.slane %v4941, 4
        %v4943 = vrot.slane %v1091, 5
        %v4944 = vsel %vm4863, %v4942, %v4943
        %v4945 = vrot.slane %v4943, 4
        %v4946 = vrot.slane %v1092, 5
        %v4947 = vsel %vm4863, %v4945, %v4946
        %v4948 = vrot.slane %v1093, 5
        %v4949 = vrot.slane %v4948, 4
        %v4950 = vrot.slane %v1094, 5
        %v4951 = vsel %vm4863, %v4949, %v4950
        %v4952 = vrot.slane %v4950, 4
        %v4953 = vrot.slane %v1095, 5
        %v4954 = vsel %vm4863, %v4952, %v4953
        %v4955 = vrot.slane %v1096, 5
        %v4956 = vrot.slane %v4955, 4
        %v4957 = vrot.slane %v1097, 5
        %v4958 = vsel %vm4863, %v4956, %v4957
        %v4959 = vrot.slane %v4957, 4
        %v4960 = vrot.slane %v1098, 5
        %v4961 = vsel %vm4863, %v4959, %v4960
        %v4962 = vrot.slane %v1099, 5
        %v4963 = vrot.slane %v4962, 4
        %v4964 = vrot.slane %v1100, 5
        %v4965 = vsel %vm4863, %v4963, %v4964
        %v4966 = vrot.slane %v4964, 4
        %v4967 = vrot.slane %v1101, 5
        %v4968 = vsel %vm4863, %v4966, %v4967
        %v4969 = vrot.slane %v1102, 5
        %v4970 = vrot.slane %v4969, 4
        %v4971 = vrot.slane %v1103, 5
        %v4972 = vsel %vm4863, %v4970, %v4971
        %v4973 = vrot.slane %v4971, 4
        %v4974 = vrot.slane %v1104, 5
        %v4975 = vsel %vm4863, %v4973, %v4974
        %v4976 = vrot.slane %v1105, 5
        %v4977 = vrot.slane %v4976, 4
        %v4978 = vrot.slane %v1106, 5
        %v4979 = vsel %vm4863, %v4977, %v4978
        %v4980 = vrot.slane %v4978, 4
        %v4981 = vrot.slane %v1107, 5
        %v4982 = vsel %vm4863, %v4980, %v4981
        %v4983 = vrot.slane %v1108, 5
        %v4984 = vrot.slane %v4983, 4
        %v4985 = vrot.slane %v1109, 5
        %v4986 = vsel %vm4863, %v4984, %v4985
        %v4987 = vrot.slane %v4985, 4
        %v4988 = vrot.slane %v1110, 5
        %v4989 = vsel %vm4863, %v4987, %v4988
        %v4990 = vrot.slane %v1111, 5
        %v4991 = vrot.slane %v4990, 4
        %v4992 = vrot.slane %v1112, 5
        %v4993 = vsel %vm4863, %v4991, %v4992
        %v4994 = vrot.slane %v4992, 4
        %v4995 = vrot.slane %v1113, 5
        %v4996 = vsel %vm4863, %v4994, %v4995
        %v4997 = vrot.slane %v1114, 5
        %v4998 = vrot.slane %v4997, 4
        %v4999 = vrot.slane %v1115, 5
        %v5000 = vsel %vm4863, %v4998, %v4999
        %v5001 = vrot.slane %v4999, 4
        %v5002 = vrot.slane %v1116, 5
        %v5003 = vsel %vm4863, %v5001, %v5002
        %v5004 = vrot.slane %v1117, 5
        %v5005 = vrot.slane %v5004, 4
        %v5006 = vrot.slane %v1118, 5
        %v5007 = vsel %vm4863, %v5005, %v5006
        %v5008 = vrot.slane %v5006, 4
        %v5009 = vrot.slane %v1119, 5
        %v5010 = vsel %vm4863, %v5008, %v5009
        %v5011 = vrot.slane %v1120, 5
        %v5012 = vrot.slane %v5011, 4
        %v5013 = vrot.slane %v1121, 5
        %v5014 = vsel %vm4863, %v5012, %v5013
        %v5015 = vrot.slane %v5013, 4
        %v5016 = vrot.slane %v1122, 5
        %v5017 = vsel %vm4863, %v5015, %v5016
        %v5018 = vrot.slane %v1123, 5
        %v5019 = vrot.slane %v5018, 4
        %v5020 = vrot.slane %v1124, 5
        %v5021 = vsel %vm4863, %v5019, %v5020
        %v5022 = vrot.slane %v5020, 4
        %v5023 = vrot.slane %v1125, 5
        %v5024 = vsel %vm4863, %v5022, %v5023
        %v5025 = vrot.slane %v1126, 5
        %v5026 = vrot.slane %v5025, 4
        %v5027 = vrot.slane %v1127, 5
        %v5028 = vsel %vm4863, %v5026, %v5027
        %v5029 = vrot.slane %v5027, 4
        %v5030 = vrot.slane %v1128, 5
        %v5031 = vsel %vm4863, %v5029, %v5030
        %v5032 = vrot.slane %v1129, 5
        %v5033 = vrot.slane %v5032, 4
        %v5034 = vrot.slane %v1130, 5
        %v5035 = vsel %vm4863, %v5033, %v5034
        %v5036 = vrot.slane %v5034, 4
        %v5037 = vrot.slane %v1131, 5
        %v5038 = vsel %vm4863, %v5036, %v5037
        %v5039 = vrot.slane %v1132, 5
        %v5040 = vrot.slane %v5039, 4
        %v5041 = vrot.slane %v1133, 5
        %v5042 = vsel %vm4863, %v5040, %v5041
        %v5043 = vrot.slane %v5041, 4
        %v5044 = vrot.slane %v1134, 5
        %v5045 = vsel %vm4863, %v5043, %v5044
        %v5046 = vrot.slane %v1135, 5
        %v5047 = vrot.slane %v5046, 4
        %v5048 = vrot.slane %v1136, 5
        %v5049 = vsel %vm4863, %v5047, %v5048
        %v5050 = vrot.slane %v5048, 4
        %v5051 = vrot.slane %v1137, 5
        %v5052 = vsel %vm4863, %v5050, %v5051
        %v5053 = vrot.slane %v1138, 5
        %v5054 = vrot.slane %v5053, 4
        %v5055 = vrot.slane %v1139, 5
        %v5056 = vsel %vm4863, %v5054, %v5055
        %v5057 = vrot.slane %v5055, 4
        %v5058 = vrot.slane %v1140, 5
        %v5059 = vsel %vm4863, %v5057, %v5058
        %v5060 = vrot.slane %v1141, 5
        %v5061 = vrot.slane %v5060, 4
        %v5062 = vrot.slane %v1142, 5
        %v5063 = vsel %vm4863, %v5061, %v5062
        %v5064 = vrot.slane %v5062, 4
        %v5065 = vrot.slane %v1143, 5
        %v5066 = vsel %vm4863, %v5064, %v5065
        %v5067 = vrot.slane %v1144, 5
        %v5068 = vrot.slane %v5067, 4
        %v5069 = vrot.slane %v1145, 5
        %v5070 = vsel %vm4863, %v5068, %v5069
        %v5071 = vrot.slane %v5069, 4
        %v5072 = vrot.slane %v1146, 5
        %v5073 = vsel %vm4863, %v5071, %v5072
        %v5074 = vrot.slane %v1147, 5
        %v5075 = vrot.slane %v5074, 4
        %v5076 = vrot.slane %v1148, 5
        %v5077 = vsel %vm4863, %v5075, %v5076
        %v5078 = vrot.slane %v5076, 4
        %v5079 = vrot.slane %v1149, 5
        %v5080 = vsel %vm4863, %v5078, %v5079
        %v5081 = vrot.slane %v1150, 5
        %v5082 = vrot.slane %v5081, 4
        %v5083 = vrot.slane %v1151, 5
        %v5084 = vsel %vm4863, %v5082, %v5083
        %v5085 = vrot.slane %v5083, 4
        %v5086 = vrot.slane %v1152, 5
        %v5087 = vsel %vm4863, %v5085, %v5086
        %v5088 = vrot.slane %v1153, 5
        %v5089 = vrot.slane %v5088, 4
        %v5090 = vrot.slane %v1154, 5
        %v5091 = vsel %vm4863, %v5089, %v5090
        %v5092 = vrot.slane %v5090, 4
        %v5093 = vrot.slane %v1155, 5
        %v5094 = vsel %vm4863, %v5092, %v5093
        %v5095 = vrot.slane %v1156, 5
        %v5096 = vrot.slane %v5095, 4
        %v5097 = vrot.slane %v1157, 5
        %v5098 = vsel %vm4863, %v5096, %v5097
        %v5099 = vrot.slane %v5097, 4
        %v5100 = vrot.slane %v1158, 5
        %v5101 = vsel %vm4863, %v5099, %v5100
        %v5102 = vrot.slane %v1159, 5
        %v5103 = vrot.slane %v5102, 4
        %v5104 = vrot.slane %v1160, 5
        %v5105 = vsel %vm4863, %v5103, %v5104
        %v5106 = vrot.slane %v5104, 4
        %v5107 = vrot.slane %v1161, 5
        %v5108 = vsel %vm4863, %v5106, %v5107
        %v5109 = vrot.slane %v1162, 5
        %v5110 = vrot.slane %v5109, 4
        %v5111 = vrot.slane %v1163, 5
        %v5112 = vsel %vm4863, %v5110, %v5111
        %v5113 = vrot.slane %v5111, 4
        %v5114 = vrot.slane %v1164, 5
        %v5115 = vsel %vm4863, %v5113, %v5114
        %v5116 = vrot.slane %v1165, 5
        %v5117 = vrot.slane %v5116, 4
        %v5118 = vrot.slane %v1166, 5
        %v5119 = vsel %vm4863, %v5117, %v5118
        %v5120 = vrot.slane %v5118, 4
        %v5121 = vrot.slane %v1167, 5
        %v5122 = vsel %vm4863, %v5120, %v5121
        %v5123 = vrot.slane %v1168, 5
        %v5124 = vrot.slane %v5123, 4
        %v5125 = vrot.slane %v1169, 5
        %v5126 = vsel %vm4863, %v5124, %v5125
        %v5127 = vrot.slane %v5125, 4
        %v5128 = vrot.slane %v1170, 5
        %v5129 = vsel %vm4863, %v5127, %v5128
        %v5130 = vrot.slane %v1171, 5
        %v5131 = vrot.slane %v5130, 4
        %v5132 = vrot.slane %v1172, 5
        %v5133 = vsel %vm4863, %v5131, %v5132
        %v5134 = vrot.slane %v5132, 4
        %v5135 = vrot.slane %v1173, 5
        %v5136 = vsel %vm4863, %v5134, %v5135
        %v5137 = vrot.slane %v1174, 5
        %v5138 = vrot.slane %v5137, 4
        %v5139 = vrot.slane %v1175, 5
        %v5140 = vsel %vm4863, %v5138, %v5139
        %v5141 = vrot.slane %v5139, 4
        %v5142 = vrot.slane %v1176, 5
        %v5143 = vsel %vm4863, %v5141, %v5142
        %v5144 = vrot.slane %v1177, 5
        %v5145 = vrot.slane %v5144, 4
        %v5146 = vrot.slane %v1178, 5
        %v5147 = vsel %vm4863, %v5145, %v5146
        %v5148 = vrot.slane %v5146, 4
        %v5149 = vrot.slane %v1179, 5
        %v5150 = vsel %vm4863, %v5148, %v5149
        %v5151 = vrot.slane %v1180, 5
        %v5152 = vrot.slane %v5151, 4
        %v5153 = vrot.slane %v1181, 5
        %v5154 = vsel %vm4863, %v5152, %v5153
        %v5155 = vrot.slane %v5153, 4
        %v5156 = vrot.slane %v1182, 5
        %v5157 = vsel %vm4863, %v5155, %v5156
        %v5158 = vrot.slane %v1183, 5
        %v5159 = vrot.slane %v5158, 4
        %v5160 = vrot.slane %v1184, 5
        %v5161 = vsel %vm4863, %v5159, %v5160
        %v5162 = vrot.slane %v5160, 4
        %v5163 = vrot.slane %v1185, 5
        %v5164 = vsel %vm4863, %v5162, %v5163
        %v5165 = vrot.slane %v1186, 5
        %v5166 = vrot.slane %v5165, 4
        %v5167 = vrot.slane %v1187, 5
        %v5168 = vsel %vm4863, %v5166, %v5167
        %v5169 = vrot.slane %v5167, 4
        %v5170 = vrot.slane %v1188, 5
        %v5171 = vsel %vm4863, %v5169, %v5170
        %v5172 = vrot.slane %v1189, 5
        %v5173 = vrot.slane %v5172, 4
        %v5174 = vrot.slane %v1190, 5
        %v5175 = vsel %vm4863, %v5173, %v5174
        %v5176 = vrot.slane %v5174, 4
        %v5177 = vrot.slane %v1191, 5
        %v5178 = vsel %vm4863, %v5176, %v5177
        %v5179 = vrot.slane %v1192, 5
        %v5180 = vrot.slane %v5179, 4
        %v5181 = vrot.slane %v1193, 5
        %v5182 = vsel %vm4863, %v5180, %v5181
        %v5183 = vrot.slane %v5181, 4
        %v5184 = vrot.slane %v1194, 5
        %v5185 = vsel %vm4863, %v5183, %v5184
        %v5186 = vrot.slane %v1195, 5
        %v5187 = vrot.slane %v5186, 4
        %v5188 = vrot.slane %v1196, 5
        %v5189 = vsel %vm4863, %v5187, %v5188
        %v5190 = vrot.slane %v5188, 4
        %v5191 = vrot.slane %v1197, 5
        %v5192 = vsel %vm4863, %v5190, %v5191
        %v5193 = vrot.slane %v1198, 5
        %v5194 = vrot.slane %v5193, 4
        %v5195 = vrot.slane %v1199, 5
        %v5196 = vsel %vm4863, %v5194, %v5195
        %v5197 = vrot.slane %v5195, 4
        %v5198 = vrot.slane %v1200, 5
        %v5199 = vsel %vm4863, %v5197, %v5198
        %v5200 = vrot.slane %v1201, 5
        %v5201 = vrot.slane %v5200, 4
        %v5202 = vrot.slane %v1202, 5
        %v5203 = vsel %vm4863, %v5201, %v5202
        %v5204 = vrot.slane %v5202, 4
        %v5205 = vrot.slane %v1203, 5
        %v5206 = vsel %vm4863, %v5204, %v5205
        %v5207 = vrot.slane %v1204, 5
        %v5208 = vrot.slane %v5207, 4
        %v5209 = vrot.slane %v1205, 5
        %v5210 = vsel %vm4863, %v5208, %v5209
        %v5211 = vrot.slane %v5209, 4
        %v5212 = vrot.slane %v1206, 5
        %v5213 = vsel %vm4863, %v5211, %v5212
        %v5214 = vrot.slane %v1207, 5
        %v5215 = vrot.slane %v5214, 4
        %v5216 = vrot.slane %v1208, 5
        %v5217 = vsel %vm4863, %v5215, %v5216
        %v5218 = vrot.slane %v5216, 4
        %v5219 = vrot.slane %v1209, 5
        %v5220 = vsel %vm4863, %v5218, %v5219
        %v5221 = vrot.slane %v1210, 5
        %v5222 = vrot.slane %v5221, 4
        %v5223 = vrot.slane %v1211, 5
        %v5224 = vsel %vm4863, %v5222, %v5223
        %v5225 = vrot.slane %v5223, 4
        %v5226 = vrot.slane %v1212, 5
        %v5227 = vsel %vm4863, %v5225, %v5226
        %v5228 = vrot.slane %v1213, 5
        %v5229 = vrot.slane %v5228, 4
        %v5230 = vrot.slane %v1214, 5
        %v5231 = vsel %vm4863, %v5229, %v5230
        %v5232 = vrot.slane %v5230, 4
        %v5233 = vrot.slane %v1215, 5
        %v5234 = vsel %vm4863, %v5232, %v5233
        %v5235 = vrot.slane %v1216, 5
        %v5236 = vrot.slane %v5235, 4
        %v5237 = vrot.slane %v1217, 5
        %v5238 = vsel %vm4863, %v5236, %v5237
        %v5239 = vrot.slane %v5237, 4
        %v5240 = vrot.slane %v1218, 5
        %v5241 = vsel %vm4863, %v5239, %v5240
        %v5242 = vrot.slane %v1219, 5
        %v5243 = vrot.slane %v5242, 4
        %v5244 = vrot.slane %v1220, 5
        %v5245 = vsel %vm4863, %v5243, %v5244
        %v5246 = vrot.slane %v5244, 4
        %v5247 = vrot.slane %v1221, 5
        %v5248 = vsel %vm4863, %v5246, %v5247
        %v5249 = vrot.slane %v1222, 5
        %v5250 = vrot.slane %v5249, 4
        %v5251 = vrot.slane %v1223, 5
        %v5252 = vsel %vm4863, %v5250, %v5251
        %v5253 = vrot.slane %v5251, 4
        %v5254 = vrot.slane %v1224, 5
        %v5255 = vsel %vm4863, %v5253, %v5254
        %v5256 = vrot.slane %v1225, 5
        %v5257 = vrot.slane %v5256, 4
        %v5258 = vrot.slane %v1226, 5
        %v5259 = vsel %vm4863, %v5257, %v5258
        %v5260 = vrot.slane %v5258, 4
        %v5261 = vrot.slane %v1227, 5
        %v5262 = vsel %vm4863, %v5260, %v5261
        %v5263 = vrot.slane %v1228, 5
        %v5264 = vrot.slane %v5263, 4
        %v5265 = vrot.slane %v1229, 5
        %v5266 = vsel %vm4863, %v5264, %v5265
        %v5267 = vrot.slane %v5265, 4
        %v5268 = vrot.slane %v1230, 5
        %v5269 = vsel %vm4863, %v5267, %v5268
        %v5270 = vrot.slane %v1231, 5
        %v5271 = vrot.slane %v5270, 4
        %v5272 = vrot.slane %v1232, 5
        %v5273 = vsel %vm4863, %v5271, %v5272
        %v5274 = vrot.slane %v5272, 4
        %v5275 = vrot.slane %v1233, 5
        %v5276 = vsel %vm4863, %v5274, %v5275
        %v5277 = vrot.slane %v1234, 5
        %v5278 = vrot.slane %v5277, 4
        %v5279 = vrot.slane %v1235, 5
        %v5280 = vsel %vm4863, %v5278, %v5279
        %v5281 = vrot.slane %v5279, 4
        %v5282 = vrot.slane %v1236, 5
        %v5283 = vsel %vm4863, %v5281, %v5282
        %v5284 = vrot.slane %v1237, 5
        %v5285 = vrot.slane %v5284, 4
        %v5286 = vrot.slane %v1238, 5
        %v5287 = vsel %vm4863, %v5285, %v5286
        %v5288 = vrot.slane %v5286, 4
        %v5289 = vrot.slane %v1239, 5
        %v5290 = vsel %vm4863, %v5288, %v5289
        %v5291 = vrot.slane %v1240, 5
        %v5292 = vrot.slane %v5291, 4
        %v5293 = vrot.slane %v1241, 5
        %v5294 = vsel %vm4863, %v5292, %v5293
        %v5295 = vrot.slane %v5293, 4
        %v5296 = vrot.slane %v1242, 5
        %v5297 = vsel %vm4863, %v5295, %v5296
        %v5298 = vrot.slane %v1243, 5
        %v5299 = vrot.slane %v5298, 4
        %v5300 = vrot.slane %v1244, 5
        %v5301 = vsel %vm4863, %v5299, %v5300
        %v5302 = vrot.slane %v5300, 4
        %v5303 = vrot.slane %v1245, 5
        %v5304 = vsel %vm4863, %v5302, %v5303
        %v5305 = vrot.slane %v1246, 5
        %v5306 = vrot.slane %v5305, 4
        %v5307 = vrot.slane %v1247, 5
        %v5308 = vsel %vm4863, %v5306, %v5307
        %v5309 = vrot.slane %v5307, 4
        %v5310 = vrot.slane %v1248, 5
        %v5311 = vsel %vm4863, %v5309, %v5310
        %s5312 = scalar_lea.vmem %s1, 16
        %v5313 = vld [vmem:[%s5312] sm:$0xf]
        %v5314 = vld [vmem:[%s5312 + $0x4] sm:$0x3]
        %v5315 = vunpack.c.l.b16 %v4867
        %v5316 = vunpack.c.l.b16 %v4870
        %v5317 = vunpack.c.l.b16 %v4874
        %v5318 = vunpack.c.l.b16 %v4877
        %v5319 = vunpack.c.l.b16 %v4881
        %v5320 = vunpack.c.l.b16 %v4884
        %v5321 = vunpack.c.l.b16 %v4888
        %v5322 = vunpack.c.l.b16 %v4891
        %v5323 = vunpack.c.l.b16 %v4895
        %v5324 = vunpack.c.l.b16 %v4898
        %v5325 = vunpack.c.l.b16 %v4902
        %v5326 = vunpack.c.l.b16 %v4905
        %v5327 = vunpack.c.l.b16 %v4909
        %v5328 = vunpack.c.l.b16 %v4912
        %v5329 = vunpack.c.l.b16 %v4916
        %v5330 = vunpack.c.l.b16 %v4919
        %v5331 = vunpack.c.l.b16 %v4923
        %v5332 = vunpack.c.l.b16 %v4926
        %v5333 = vunpack.c.l.b16 %v4930
        %v5334 = vunpack.c.l.b16 %v4933
        %v5335 = vunpack.c.l.b16 %v4937
        %v5336 = vunpack.c.l.b16 %v4940
        %v5337 = vunpack.c.l.b16 %v4944
        %v5338 = vunpack.c.l.b16 %v4947
        %v5339 = vunpack.c.l.b16 %v4951
        %v5340 = vunpack.c.l.b16 %v4954
        %v5341 = vunpack.c.l.b16 %v4958
        %v5342 = vunpack.c.l.b16 %v4961
        %v5343 = vunpack.c.l.b16 %v4965
        %v5344 = vunpack.c.l.b16 %v4968
        %v5345 = vunpack.c.l.b16 %v4972
        %v5346 = vunpack.c.l.b16 %v4975
        %v5347 = vunpack.c.l.b16 %v4979
        %v5348 = vunpack.c.l.b16 %v4982
        %v5349 = vunpack.c.l.b16 %v4986
        %v5350 = vunpack.c.l.b16 %v4989
        %v5351 = vunpack.c.l.b16 %v4993
        %v5352 = vunpack.c.l.b16 %v4996
        %v5353 = vunpack.c.l.b16 %v5000
        %v5354 = vunpack.c.l.b16 %v5003
        %v5355 = vunpack.c.l.b16 %v5007
        %v5356 = vunpack.c.l.b16 %v5010
        %v5357 = vunpack.c.l.b16 %v5014
        %v5358 = vunpack.c.l.b16 %v5017
        %v5359 = vunpack.c.l.b16 %v5021
        %v5360 = vunpack.c.l.b16 %v5024
        %v5361 = vunpack.c.l.b16 %v5028
        %v5362 = vunpack.c.l.b16 %v5031
        %v5363 = vunpack.c.l.b16 %v5035
        %v5364 = vunpack.c.l.b16 %v5038
        %v5365 = vunpack.c.l.b16 %v5042
        %v5366 = vunpack.c.l.b16 %v5045
        %v5367 = vunpack.c.l.b16 %v5049
        %v5368 = vunpack.c.l.b16 %v5052
        %v5369 = vunpack.c.l.b16 %v5056
        %v5370 = vunpack.c.l.b16 %v5059
        %v5371 = vunpack.c.l.b16 %v5063
        %v5372 = vunpack.c.l.b16 %v5066
        %v5373 = vunpack.c.l.b16 %v5070
        %v5374 = vunpack.c.l.b16 %v5073
        %v5375 = vunpack.c.l.b16 %v5077
        %v5376 = vunpack.c.l.b16 %v5080
        %v5377 = vunpack.c.l.b16 %v5084
        %v5378 = vunpack.c.l.b16 %v5087
        %v5379 = vunpack.c.l.b16 %v5091
        %v5380 = vunpack.c.l.b16 %v5094
        %v5381 = vunpack.c.l.b16 %v5098
        %v5382 = vunpack.c.l.b16 %v5101
        %v5383 = vunpack.c.l.b16 %v5105
        %v5384 = vunpack.c.l.b16 %v5108
        %v5385 = vunpack.c.l.b16 %v5112
        %v5386 = vunpack.c.l.b16 %v5115
        %v5387 = vunpack.c.l.b16 %v5119
        %v5388 = vunpack.c.l.b16 %v5122
        %v5389 = vunpack.c.l.b16 %v5126
        %v5390 = vunpack.c.l.b16 %v5129
        %v5391 = vunpack.c.l.b16 %v5133
        %v5392 = vunpack.c.l.b16 %v5136
        %v5393 = vunpack.c.l.b16 %v5140
        %v5394 = vunpack.c.l.b16 %v5143
        %v5395 = vunpack.c.l.b16 %v5147
        %v5396 = vunpack.c.l.b16 %v5150
        %v5397 = vunpack.c.l.b16 %v5154
        %v5398 = vunpack.c.l.b16 %v5157
        %v5399 = vunpack.c.l.b16 %v5161
        %v5400 = vunpack.c.l.b16 %v5164
        %v5401 = vunpack.c.l.b16 %v5168
        %v5402 = vunpack.c.l.b16 %v5171
        %v5403 = vunpack.c.l.b16 %v5175
        %v5404 = vunpack.c.l.b16 %v5178
        %v5405 = vunpack.c.l.b16 %v5182
        %v5406 = vunpack.c.l.b16 %v5185
        %v5407 = vunpack.c.l.b16 %v5189
        %v5408 = vunpack.c.l.b16 %v5192
        %v5409 = vunpack.c.l.b16 %v5196
        %v5410 = vunpack.c.l.b16 %v5199
        %v5411 = vunpack.c.l.b16 %v5203
        %v5412 = vunpack.c.l.b16 %v5206
        %v5413 = vunpack.c.l.b16 %v5210
        %v5414 = vunpack.c.l.b16 %v5213
        %v5415 = vunpack.c.l.b16 %v5217
        %v5416 = vunpack.c.l.b16 %v5220
        %v5417 = vunpack.c.l.b16 %v5224
        %v5418 = vunpack.c.l.b16 %v5227
        %v5419 = vunpack.c.l.b16 %v5231
        %v5420 = vunpack.c.l.b16 %v5234
        %v5421 = vunpack.c.l.b16 %v5238
        %v5422 = vunpack.c.l.b16 %v5241
        %v5423 = vunpack.c.l.b16 %v5245
        %v5424 = vunpack.c.l.b16 %v5248
        %v5425 = vunpack.c.l.b16 %v5252
        %v5426 = vunpack.c.l.b16 %v5255
        %v5427 = vunpack.c.l.b16 %v5259
        %v5428 = vunpack.c.l.b16 %v5262
        %v5429 = vunpack.c.l.b16 %v5266
        %v5430 = vunpack.c.l.b16 %v5269
        %v5431 = vunpack.c.l.b16 %v5273
        %v5432 = vunpack.c.l.b16 %v5276
        %v5433 = vunpack.c.l.b16 %v5280
        %v5434 = vunpack.c.l.b16 %v5283
        %v5435 = vunpack.c.l.b16 %v5287
        %v5436 = vunpack.c.l.b16 %v5290
        %v5437 = vunpack.c.l.b16 %v5294
        %v5438 = vunpack.c.l.b16 %v5297
        %v5439 = vunpack.c.l.b16 %v5301
        %v5440 = vunpack.c.l.b16 %v5304
        %v5441 = vunpack.c.l.b16 %v5308
        %v5442 = vunpack.c.l.b16 %v5311
        %v5443 = vpack.c.b16 %v5316, %v5315
        %v5444 = vpack.c.b16 %v5318, %v5317
        %v5445 = vpack.c.b16 %v5320, %v5319
        %v5446 = vpack.c.b16 %v5322, %v5321
        %v5447 = vpack.c.b16 %v5324, %v5323
        %v5448 = vpack.c.b16 %v5326, %v5325
        %v5449 = vpack.c.b16 %v5328, %v5327
        %v5450 = vpack.c.b16 %v5330, %v5329
        %v5451 = vpack.c.b16 %v5332, %v5331
        %v5452 = vpack.c.b16 %v5334, %v5333
        %v5453 = vpack.c.b16 %v5336, %v5335
        %v5454 = vpack.c.b16 %v5338, %v5337
        %v5455 = vpack.c.b16 %v5340, %v5339
        %v5456 = vpack.c.b16 %v5342, %v5341
        %v5457 = vpack.c.b16 %v5344, %v5343
        %v5458 = vpack.c.b16 %v5346, %v5345
        %v5459 = vpack.c.b16 %v5348, %v5347
        %v5460 = vpack.c.b16 %v5350, %v5349
        %v5461 = vpack.c.b16 %v5352, %v5351
        %v5462 = vpack.c.b16 %v5354, %v5353
        %v5463 = vpack.c.b16 %v5356, %v5355
        %v5464 = vpack.c.b16 %v5358, %v5357
        %v5465 = vpack.c.b16 %v5360, %v5359
        %v5466 = vpack.c.b16 %v5362, %v5361
        %v5467 = vpack.c.b16 %v5364, %v5363
        %v5468 = vpack.c.b16 %v5366, %v5365
        %v5469 = vpack.c.b16 %v5368, %v5367
        %v5470 = vpack.c.b16 %v5370, %v5369
        %v5471 = vpack.c.b16 %v5372, %v5371
        %v5472 = vpack.c.b16 %v5374, %v5373
        %v5473 = vpack.c.b16 %v5376, %v5375
        %v5474 = vpack.c.b16 %v5378, %v5377
        %v5475 = vpack.c.b16 %v5380, %v5379
        %v5476 = vpack.c.b16 %v5382, %v5381
        %v5477 = vpack.c.b16 %v5384, %v5383
        %v5478 = vpack.c.b16 %v5386, %v5385
        %v5479 = vpack.c.b16 %v5388, %v5387
        %v5480 = vpack.c.b16 %v5390, %v5389
        %v5481 = vpack.c.b16 %v5392, %v5391
        %v5482 = vpack.c.b16 %v5394, %v5393
        %v5483 = vpack.c.b16 %v5396, %v5395
        %v5484 = vpack.c.b16 %v5398, %v5397
        %v5485 = vpack.c.b16 %v5400, %v5399
        %v5486 = vpack.c.b16 %v5402, %v5401
        %v5487 = vpack.c.b16 %v5404, %v5403
        %v5488 = vpack.c.b16 %v5406, %v5405
        %v5489 = vpack.c.b16 %v5408, %v5407
        %v5490 = vpack.c.b16 %v5410, %v5409
        %v5491 = vpack.c.b16 %v5412, %v5411
        %v5492 = vpack.c.b16 %v5414, %v5413
        %v5493 = vpack.c.b16 %v5416, %v5415
        %v5494 = vpack.c.b16 %v5418, %v5417
        %v5495 = vpack.c.b16 %v5420, %v5419
        %v5496 = vpack.c.b16 %v5422, %v5421
        %v5497 = vpack.c.b16 %v5424, %v5423
        %v5498 = vpack.c.b16 %v5426, %v5425
        %v5499 = vpack.c.b16 %v5428, %v5427
        %v5500 = vpack.c.b16 %v5430, %v5429
        %v5501 = vpack.c.b16 %v5432, %v5431
        %v5502 = vpack.c.b16 %v5434, %v5433
        %v5503 = vpack.c.b16 %v5436, %v5435
        %v5504 = vpack.c.b16 %v5438, %v5437
        %v5505 = vpack.c.b16 %v5440, %v5439
        %v5506 = vpack.c.b16 %v5442, %v5441
        %v5509 = vunpack.c.l.b16 %v5313
        %v5510 = vunpack.c.l.b16 %v5314
        %v5511 = vpack.c.b16 %v5510, %v5509
        %v5513 = vsel %vm2990, %v5443, 0
        %v5516 = vsel %vm2990, %v5444, 0
        %v5519 = vsel %vm2990, %v5445, 0
        %v5522 = vsel %vm2990, %v5446, 0
        %v5525 = vsel %vm2990, %v5447, 0
        %v5528 = vsel %vm2990, %v5448, 0
        %v5531 = vsel %vm2990, %v5449, 0
        %v5534 = vsel %vm2990, %v5450, 0
        %v5537 = vsel %vm2990, %v5451, 0
        %v5540 = vsel %vm2990, %v5452, 0
        %v5543 = vsel %vm2990, %v5453, 0
        %v5546 = vsel %vm2990, %v5454, 0
        %v5549 = vsel %vm2990, %v5455, 0
        %v5552 = vsel %vm2990, %v5456, 0
        %v5555 = vsel %vm2990, %v5457, 0
        %v5558 = vsel %vm2990, %v5458, 0
        %v5561 = vsel %vm2990, %v5459, 0
        %v5564 = vsel %vm2990, %v5460, 0
        %v5567 = vsel %vm2990, %v5461, 0
        %v5570 = vsel %vm2990, %v5462, 0
        %v5573 = vsel %vm2990, %v5463, 0
        %v5576 = vsel %vm2990, %v5464, 0
        %v5579 = vsel %vm2990, %v5465, 0
        %v5582 = vsel %vm2990, %v5466, 0
        %v5585 = vsel %vm2990, %v5467, 0
        %v5588 = vsel %vm2990, %v5468, 0
        %v5591 = vsel %vm2990, %v5469, 0
        %v5594 = vsel %vm2990, %v5470, 0
        %v5597 = vsel %vm2990, %v5471, 0
        %v5600 = vsel %vm2990, %v5472, 0
        %v5603 = vsel %vm2990, %v5473, 0
        %v5606 = vsel %vm2990, %v5474, 0
        %v5609 = vsel %vm2990, %v5475, 0
        %v5612 = vsel %vm2990, %v5476, 0
        %v5615 = vsel %vm2990, %v5477, 0
        %v5618 = vsel %vm2990, %v5478, 0
        %v5621 = vsel %vm2990, %v5479, 0
        %v5624 = vsel %vm2990, %v5480, 0
        %v5627 = vsel %vm2990, %v5481, 0
        %v5630 = vsel %vm2990, %v5482, 0
        %v5633 = vsel %vm2990, %v5483, 0
        %v5636 = vsel %vm2990, %v5484, 0
        %v5639 = vsel %vm2990, %v5485, 0
        %v5642 = vsel %vm2990, %v5486, 0
        %v5645 = vsel %vm2990, %v5487, 0
        %v5648 = vsel %vm2990, %v5488, 0
        %v5651 = vsel %vm2990, %v5489, 0
        %v5654 = vsel %vm2990, %v5490, 0
        %v5657 = vsel %vm2990, %v5491, 0
        %v5660 = vsel %vm2990, %v5492, 0
        %v5663 = vsel %vm2990, %v5493, 0
        %v5666 = vsel %vm2990, %v5494, 0
        %v5669 = vsel %vm2990, %v5495, 0
        %v5672 = vsel %vm2990, %v5496, 0
        %v5675 = vsel %vm2990, %v5497, 0
        %v5678 = vsel %vm2990, %v5498, 0
        %v5681 = vsel %vm2990, %v5499, 0
        %v5684 = vsel %vm2990, %v5500, 0
        %v5687 = vsel %vm2990, %v5501, 0
        %v5690 = vsel %vm2990, %v5502, 0
        %v5693 = vsel %vm2990, %v5503, 0
        %v5696 = vsel %vm2990, %v5504, 0
        %v5699 = vsel %vm2990, %v5505, 0
        %v5702 = vsel %vm2990, %v5506, 0
        %v5705 = vsel %vm3183, %v5511, 0
        %5707 = vmatprep.subr.bf16.mxu0 0
        %5708 = vmatpush1.bf16.msra.mxu0 0
        %5709 = vmatprep.subr.bf16.mxu0 0
        %5710 = vmatpush1.bf16.msra.mxu0 0
        %5711 = vmatprep.subr.bf16.mxu0 0
        %5712 = vmatpush1.bf16.msra.mxu0 0
        %5713 = vmatprep.subr.bf16.mxu0 0
        %5714 = vmatpush1.bf16.msra.mxu0 0
        %5715 = vmatprep.subr.bf16.mxu0 0
        %5716 = vmatpush1.bf16.msra.mxu0 0
        %5717 = vmatprep.subr.bf16.mxu0 0
        %5718 = vmatpush1.bf16.msra.mxu0 0
        %5719 = vmatprep.subr.bf16.mxu0 0
        %5720 = vmatpush1.bf16.msra.mxu0 0
        %5721 = vmatprep.subr.bf16.mxu0 0
        %5722 = vmatpush1.bf16.msra.mxu0 %v5705
        %5723 = vmatprep.subr.bf16.mxu0 0
        %5724 = vmatpush2.bf16.msra.mxu0 0
        %5725 = vmatprep.subr.bf16.mxu0 0
        %5726 = vmatpush2.bf16.msra.mxu0 0
        %5727 = vmatprep.subr.bf16.mxu0 0
        %5728 = vmatpush2.bf16.msra.mxu0 0
        %5729 = vmatprep.subr.bf16.mxu0 0
        %5730 = vmatpush2.bf16.msra.mxu0 0
        %5731 = vmatprep.subr.bf16.mxu0 0
        %5732 = vmatpush2.bf16.msra.mxu0 0
        %5733 = vmatprep.subr.bf16.mxu0 0
        %5734 = vmatpush2.bf16.msra.mxu0 0
        %5735 = vmatprep.subr.bf16.mxu0 0
        %5736 = vmatpush2.bf16.msra.mxu0 0
        %5737 = vmatprep.subr.bf16.mxu0 0
        %5738 = vmatpush2.bf16.msra.mxu0 0
        %5739 = vmatprep.mubr.bf16.mxu0 0
        %5740 = vmatmul.mubr.bf16.gmra.mxu0 %v5513
        %v5741 = vpop.f32.mrf.mxu0
        %v5742 = vadd.f32 0.0, %v5741
        %v5743 = vpop.f32.mrf.mxu0
        %v5744 = vpop.f32.mrf.mxu0
        %v5745 = vadd.f32 0.0, %v5744
        %v5746 = vpop.f32.mrf.mxu0
        %5747 = vmatprep.mubr.bf16.mxu0 0
        %5748 = vmatmul.mubr.bf16.gmra.mxu0 %v5516
        %v5749 = vpop.f32.mrf.mxu0
        %v5750 = vadd.f32 0.0, %v5749
        %v5751 = vpop.f32.mrf.mxu0
        %v5752 = vpop.f32.mrf.mxu0
        %v5753 = vadd.f32 0.0, %v5752
        %v5754 = vpop.f32.mrf.mxu0
        %5755 = vmatprep.mubr.bf16.mxu0 0
        %5756 = vmatmul.mubr.bf16.gmra.mxu0 %v5519
        %v5757 = vpop.f32.mrf.mxu0
        %v5758 = vadd.f32 0.0, %v5757
        %v5759 = vpop.f32.mrf.mxu0
        %v5760 = vpop.f32.mrf.mxu0
        %v5761 = vadd.f32 0.0, %v5760
        %v5762 = vpop.f32.mrf.mxu0
        %5763 = vmatprep.mubr.bf16.mxu0 0
        %5764 = vmatmul.mubr.bf16.gmra.mxu0 %v5522
        %v5765 = vpop.f32.mrf.mxu0
        %v5766 = vadd.f32 0.0, %v5765
        %v5767 = vpop.f32.mrf.mxu0
        %v5768 = vpop.f32.mrf.mxu0
        %v5769 = vadd.f32 0.0, %v5768
        %v5770 = vpop.f32.mrf.mxu0
        %5771 = vmatprep.mubr.bf16.mxu0 0
        %5772 = vmatmul.mubr.bf16.gmra.mxu0 %v5525
        %v5773 = vpop.f32.mrf.mxu0
        %v5774 = vadd.f32 0.0, %v5773
        %v5775 = vpop.f32.mrf.mxu0
        %v5776 = vpop.f32.mrf.mxu0
        %v5777 = vadd.f32 0.0, %v5776
        %v5778 = vpop.f32.mrf.mxu0
        %5779 = vmatprep.mubr.bf16.mxu0 0
        %5780 = vmatmul.mubr.bf16.gmra.mxu0 %v5528
        %v5781 = vpop.f32.mrf.mxu0
        %v5782 = vadd.f32 0.0, %v5781
        %v5783 = vpop.f32.mrf.mxu0
        %v5784 = vpop.f32.mrf.mxu0
        %v5785 = vadd.f32 0.0, %v5784
        %v5786 = vpop.f32.mrf.mxu0
        %5787 = vmatprep.mubr.bf16.mxu0 0
        %5788 = vmatmul.mubr.bf16.gmra.mxu0 %v5531
        %v5789 = vpop.f32.mrf.mxu0
        %v5790 = vadd.f32 0.0, %v5789
        %v5791 = vpop.f32.mrf.mxu0
        %v5792 = vpop.f32.mrf.mxu0
        %v5793 = vadd.f32 0.0, %v5792
        %v5794 = vpop.f32.mrf.mxu0
        %5795 = vmatprep.mubr.bf16.mxu0 0
        %5796 = vmatmul.mubr.bf16.gmra.mxu0 %v5534
        %v5797 = vpop.f32.mrf.mxu0
        %v5798 = vadd.f32 0.0, %v5797
        %v5799 = vpop.f32.mrf.mxu0
        %v5800 = vpop.f32.mrf.mxu0
        %v5801 = vadd.f32 0.0, %v5800
        %v5802 = vpop.f32.mrf.mxu0
        %5803 = vmatprep.mubr.bf16.mxu0 0
        %5804 = vmatmul.mubr.bf16.gmra.mxu0 %v5537
        %v5805 = vpop.f32.mrf.mxu0
        %v5806 = vadd.f32 0.0, %v5805
        %v5807 = vpop.f32.mrf.mxu0
        %v5808 = vpop.f32.mrf.mxu0
        %v5809 = vadd.f32 0.0, %v5808
        %v5810 = vpop.f32.mrf.mxu0
        %5811 = vmatprep.mubr.bf16.mxu0 0
        %5812 = vmatmul.mubr.bf16.gmra.mxu0 %v5540
        %v5813 = vpop.f32.mrf.mxu0
        %v5814 = vadd.f32 0.0, %v5813
        %v5815 = vpop.f32.mrf.mxu0
        %v5816 = vpop.f32.mrf.mxu0
        %v5817 = vadd.f32 0.0, %v5816
        %v5818 = vpop.f32.mrf.mxu0
        %5819 = vmatprep.mubr.bf16.mxu0 0
        %5820 = vmatmul.mubr.bf16.gmra.mxu0 %v5543
        %v5821 = vpop.f32.mrf.mxu0
        %v5822 = vadd.f32 0.0, %v5821
        %v5823 = vpop.f32.mrf.mxu0
        %v5824 = vpop.f32.mrf.mxu0
        %v5825 = vadd.f32 0.0, %v5824
        %v5826 = vpop.f32.mrf.mxu0
        %5827 = vmatprep.mubr.bf16.mxu0 0
        %5828 = vmatmul.mubr.bf16.gmra.mxu0 %v5546
        %v5829 = vpop.f32.mrf.mxu0
        %v5830 = vadd.f32 0.0, %v5829
        %v5831 = vpop.f32.mrf.mxu0
        %v5832 = vpop.f32.mrf.mxu0
        %v5833 = vadd.f32 0.0, %v5832
        %v5834 = vpop.f32.mrf.mxu0
        %5835 = vmatprep.mubr.bf16.mxu0 0
        %5836 = vmatmul.mubr.bf16.gmra.mxu0 %v5549
        %v5837 = vpop.f32.mrf.mxu0
        %v5838 = vadd.f32 0.0, %v5837
        %v5839 = vpop.f32.mrf.mxu0
        %v5840 = vpop.f32.mrf.mxu0
        %v5841 = vadd.f32 0.0, %v5840
        %v5842 = vpop.f32.mrf.mxu0
        %5843 = vmatprep.mubr.bf16.mxu0 0
        %5844 = vmatmul.mubr.bf16.gmra.mxu0 %v5552
        %v5845 = vpop.f32.mrf.mxu0
        %v5846 = vadd.f32 0.0, %v5845
        %v5847 = vpop.f32.mrf.mxu0
        %v5848 = vpop.f32.mrf.mxu0
        %v5849 = vadd.f32 0.0, %v5848
        %v5850 = vpop.f32.mrf.mxu0
        %5851 = vmatprep.mubr.bf16.mxu0 0
        %5852 = vmatmul.mubr.bf16.gmra.mxu0 %v5555
        %v5853 = vpop.f32.mrf.mxu0
        %v5854 = vadd.f32 0.0, %v5853
        %v5855 = vpop.f32.mrf.mxu0
        %v5856 = vpop.f32.mrf.mxu0
        %v5857 = vadd.f32 0.0, %v5856
        %v5858 = vpop.f32.mrf.mxu0
        %5859 = vmatprep.mubr.bf16.mxu0 0
        %5860 = vmatmul.mubr.bf16.gmra.mxu0 %v5558
        %v5861 = vpop.f32.mrf.mxu0
        %v5862 = vadd.f32 0.0, %v5861
        %v5863 = vpop.f32.mrf.mxu0
        %v5864 = vpop.f32.mrf.mxu0
        %v5865 = vadd.f32 0.0, %v5864
        %v5866 = vpop.f32.mrf.mxu0
        %5867 = vmatprep.mubr.bf16.mxu0 0
        %5868 = vmatmul.mubr.bf16.gmra.mxu0 %v5561
        %v5869 = vpop.f32.mrf.mxu0
        %v5870 = vadd.f32 0.0, %v5869
        %v5871 = vpop.f32.mrf.mxu0
        %v5872 = vpop.f32.mrf.mxu0
        %v5873 = vadd.f32 0.0, %v5872
        %v5874 = vpop.f32.mrf.mxu0
        %5875 = vmatprep.mubr.bf16.mxu0 0
        %5876 = vmatmul.mubr.bf16.gmra.mxu0 %v5564
        %v5877 = vpop.f32.mrf.mxu0
        %v5878 = vadd.f32 0.0, %v5877
        %v5879 = vpop.f32.mrf.mxu0
        %v5880 = vpop.f32.mrf.mxu0
        %v5881 = vadd.f32 0.0, %v5880
        %v5882 = vpop.f32.mrf.mxu0
        %5883 = vmatprep.mubr.bf16.mxu0 0
        %5884 = vmatmul.mubr.bf16.gmra.mxu0 %v5567
        %v5885 = vpop.f32.mrf.mxu0
        %v5886 = vadd.f32 0.0, %v5885
        %v5887 = vpop.f32.mrf.mxu0
        %v5888 = vpop.f32.mrf.mxu0
        %v5889 = vadd.f32 0.0, %v5888
        %v5890 = vpop.f32.mrf.mxu0
        %5891 = vmatprep.mubr.bf16.mxu0 0
        %5892 = vmatmul.mubr.bf16.gmra.mxu0 %v5570
        %v5893 = vpop.f32.mrf.mxu0
        %v5894 = vadd.f32 0.0, %v5893
        %v5895 = vpop.f32.mrf.mxu0
        %v5896 = vpop.f32.mrf.mxu0
        %v5897 = vadd.f32 0.0, %v5896
        %v5898 = vpop.f32.mrf.mxu0
        %5899 = vmatprep.mubr.bf16.mxu0 0
        %5900 = vmatmul.mubr.bf16.gmra.mxu0 %v5573
        %v5901 = vpop.f32.mrf.mxu0
        %v5902 = vadd.f32 0.0, %v5901
        %v5903 = vpop.f32.mrf.mxu0
        %v5904 = vpop.f32.mrf.mxu0
        %v5905 = vadd.f32 0.0, %v5904
        %v5906 = vpop.f32.mrf.mxu0
        %5907 = vmatprep.mubr.bf16.mxu0 0
        %5908 = vmatmul.mubr.bf16.gmra.mxu0 %v5576
        %v5909 = vpop.f32.mrf.mxu0
        %v5910 = vadd.f32 0.0, %v5909
        %v5911 = vpop.f32.mrf.mxu0
        %v5912 = vpop.f32.mrf.mxu0
        %v5913 = vadd.f32 0.0, %v5912
        %v5914 = vpop.f32.mrf.mxu0
        %5915 = vmatprep.mubr.bf16.mxu0 0
        %5916 = vmatmul.mubr.bf16.gmra.mxu0 %v5579
        %v5917 = vpop.f32.mrf.mxu0
        %v5918 = vadd.f32 0.0, %v5917
        %v5919 = vpop.f32.mrf.mxu0
        %v5920 = vpop.f32.mrf.mxu0
        %v5921 = vadd.f32 0.0, %v5920
        %v5922 = vpop.f32.mrf.mxu0
        %5923 = vmatprep.mubr.bf16.mxu0 0
        %5924 = vmatmul.mubr.bf16.gmra.mxu0 %v5582
        %v5925 = vpop.f32.mrf.mxu0
        %v5926 = vadd.f32 0.0, %v5925
        %v5927 = vpop.f32.mrf.mxu0
        %v5928 = vpop.f32.mrf.mxu0
        %v5929 = vadd.f32 0.0, %v5928
        %v5930 = vpop.f32.mrf.mxu0
        %5931 = vmatprep.mubr.bf16.mxu0 0
        %5932 = vmatmul.mubr.bf16.gmra.mxu0 %v5585
        %v5933 = vpop.f32.mrf.mxu0
        %v5934 = vadd.f32 0.0, %v5933
        %v5935 = vpop.f32.mrf.mxu0
        %v5936 = vpop.f32.mrf.mxu0
        %v5937 = vadd.f32 0.0, %v5936
        %v5938 = vpop.f32.mrf.mxu0
        %5939 = vmatprep.mubr.bf16.mxu0 0
        %5940 = vmatmul.mubr.bf16.gmra.mxu0 %v5588
        %v5941 = vpop.f32.mrf.mxu0
        %v5942 = vadd.f32 0.0, %v5941
        %v5943 = vpop.f32.mrf.mxu0
        %v5944 = vpop.f32.mrf.mxu0
        %v5945 = vadd.f32 0.0, %v5944
        %v5946 = vpop.f32.mrf.mxu0
        %5947 = vmatprep.mubr.bf16.mxu0 0
        %5948 = vmatmul.mubr.bf16.gmra.mxu0 %v5591
        %v5949 = vpop.f32.mrf.mxu0
        %v5950 = vadd.f32 0.0, %v5949
        %v5951 = vpop.f32.mrf.mxu0
        %v5952 = vpop.f32.mrf.mxu0
        %v5953 = vadd.f32 0.0, %v5952
        %v5954 = vpop.f32.mrf.mxu0
        %5955 = vmatprep.mubr.bf16.mxu0 0
        %5956 = vmatmul.mubr.bf16.gmra.mxu0 %v5594
        %v5957 = vpop.f32.mrf.mxu0
        %v5958 = vadd.f32 0.0, %v5957
        %v5959 = vpop.f32.mrf.mxu0
        %v5960 = vpop.f32.mrf.mxu0
        %v5961 = vadd.f32 0.0, %v5960
        %v5962 = vpop.f32.mrf.mxu0
        %5963 = vmatprep.mubr.bf16.mxu0 0
        %5964 = vmatmul.mubr.bf16.gmra.mxu0 %v5597
        %v5965 = vpop.f32.mrf.mxu0
        %v5966 = vadd.f32 0.0, %v5965
        %v5967 = vpop.f32.mrf.mxu0
        %v5968 = vpop.f32.mrf.mxu0
        %v5969 = vadd.f32 0.0, %v5968
        %v5970 = vpop.f32.mrf.mxu0
        %5971 = vmatprep.mubr.bf16.mxu0 0
        %5972 = vmatmul.mubr.bf16.gmra.mxu0 %v5600
        %v5973 = vpop.f32.mrf.mxu0
        %v5974 = vadd.f32 0.0, %v5973
        %v5975 = vpop.f32.mrf.mxu0
        %v5976 = vpop.f32.mrf.mxu0
        %v5977 = vadd.f32 0.0, %v5976
        %v5978 = vpop.f32.mrf.mxu0
        %5979 = vmatprep.mubr.bf16.mxu0 0
        %5980 = vmatmul.mubr.bf16.gmra.mxu0 %v5603
        %v5981 = vpop.f32.mrf.mxu0
        %v5982 = vadd.f32 0.0, %v5981
        %v5983 = vpop.f32.mrf.mxu0
        %v5984 = vpop.f32.mrf.mxu0
        %v5985 = vadd.f32 0.0, %v5984
        %v5986 = vpop.f32.mrf.mxu0
        %5987 = vmatprep.mubr.bf16.mxu0 0
        %5988 = vmatmul.mubr.bf16.gmra.mxu0 %v5606
        %v5989 = vpop.f32.mrf.mxu0
        %v5990 = vadd.f32 0.0, %v5989
        %v5991 = vpop.f32.mrf.mxu0
        %v5992 = vpop.f32.mrf.mxu0
        %v5993 = vadd.f32 0.0, %v5992
        %v5994 = vpop.f32.mrf.mxu0
        %5995 = vmatprep.mubr.bf16.mxu0 0
        %5996 = vmatmul.mubr.bf16.gmra.mxu0 %v5609
        %v5997 = vpop.f32.mrf.mxu0
        %v5998 = vadd.f32 0.0, %v5997
        %v5999 = vpop.f32.mrf.mxu0
        %v6000 = vpop.f32.mrf.mxu0
        %v6001 = vadd.f32 0.0, %v6000
        %v6002 = vpop.f32.mrf.mxu0
        %6003 = vmatprep.mubr.bf16.mxu0 0
        %6004 = vmatmul.mubr.bf16.gmra.mxu0 %v5612
        %v6005 = vpop.f32.mrf.mxu0
        %v6006 = vadd.f32 0.0, %v6005
        %v6007 = vpop.f32.mrf.mxu0
        %v6008 = vpop.f32.mrf.mxu0
        %v6009 = vadd.f32 0.0, %v6008
        %v6010 = vpop.f32.mrf.mxu0
        %6011 = vmatprep.mubr.bf16.mxu0 0
        %6012 = vmatmul.mubr.bf16.gmra.mxu0 %v5615
        %v6013 = vpop.f32.mrf.mxu0
        %v6014 = vadd.f32 0.0, %v6013
        %v6015 = vpop.f32.mrf.mxu0
        %v6016 = vpop.f32.mrf.mxu0
        %v6017 = vadd.f32 0.0, %v6016
        %v6018 = vpop.f32.mrf.mxu0
        %6019 = vmatprep.mubr.bf16.mxu0 0
        %6020 = vmatmul.mubr.bf16.gmra.mxu0 %v5618
        %v6021 = vpop.f32.mrf.mxu0
        %v6022 = vadd.f32 0.0, %v6021
        %v6023 = vpop.f32.mrf.mxu0
        %v6024 = vpop.f32.mrf.mxu0
        %v6025 = vadd.f32 0.0, %v6024
        %v6026 = vpop.f32.mrf.mxu0
        %6027 = vmatprep.mubr.bf16.mxu0 0
        %6028 = vmatmul.mubr.bf16.gmra.mxu0 %v5621
        %v6029 = vpop.f32.mrf.mxu0
        %v6030 = vadd.f32 0.0, %v6029
        %v6031 = vpop.f32.mrf.mxu0
        %v6032 = vpop.f32.mrf.mxu0
        %v6033 = vadd.f32 0.0, %v6032
        %v6034 = vpop.f32.mrf.mxu0
        %6035 = vmatprep.mubr.bf16.mxu0 0
        %6036 = vmatmul.mubr.bf16.gmra.mxu0 %v5624
        %v6037 = vpop.f32.mrf.mxu0
        %v6038 = vadd.f32 0.0, %v6037
        %v6039 = vpop.f32.mrf.mxu0
        %v6040 = vpop.f32.mrf.mxu0
        %v6041 = vadd.f32 0.0, %v6040
        %v6042 = vpop.f32.mrf.mxu0
        %6043 = vmatprep.mubr.bf16.mxu0 0
        %6044 = vmatmul.mubr.bf16.gmra.mxu0 %v5627
        %v6045 = vpop.f32.mrf.mxu0
        %v6046 = vadd.f32 0.0, %v6045
        %v6047 = vpop.f32.mrf.mxu0
        %v6048 = vpop.f32.mrf.mxu0
        %v6049 = vadd.f32 0.0, %v6048
        %v6050 = vpop.f32.mrf.mxu0
        %6051 = vmatprep.mubr.bf16.mxu0 0
        %6052 = vmatmul.mubr.bf16.gmra.mxu0 %v5630
        %v6053 = vpop.f32.mrf.mxu0
        %v6054 = vadd.f32 0.0, %v6053
        %v6055 = vpop.f32.mrf.mxu0
        %v6056 = vpop.f32.mrf.mxu0
        %v6057 = vadd.f32 0.0, %v6056
        %v6058 = vpop.f32.mrf.mxu0
        %6059 = vmatprep.mubr.bf16.mxu0 0
        %6060 = vmatmul.mubr.bf16.gmra.mxu0 %v5633
        %v6061 = vpop.f32.mrf.mxu0
        %v6062 = vadd.f32 0.0, %v6061
        %v6063 = vpop.f32.mrf.mxu0
        %v6064 = vpop.f32.mrf.mxu0
        %v6065 = vadd.f32 0.0, %v6064
        %v6066 = vpop.f32.mrf.mxu0
        %6067 = vmatprep.mubr.bf16.mxu0 0
        %6068 = vmatmul.mubr.bf16.gmra.mxu0 %v5636
        %v6069 = vpop.f32.mrf.mxu0
        %v6070 = vadd.f32 0.0, %v6069
        %v6071 = vpop.f32.mrf.mxu0
        %v6072 = vpop.f32.mrf.mxu0
        %v6073 = vadd.f32 0.0, %v6072
        %v6074 = vpop.f32.mrf.mxu0
        %6075 = vmatprep.mubr.bf16.mxu0 0
        %6076 = vmatmul.mubr.bf16.gmra.mxu0 %v5639
        %v6077 = vpop.f32.mrf.mxu0
        %v6078 = vadd.f32 0.0, %v6077
        %v6079 = vpop.f32.mrf.mxu0
        %v6080 = vpop.f32.mrf.mxu0
        %v6081 = vadd.f32 0.0, %v6080
        %v6082 = vpop.f32.mrf.mxu0
        %6083 = vmatprep.mubr.bf16.mxu0 0
        %6084 = vmatmul.mubr.bf16.gmra.mxu0 %v5642
        %v6085 = vpop.f32.mrf.mxu0
        %v6086 = vadd.f32 0.0, %v6085
        %v6087 = vpop.f32.mrf.mxu0
        %v6088 = vpop.f32.mrf.mxu0
        %v6089 = vadd.f32 0.0, %v6088
        %v6090 = vpop.f32.mrf.mxu0
        %6091 = vmatprep.mubr.bf16.mxu0 0
        %6092 = vmatmul.mubr.bf16.gmra.mxu0 %v5645
        %v6093 = vpop.f32.mrf.mxu0
        %v6094 = vadd.f32 0.0, %v6093
        %v6095 = vpop.f32.mrf.mxu0
        %v6096 = vpop.f32.mrf.mxu0
        %v6097 = vadd.f32 0.0, %v6096
        %v6098 = vpop.f32.mrf.mxu0
        %6099 = vmatprep.mubr.bf16.mxu0 0
        %6100 = vmatmul.mubr.bf16.gmra.mxu0 %v5648
        %v6101 = vpop.f32.mrf.mxu0
        %v6102 = vadd.f32 0.0, %v6101
        %v6103 = vpop.f32.mrf.mxu0
        %v6104 = vpop.f32.mrf.mxu0
        %v6105 = vadd.f32 0.0, %v6104
        %v6106 = vpop.f32.mrf.mxu0
        %6107 = vmatprep.mubr.bf16.mxu0 0
        %6108 = vmatmul.mubr.bf16.gmra.mxu0 %v5651
        %v6109 = vpop.f32.mrf.mxu0
        %v6110 = vadd.f32 0.0, %v6109
        %v6111 = vpop.f32.mrf.mxu0
        %v6112 = vpop.f32.mrf.mxu0
        %v6113 = vadd.f32 0.0, %v6112
        %v6114 = vpop.f32.mrf.mxu0
        %6115 = vmatprep.mubr.bf16.mxu0 0
        %6116 = vmatmul.mubr.bf16.gmra.mxu0 %v5654
        %v6117 = vpop.f32.mrf.mxu0
        %v6118 = vadd.f32 0.0, %v6117
        %v6119 = vpop.f32.mrf.mxu0
        %v6120 = vpop.f32.mrf.mxu0
        %v6121 = vadd.f32 0.0, %v6120
        %v6122 = vpop.f32.mrf.mxu0
        %6123 = vmatprep.mubr.bf16.mxu0 0
        %6124 = vmatmul.mubr.bf16.gmra.mxu0 %v5657
        %v6125 = vpop.f32.mrf.mxu0
        %v6126 = vadd.f32 0.0, %v6125
        %v6127 = vpop.f32.mrf.mxu0
        %v6128 = vpop.f32.mrf.mxu0
        %v6129 = vadd.f32 0.0, %v6128
        %v6130 = vpop.f32.mrf.mxu0
        %6131 = vmatprep.mubr.bf16.mxu0 0
        %6132 = vmatmul.mubr.bf16.gmra.mxu0 %v5660
        %v6133 = vpop.f32.mrf.mxu0
        %v6134 = vadd.f32 0.0, %v6133
        %v6135 = vpop.f32.mrf.mxu0
        %v6136 = vpop.f32.mrf.mxu0
        %v6137 = vadd.f32 0.0, %v6136
        %v6138 = vpop.f32.mrf.mxu0
        %6139 = vmatprep.mubr.bf16.mxu0 0
        %6140 = vmatmul.mubr.bf16.gmra.mxu0 %v5663
        %v6141 = vpop.f32.mrf.mxu0
        %v6142 = vadd.f32 0.0, %v6141
        %v6143 = vpop.f32.mrf.mxu0
        %v6144 = vpop.f32.mrf.mxu0
        %v6145 = vadd.f32 0.0, %v6144
        %v6146 = vpop.f32.mrf.mxu0
        %6147 = vmatprep.mubr.bf16.mxu0 0
        %6148 = vmatmul.mubr.bf16.gmra.mxu0 %v5666
        %v6149 = vpop.f32.mrf.mxu0
        %v6150 = vadd.f32 0.0, %v6149
        %v6151 = vpop.f32.mrf.mxu0
        %v6152 = vpop.f32.mrf.mxu0
        %v6153 = vadd.f32 0.0, %v6152
        %v6154 = vpop.f32.mrf.mxu0
        %6155 = vmatprep.mubr.bf16.mxu0 0
        %6156 = vmatmul.mubr.bf16.gmra.mxu0 %v5669
        %v6157 = vpop.f32.mrf.mxu0
        %v6158 = vadd.f32 0.0, %v6157
        %v6159 = vpop.f32.mrf.mxu0
        %v6160 = vpop.f32.mrf.mxu0
        %v6161 = vadd.f32 0.0, %v6160
        %v6162 = vpop.f32.mrf.mxu0
        %6163 = vmatprep.mubr.bf16.mxu0 0
        %6164 = vmatmul.mubr.bf16.gmra.mxu0 %v5672
        %v6165 = vpop.f32.mrf.mxu0
        %v6166 = vadd.f32 0.0, %v6165
        %v6167 = vpop.f32.mrf.mxu0
        %v6168 = vpop.f32.mrf.mxu0
        %v6169 = vadd.f32 0.0, %v6168
        %v6170 = vpop.f32.mrf.mxu0
        %6171 = vmatprep.mubr.bf16.mxu0 0
        %6172 = vmatmul.mubr.bf16.gmra.mxu0 %v5675
        %v6173 = vpop.f32.mrf.mxu0
        %v6174 = vadd.f32 0.0, %v6173
        %v6175 = vpop.f32.mrf.mxu0
        %v6176 = vpop.f32.mrf.mxu0
        %v6177 = vadd.f32 0.0, %v6176
        %v6178 = vpop.f32.mrf.mxu0
        %6179 = vmatprep.mubr.bf16.mxu0 0
        %6180 = vmatmul.mubr.bf16.gmra.mxu0 %v5678
        %v6181 = vpop.f32.mrf.mxu0
        %v6182 = vadd.f32 0.0, %v6181
        %v6183 = vpop.f32.mrf.mxu0
        %v6184 = vpop.f32.mrf.mxu0
        %v6185 = vadd.f32 0.0, %v6184
        %v6186 = vpop.f32.mrf.mxu0
        %6187 = vmatprep.mubr.bf16.mxu0 0
        %6188 = vmatmul.mubr.bf16.gmra.mxu0 %v5681
        %v6189 = vpop.f32.mrf.mxu0
        %v6190 = vadd.f32 0.0, %v6189
        %v6191 = vpop.f32.mrf.mxu0
        %v6192 = vpop.f32.mrf.mxu0
        %v6193 = vadd.f32 0.0, %v6192
        %v6194 = vpop.f32.mrf.mxu0
        %6195 = vmatprep.mubr.bf16.mxu0 0
        %6196 = vmatmul.mubr.bf16.gmra.mxu0 %v5684
        %v6197 = vpop.f32.mrf.mxu0
        %v6198 = vadd.f32 0.0, %v6197
        %v6199 = vpop.f32.mrf.mxu0
        %v6200 = vpop.f32.mrf.mxu0
        %v6201 = vadd.f32 0.0, %v6200
        %v6202 = vpop.f32.mrf.mxu0
        %6203 = vmatprep.mubr.bf16.mxu0 0
        %6204 = vmatmul.mubr.bf16.gmra.mxu0 %v5687
        %v6205 = vpop.f32.mrf.mxu0
        %v6206 = vadd.f32 0.0, %v6205
        %v6207 = vpop.f32.mrf.mxu0
        %v6208 = vpop.f32.mrf.mxu0
        %v6209 = vadd.f32 0.0, %v6208
        %v6210 = vpop.f32.mrf.mxu0
        %6211 = vmatprep.mubr.bf16.mxu0 0
        %6212 = vmatmul.mubr.bf16.gmra.mxu0 %v5690
        %v6213 = vpop.f32.mrf.mxu0
        %v6214 = vadd.f32 0.0, %v6213
        %v6215 = vpop.f32.mrf.mxu0
        %v6216 = vpop.f32.mrf.mxu0
        %v6217 = vadd.f32 0.0, %v6216
        %v6218 = vpop.f32.mrf.mxu0
        %6219 = vmatprep.mubr.bf16.mxu0 0
        %6220 = vmatmul.mubr.bf16.gmra.mxu0 %v5693
        %v6221 = vpop.f32.mrf.mxu0
        %v6222 = vadd.f32 0.0, %v6221
        %v6223 = vpop.f32.mrf.mxu0
        %v6224 = vpop.f32.mrf.mxu0
        %v6225 = vadd.f32 0.0, %v6224
        %v6226 = vpop.f32.mrf.mxu0
        %6227 = vmatprep.mubr.bf16.mxu0 0
        %6228 = vmatmul.mubr.bf16.gmra.mxu0 %v5696
        %v6229 = vpop.f32.mrf.mxu0
        %v6230 = vadd.f32 0.0, %v6229
        %v6231 = vpop.f32.mrf.mxu0
        %v6232 = vpop.f32.mrf.mxu0
        %v6233 = vadd.f32 0.0, %v6232
        %v6234 = vpop.f32.mrf.mxu0
        %6235 = vmatprep.mubr.bf16.mxu0 0
        %6236 = vmatmul.mubr.bf16.gmra.mxu0 %v5699
        %v6237 = vpop.f32.mrf.mxu0
        %v6238 = vadd.f32 0.0, %v6237
        %v6239 = vpop.f32.mrf.mxu0
        %v6240 = vpop.f32.mrf.mxu0
        %v6241 = vadd.f32 0.0, %v6240
        %v6242 = vpop.f32.mrf.mxu0
        %6243 = vmatprep.mubr.bf16.mxu0 0
        %6244 = vmatmul.mubr.bf16.gmra.mxu0 %v5702
        %v6245 = vpop.f32.mrf.mxu0
        %v6246 = vadd.f32 0.0, %v6245
        %v6247 = vpop.f32.mrf.mxu0
        %v6248 = vpop.f32.mrf.mxu0
        %v6249 = vadd.f32 0.0, %v6248
        %v6250 = vpop.f32.mrf.mxu0
        %6251 = vdwg.mxu0
        %v6252 = vadd.f32 %v4287, %v5742
        %v6253 = vadd.f32 %v4290, %v5745
        %v6254 = vadd.f32 %v4295, %v5750
        %v6255 = vadd.f32 %v4298, %v5753
        %v6256 = vadd.f32 %v4303, %v5758
        %v6257 = vadd.f32 %v4306, %v5761
        %v6258 = vadd.f32 %v4311, %v5766
        %v6259 = vadd.f32 %v4314, %v5769
        %v6260 = vadd.f32 %v4319, %v5774
        %v6261 = vadd.f32 %v4322, %v5777
        %v6262 = vadd.f32 %v4327, %v5782
        %v6263 = vadd.f32 %v4330, %v5785
        %v6264 = vadd.f32 %v4335, %v5790
        %v6265 = vadd.f32 %v4338, %v5793
        %v6266 = vadd.f32 %v4343, %v5798
        %v6267 = vadd.f32 %v4346, %v5801
        %v6268 = vadd.f32 %v4351, %v5806
        %v6269 = vadd.f32 %v4354, %v5809
        %v6270 = vadd.f32 %v4359, %v5814
        %v6271 = vadd.f32 %v4362, %v5817
        %v6272 = vadd.f32 %v4367, %v5822
        %v6273 = vadd.f32 %v4370, %v5825
        %v6274 = vadd.f32 %v4375, %v5830
        %v6275 = vadd.f32 %v4378, %v5833
        %v6276 = vadd.f32 %v4383, %v5838
        %v6277 = vadd.f32 %v4386, %v5841
        %v6278 = vadd.f32 %v4391, %v5846
        %v6279 = vadd.f32 %v4394, %v5849
        %v6280 = vadd.f32 %v4399, %v5854
        %v6281 = vadd.f32 %v4402, %v5857
        %v6282 = vadd.f32 %v4407, %v5862
        %v6283 = vadd.f32 %v4410, %v5865
        %v6284 = vadd.f32 %v4415, %v5870
        %v6285 = vadd.f32 %v4418, %v5873
        %v6286 = vadd.f32 %v4423, %v5878
        %v6287 = vadd.f32 %v4426, %v5881
        %v6288 = vadd.f32 %v4431, %v5886
        %v6289 = vadd.f32 %v4434, %v5889
        %v6290 = vadd.f32 %v4439, %v5894
        %v6291 = vadd.f32 %v4442, %v5897
        %v6292 = vadd.f32 %v4447, %v5902
        %v6293 = vadd.f32 %v4450, %v5905
        %v6294 = vadd.f32 %v4455, %v5910
        %v6295 = vadd.f32 %v4458, %v5913
        %v6296 = vadd.f32 %v4463, %v5918
        %v6297 = vadd.f32 %v4466, %v5921
        %v6298 = vadd.f32 %v4471, %v5926
        %v6299 = vadd.f32 %v4474, %v5929
        %v6300 = vadd.f32 %v4479, %v5934
        %v6301 = vadd.f32 %v4482, %v5937
        %v6302 = vadd.f32 %v4487, %v5942
        %v6303 = vadd.f32 %v4490, %v5945
        %v6304 = vadd.f32 %v4495, %v5950
        %v6305 = vadd.f32 %v4498, %v5953
        %v6306 = vadd.f32 %v4503, %v5958
        %v6307 = vadd.f32 %v4506, %v5961
        %v6308 = vadd.f32 %v4511, %v5966
        %v6309 = vadd.f32 %v4514, %v5969
        %v6310 = vadd.f32 %v4519, %v5974
        %v6311 = vadd.f32 %v4522, %v5977
        %v6312 = vadd.f32 %v4527, %v5982
        %v6313 = vadd.f32 %v4530, %v5985
        %v6314 = vadd.f32 %v4535, %v5990
        %v6315 = vadd.f32 %v4538, %v5993
        %v6316 = vadd.f32 %v4543, %v5998
        %v6317 = vadd.f32 %v4546, %v6001
        %v6318 = vadd.f32 %v4551, %v6006
        %v6319 = vadd.f32 %v4554, %v6009
        %v6320 = vadd.f32 %v4559, %v6014
        %v6321 = vadd.f32 %v4562, %v6017
        %v6322 = vadd.f32 %v4567, %v6022
        %v6323 = vadd.f32 %v4570, %v6025
        %v6324 = vadd.f32 %v4575, %v6030
        %v6325 = vadd.f32 %v4578, %v6033
        %v6326 = vadd.f32 %v4583, %v6038
        %v6327 = vadd.f32 %v4586, %v6041
        %v6328 = vadd.f32 %v4591, %v6046
        %v6329 = vadd.f32 %v4594, %v6049
        %v6330 = vadd.f32 %v4599, %v6054
        %v6331 = vadd.f32 %v4602, %v6057
        %v6332 = vadd.f32 %v4607, %v6062
        %v6333 = vadd.f32 %v4610, %v6065
        %v6334 = vadd.f32 %v4615, %v6070
        %v6335 = vadd.f32 %v4618, %v6073
        %v6336 = vadd.f32 %v4623, %v6078
        %v6337 = vadd.f32 %v4626, %v6081
        %v6338 = vadd.f32 %v4631, %v6086
        %v6339 = vadd.f32 %v4634, %v6089
        %v6340 = vadd.f32 %v4639, %v6094
        %v6341 = vadd.f32 %v4642, %v6097
        %v6342 = vadd.f32 %v4647, %v6102
        %v6343 = vadd.f32 %v4650, %v6105
        %v6344 = vadd.f32 %v4655, %v6110
        %v6345 = vadd.f32 %v4658, %v6113
        %v6346 = vadd.f32 %v4663, %v6118
        %v6347 = vadd.f32 %v4666, %v6121
        %v6348 = vadd.f32 %v4671, %v6126
        %v6349 = vadd.f32 %v4674, %v6129
        %v6350 = vadd.f32 %v4679, %v6134
        %v6351 = vadd.f32 %v4682, %v6137
        %v6352 = vadd.f32 %v4687, %v6142
        %v6353 = vadd.f32 %v4690, %v6145
        %v6354 = vadd.f32 %v4695, %v6150
        %v6355 = vadd.f32 %v4698, %v6153
        %v6356 = vadd.f32 %v4703, %v6158
        %v6357 = vadd.f32 %v4706, %v6161
        %v6358 = vadd.f32 %v4711, %v6166
        %v6359 = vadd.f32 %v4714, %v6169
        %v6360 = vadd.f32 %v4719, %v6174
        %v6361 = vadd.f32 %v4722, %v6177
        %v6362 = vadd.f32 %v4727, %v6182
        %v6363 = vadd.f32 %v4730, %v6185
        %v6364 = vadd.f32 %v4735, %v6190
        %v6365 = vadd.f32 %v4738, %v6193
        %v6366 = vadd.f32 %v4743, %v6198
        %v6367 = vadd.f32 %v4746, %v6201
        %v6368 = vadd.f32 %v4751, %v6206
        %v6369 = vadd.f32 %v4754, %v6209
        %v6370 = vadd.f32 %v4759, %v6214
        %v6371 = vadd.f32 %v4762, %v6217
        %v6372 = vadd.f32 %v4767, %v6222
        %v6373 = vadd.f32 %v4770, %v6225
        %v6374 = vadd.f32 %v4775, %v6230
        %v6375 = vadd.f32 %v4778, %v6233
        %v6376 = vadd.f32 %v4783, %v6238
        %v6377 = vadd.f32 %v4786, %v6241
        %v6378 = vadd.f32 %v4791, %v6246
        %v6379 = vadd.f32 %v4794, %v6249
        %v6380 = vld [vmem:[%s2] sm:$0x1]
        %v6382 = vlaneseq
        %v6383 = vshrl.u32 %v6382, 7
        %v6384 = vsub.s32 0, %v6383
        %v6385 = vrot.slane %v6380, %v6384
        %v6387 = vadd.f32 %v6252, %v6385
        %v6388 = vadd.f32 %v6253, %v6385
        %v6389 = vadd.f32 %v6254, %v6385
        %v6390 = vadd.f32 %v6255, %v6385
        %v6391 = vadd.f32 %v6256, %v6385
        %v6392 = vadd.f32 %v6257, %v6385
        %v6393 = vadd.f32 %v6258, %v6385
        %v6394 = vadd.f32 %v6259, %v6385
        %v6395 = vadd.f32 %v6260, %v6385
        %v6396 = vadd.f32 %v6261, %v6385
        %v6397 = vadd.f32 %v6262, %v6385
        %v6398 = vadd.f32 %v6263, %v6385
        %v6399 = vadd.f32 %v6264, %v6385
        %v6400 = vadd.f32 %v6265, %v6385
        %v6401 = vadd.f32 %v6266, %v6385
        %v6402 = vadd.f32 %v6267, %v6385
        %v6403 = vadd.f32 %v6268, %v6385
        %v6404 = vadd.f32 %v6269, %v6385
        %v6405 = vadd.f32 %v6270, %v6385
        %v6406 = vadd.f32 %v6271, %v6385
        %v6407 = vadd.f32 %v6272, %v6385
        %v6408 = vadd.f32 %v6273, %v6385
        %v6409 = vadd.f32 %v6274, %v6385
        %v6410 = vadd.f32 %v6275, %v6385
        %v6411 = vadd.f32 %v6276, %v6385
        %v6412 = vadd.f32 %v6277, %v6385
        %v6413 = vadd.f32 %v6278, %v6385
        %v6414 = vadd.f32 %v6279, %v6385
        %v6415 = vadd.f32 %v6280, %v6385
        %v6416 = vadd.f32 %v6281, %v6385
        %v6417 = vadd.f32 %v6282, %v6385
        %v6418 = vadd.f32 %v6283, %v6385
        %v6419 = vadd.f32 %v6284, %v6385
        %v6420 = vadd.f32 %v6285, %v6385
        %v6421 = vadd.f32 %v6286, %v6385
        %v6422 = vadd.f32 %v6287, %v6385
        %v6423 = vadd.f32 %v6288, %v6385
        %v6424 = vadd.f32 %v6289, %v6385
        %v6425 = vadd.f32 %v6290, %v6385
        %v6426 = vadd.f32 %v6291, %v6385
        %v6427 = vadd.f32 %v6292, %v6385
        %v6428 = vadd.f32 %v6293, %v6385
        %v6429 = vadd.f32 %v6294, %v6385
        %v6430 = vadd.f32 %v6295, %v6385
        %v6431 = vadd.f32 %v6296, %v6385
        %v6432 = vadd.f32 %v6297, %v6385
        %v6433 = vadd.f32 %v6298, %v6385
        %v6434 = vadd.f32 %v6299, %v6385
        %v6435 = vadd.f32 %v6300, %v6385
        %v6436 = vadd.f32 %v6301, %v6385
        %v6437 = vadd.f32 %v6302, %v6385
        %v6438 = vadd.f32 %v6303, %v6385
        %v6439 = vadd.f32 %v6304, %v6385
        %v6440 = vadd.f32 %v6305, %v6385
        %v6441 = vadd.f32 %v6306, %v6385
        %v6442 = vadd.f32 %v6307, %v6385
        %v6443 = vadd.f32 %v6308, %v6385
        %v6444 = vadd.f32 %v6309, %v6385
        %v6445 = vadd.f32 %v6310, %v6385
        %v6446 = vadd.f32 %v6311, %v6385
        %v6447 = vadd.f32 %v6312, %v6385
        %v6448 = vadd.f32 %v6313, %v6385
        %v6449 = vadd.f32 %v6314, %v6385
        %v6450 = vadd.f32 %v6315, %v6385
        %v6451 = vadd.f32 %v6316, %v6385
        %v6452 = vadd.f32 %v6317, %v6385
        %v6453 = vadd.f32 %v6318, %v6385
        %v6454 = vadd.f32 %v6319, %v6385
        %v6455 = vadd.f32 %v6320, %v6385
        %v6456 = vadd.f32 %v6321, %v6385
        %v6457 = vadd.f32 %v6322, %v6385
        %v6458 = vadd.f32 %v6323, %v6385
        %v6459 = vadd.f32 %v6324, %v6385
        %v6460 = vadd.f32 %v6325, %v6385
        %v6461 = vadd.f32 %v6326, %v6385
        %v6462 = vadd.f32 %v6327, %v6385
        %v6463 = vadd.f32 %v6328, %v6385
        %v6464 = vadd.f32 %v6329, %v6385
        %v6465 = vadd.f32 %v6330, %v6385
        %v6466 = vadd.f32 %v6331, %v6385
        %v6467 = vadd.f32 %v6332, %v6385
        %v6468 = vadd.f32 %v6333, %v6385
        %v6469 = vadd.f32 %v6334, %v6385
        %v6470 = vadd.f32 %v6335, %v6385
        %v6471 = vadd.f32 %v6336, %v6385
        %v6472 = vadd.f32 %v6337, %v6385
        %v6473 = vadd.f32 %v6338, %v6385
        %v6474 = vadd.f32 %v6339, %v6385
        %v6475 = vadd.f32 %v6340, %v6385
        %v6476 = vadd.f32 %v6341, %v6385
        %v6477 = vadd.f32 %v6342, %v6385
        %v6478 = vadd.f32 %v6343, %v6385
        %v6479 = vadd.f32 %v6344, %v6385
        %v6480 = vadd.f32 %v6345, %v6385
        %v6481 = vadd.f32 %v6346, %v6385
        %v6482 = vadd.f32 %v6347, %v6385
        %v6483 = vadd.f32 %v6348, %v6385
        %v6484 = vadd.f32 %v6349, %v6385
        %v6485 = vadd.f32 %v6350, %v6385
        %v6486 = vadd.f32 %v6351, %v6385
        %v6487 = vadd.f32 %v6352, %v6385
        %v6488 = vadd.f32 %v6353, %v6385
        %v6489 = vadd.f32 %v6354, %v6385
        %v6490 = vadd.f32 %v6355, %v6385
        %v6491 = vadd.f32 %v6356, %v6385
        %v6492 = vadd.f32 %v6357, %v6385
        %v6493 = vadd.f32 %v6358, %v6385
        %v6494 = vadd.f32 %v6359, %v6385
        %v6495 = vadd.f32 %v6360, %v6385
        %v6496 = vadd.f32 %v6361, %v6385
        %v6497 = vadd.f32 %v6362, %v6385
        %v6498 = vadd.f32 %v6363, %v6385
        %v6499 = vadd.f32 %v6364, %v6385
        %v6500 = vadd.f32 %v6365, %v6385
        %v6501 = vadd.f32 %v6366, %v6385
        %v6502 = vadd.f32 %v6367, %v6385
        %v6503 = vadd.f32 %v6368, %v6385
        %v6504 = vadd.f32 %v6369, %v6385
        %v6505 = vadd.f32 %v6370, %v6385
        %v6506 = vadd.f32 %v6371, %v6385
        %v6507 = vadd.f32 %v6372, %v6385
        %v6508 = vadd.f32 %v6373, %v6385
        %v6509 = vadd.f32 %v6374, %v6385
        %v6510 = vadd.f32 %v6375, %v6385
        %v6511 = vadd.f32 %v6376, %v6385
        %v6512 = vadd.f32 %v6377, %v6385
        %v6513 = vadd.f32 %v6378, %v6385
        %v6514 = vadd.f32 %v6379, %v6385
        %v6515 = vmax.f32 %v6387, 0.0
        %v6516 = vmax.f32 %v6388, 0.0
        %v6517 = vmax.f32 %v6389, 0.0
        %v6518 = vmax.f32 %v6390, 0.0
        %v6519 = vmax.f32 %v6391, 0.0
        %v6520 = vmax.f32 %v6392, 0.0
        %v6521 = vmax.f32 %v6393, 0.0
        %v6522 = vmax.f32 %v6394, 0.0
        %v6523 = vmax.f32 %v6395, 0.0
        %v6524 = vmax.f32 %v6396, 0.0
        %v6525 = vmax.f32 %v6397, 0.0
        %v6526 = vmax.f32 %v6398, 0.0
        %v6527 = vmax.f32 %v6399, 0.0
        %v6528 = vmax.f32 %v6400, 0.0
        %v6529 = vmax.f32 %v6401, 0.0
        %v6530 = vmax.f32 %v6402, 0.0
        %v6531 = vmax.f32 %v6403, 0.0
        %v6532 = vmax.f32 %v6404, 0.0
        %v6533 = vmax.f32 %v6405, 0.0
        %v6534 = vmax.f32 %v6406, 0.0
        %v6535 = vmax.f32 %v6407, 0.0
        %v6536 = vmax.f32 %v6408, 0.0
        %v6537 = vmax.f32 %v6409, 0.0
        %v6538 = vmax.f32 %v6410, 0.0
        %v6539 = vmax.f32 %v6411, 0.0
        %v6540 = vmax.f32 %v6412, 0.0
        %v6541 = vmax.f32 %v6413, 0.0
        %v6542 = vmax.f32 %v6414, 0.0
        %v6543 = vmax.f32 %v6415, 0.0
        %v6544 = vmax.f32 %v6416, 0.0
        %v6545 = vmax.f32 %v6417, 0.0
        %v6546 = vmax.f32 %v6418, 0.0
        %v6547 = vmax.f32 %v6419, 0.0
        %v6548 = vmax.f32 %v6420, 0.0
        %v6549 = vmax.f32 %v6421, 0.0
        %v6550 = vmax.f32 %v6422, 0.0
        %v6551 = vmax.f32 %v6423, 0.0
        %v6552 = vmax.f32 %v6424, 0.0
        %v6553 = vmax.f32 %v6425, 0.0
        %v6554 = vmax.f32 %v6426, 0.0
        %v6555 = vmax.f32 %v6427, 0.0
        %v6556 = vmax.f32 %v6428, 0.0
        %v6557 = vmax.f32 %v6429, 0.0
        %v6558 = vmax.f32 %v6430, 0.0
        %v6559 = vmax.f32 %v6431, 0.0
        %v6560 = vmax.f32 %v6432, 0.0
        %v6561 = vmax.f32 %v6433, 0.0
        %v6562 = vmax.f32 %v6434, 0.0
        %v6563 = vmax.f32 %v6435, 0.0
        %v6564 = vmax.f32 %v6436, 0.0
        %v6565 = vmax.f32 %v6437, 0.0
        %v6566 = vmax.f32 %v6438, 0.0
        %v6567 = vmax.f32 %v6439, 0.0
        %v6568 = vmax.f32 %v6440, 0.0
        %v6569 = vmax.f32 %v6441, 0.0
        %v6570 = vmax.f32 %v6442, 0.0
        %v6571 = vmax.f32 %v6443, 0.0
        %v6572 = vmax.f32 %v6444, 0.0
        %v6573 = vmax.f32 %v6445, 0.0
        %v6574 = vmax.f32 %v6446, 0.0
        %v6575 = vmax.f32 %v6447, 0.0
        %v6576 = vmax.f32 %v6448, 0.0
        %v6577 = vmax.f32 %v6449, 0.0
        %v6578 = vmax.f32 %v6450, 0.0
        %v6579 = vmax.f32 %v6451, 0.0
        %v6580 = vmax.f32 %v6452, 0.0
        %v6581 = vmax.f32 %v6453, 0.0
        %v6582 = vmax.f32 %v6454, 0.0
        %v6583 = vmax.f32 %v6455, 0.0
        %v6584 = vmax.f32 %v6456, 0.0
        %v6585 = vmax.f32 %v6457, 0.0
        %v6586 = vmax.f32 %v6458, 0.0
        %v6587 = vmax.f32 %v6459, 0.0
        %v6588 = vmax.f32 %v6460, 0.0
        %v6589 = vmax.f32 %v6461, 0.0
        %v6590 = vmax.f32 %v6462, 0.0
        %v6591 = vmax.f32 %v6463, 0.0
        %v6592 = vmax.f32 %v6464, 0.0
        %v6593 = vmax.f32 %v6465, 0.0
        %v6594 = vmax.f32 %v6466, 0.0
        %v6595 = vmax.f32 %v6467, 0.0
        %v6596 = vmax.f32 %v6468, 0.0
        %v6597 = vmax.f32 %v6469, 0.0
        %v6598 = vmax.f32 %v6470, 0.0
        %v6599 = vmax.f32 %v6471, 0.0
        %v6600 = vmax.f32 %v6472, 0.0
        %v6601 = vmax.f32 %v6473, 0.0
        %v6602 = vmax.f32 %v6474, 0.0
        %v6603 = vmax.f32 %v6475, 0.0
        %v6604 = vmax.f32 %v6476, 0.0
        %v6605 = vmax.f32 %v6477, 0.0
        %v6606 = vmax.f32 %v6478, 0.0
        %v6607 = vmax.f32 %v6479, 0.0
        %v6608 = vmax.f32 %v6480, 0.0
        %v6609 = vmax.f32 %v6481, 0.0
        %v6610 = vmax.f32 %v6482, 0.0
        %v6611 = vmax.f32 %v6483, 0.0
        %v6612 = vmax.f32 %v6484, 0.0
        %v6613 = vmax.f32 %v6485, 0.0
        %v6614 = vmax.f32 %v6486, 0.0
        %v6615 = vmax.f32 %v6487, 0.0
        %v6616 = vmax.f32 %v6488, 0.0
        %v6617 = vmax.f32 %v6489, 0.0
        %v6618 = vmax.f32 %v6490, 0.0
        %v6619 = vmax.f32 %v6491, 0.0
        %v6620 = vmax.f32 %v6492, 0.0
        %v6621 = vmax.f32 %v6493, 0.0
        %v6622 = vmax.f32 %v6494, 0.0
        %v6623 = vmax.f32 %v6495, 0.0
        %v6624 = vmax.f32 %v6496, 0.0
        %v6625 = vmax.f32 %v6497, 0.0
        %v6626 = vmax.f32 %v6498, 0.0
        %v6627 = vmax.f32 %v6499, 0.0
        %v6628 = vmax.f32 %v6500, 0.0
        %v6629 = vmax.f32 %v6501, 0.0
        %v6630 = vmax.f32 %v6502, 0.0
        %v6631 = vmax.f32 %v6503, 0.0
        %v6632 = vmax.f32 %v6504, 0.0
        %v6633 = vmax.f32 %v6505, 0.0
        %v6634 = vmax.f32 %v6506, 0.0
        %v6635 = vmax.f32 %v6507, 0.0
        %v6636 = vmax.f32 %v6508, 0.0
        %v6637 = vmax.f32 %v6509, 0.0
        %v6638 = vmax.f32 %v6510, 0.0
        %v6639 = vmax.f32 %v6511, 0.0
        %v6640 = vmax.f32 %v6512, 0.0
        %v6641 = vmax.f32 %v6513, 0.0
        %v6642 = vmax.f32 %v6514, 0.0
        %v6643 = vld [vmem:[#allocation2] sm:$0xff]
        %v6644 = vadd.f32 %v6515, %v6516
        %v6645 = vadd.f32 %v6644, %v6517
        %v6646 = vadd.f32 %v6645, %v6518
        %v6647 = vadd.f32 %v6646, %v6519
        %v6648 = vadd.f32 %v6647, %v6520
        %v6649 = vadd.f32 %v6648, %v6521
        %v6650 = vadd.f32 %v6649, %v6522
        %v6651 = vadd.f32 %v6650, %v6523
        %v6652 = vadd.f32 %v6651, %v6524
        %v6653 = vadd.f32 %v6652, %v6525
        %v6654 = vadd.f32 %v6653, %v6526
        %v6655 = vadd.f32 %v6654, %v6527
        %v6656 = vadd.f32 %v6655, %v6528
        %v6657 = vadd.f32 %v6656, %v6529
        %v6658 = vadd.f32 %v6657, %v6530
        %v6659 = vrot.slane %v6658, 4
        %v6660 = vadd.f32 %v6658, %v6659
        %v6661 = vrot.slane %v6660, 2
        %v6662 = vadd.f32 %v6660, %v6661
        %v6663 = vrot.slane %v6662, 1
        %v6664 = vadd.f32 %v6662, %v6663
        %v6665 = vadd.f32 %v6531, %v6532
        %v6666 = vadd.f32 %v6665, %v6533
        %v6667 = vadd.f32 %v6666, %v6534
        %v6668 = vadd.f32 %v6667, %v6535
        %v6669 = vadd.f32 %v6668, %v6536
        %v6670 = vadd.f32 %v6669, %v6537
        %v6671 = vadd.f32 %v6670, %v6538
        %v6672 = vadd.f32 %v6671, %v6539
        %v6673 = vadd.f32 %v6672, %v6540
        %v6674 = vadd.f32 %v6673, %v6541
        %v6675 = vadd.f32 %v6674, %v6542
        %v6676 = vadd.f32 %v6675, %v6543
        %v6677 = vadd.f32 %v6676, %v6544
        %v6678 = vadd.f32 %v6677, %v6545
        %v6679 = vadd.f32 %v6678, %v6546
        %v6680 = vrot.slane %v6679, 4
        %v6681 = vadd.f32 %v6679, %v6680
        %v6682 = vrot.slane %v6681, 2
        %v6683 = vadd.f32 %v6681, %v6682
        %v6684 = vrot.slane %v6683, 1
        %v6685 = vadd.f32 %v6683, %v6684
        %v6686 = vadd.f32 %v6547, %v6548
        %v6687 = vadd.f32 %v6686, %v6549
        %v6688 = vadd.f32 %v6687, %v6550
        %v6689 = vadd.f32 %v6688, %v6551
        %v6690 = vadd.f32 %v6689, %v6552
        %v6691 = vadd.f32 %v6690, %v6553
        %v6692 = vadd.f32 %v6691, %v6554
        %v6693 = vadd.f32 %v6692, %v6555
        %v6694 = vadd.f32 %v6693, %v6556
        %v6695 = vadd.f32 %v6694, %v6557
        %v6696 = vadd.f32 %v6695, %v6558
        %v6697 = vadd.f32 %v6696, %v6559
        %v6698 = vadd.f32 %v6697, %v6560
        %v6699 = vadd.f32 %v6698, %v6561
        %v6700 = vadd.f32 %v6699, %v6562
        %v6701 = vrot.slane %v6700, 4
        %v6702 = vadd.f32 %v6700, %v6701
        %v6703 = vrot.slane %v6702, 2
        %v6704 = vadd.f32 %v6702, %v6703
        %v6705 = vrot.slane %v6704, 1
        %v6706 = vadd.f32 %v6704, %v6705
        %v6707 = vadd.f32 %v6563, %v6564
        %v6708 = vadd.f32 %v6707, %v6565
        %v6709 = vadd.f32 %v6708, %v6566
        %v6710 = vadd.f32 %v6709, %v6567
        %v6711 = vadd.f32 %v6710, %v6568
        %v6712 = vadd.f32 %v6711, %v6569
        %v6713 = vadd.f32 %v6712, %v6570
        %v6714 = vadd.f32 %v6713, %v6571
        %v6715 = vadd.f32 %v6714, %v6572
        %v6716 = vadd.f32 %v6715, %v6573
        %v6717 = vadd.f32 %v6716, %v6574
        %v6718 = vadd.f32 %v6717, %v6575
        %v6719 = vadd.f32 %v6718, %v6576
        %v6720 = vadd.f32 %v6719, %v6577
        %v6721 = vadd.f32 %v6720, %v6578
        %v6722 = vrot.slane %v6721, 4
        %v6723 = vadd.f32 %v6721, %v6722
        %v6724 = vrot.slane %v6723, 2
        %v6725 = vadd.f32 %v6723, %v6724
        %v6726 = vrot.slane %v6725, 1
        %v6727 = vadd.f32 %v6725, %v6726
        %v6728 = vadd.f32 %v6579, %v6580
        %v6729 = vadd.f32 %v6728, %v6581
        %v6730 = vadd.f32 %v6729, %v6582
        %v6731 = vadd.f32 %v6730, %v6583
        %v6732 = vadd.f32 %v6731, %v6584
        %v6733 = vadd.f32 %v6732, %v6585
        %v6734 = vadd.f32 %v6733, %v6586
        %v6735 = vadd.f32 %v6734, %v6587
        %v6736 = vadd.f32 %v6735, %v6588
        %v6737 = vadd.f32 %v6736, %v6589
        %v6738 = vadd.f32 %v6737, %v6590
        %v6739 = vadd.f32 %v6738, %v6591
        %v6740 = vadd.f32 %v6739, %v6592
        %v6741 = vadd.f32 %v6740, %v6593
        %v6742 = vadd.f32 %v6741, %v6594
        %v6743 = vrot.slane %v6742, 4
        %v6744 = vadd.f32 %v6742, %v6743
        %v6745 = vrot.slane %v6744, 2
        %v6746 = vadd.f32 %v6744, %v6745
        %v6747 = vrot.slane %v6746, 1
        %v6748 = vadd.f32 %v6746, %v6747
        %v6749 = vadd.f32 %v6595, %v6596
        %v6750 = vadd.f32 %v6749, %v6597
        %v6751 = vadd.f32 %v6750, %v6598
        %v6752 = vadd.f32 %v6751, %v6599
        %v6753 = vadd.f32 %v6752, %v6600
        %v6754 = vadd.f32 %v6753, %v6601
        %v6755 = vadd.f32 %v6754, %v6602
        %v6756 = vadd.f32 %v6755, %v6603
        %v6757 = vadd.f32 %v6756, %v6604
        %v6758 = vadd.f32 %v6757, %v6605
        %v6759 = vadd.f32 %v6758, %v6606
        %v6760 = vadd.f32 %v6759, %v6607
        %v6761 = vadd.f32 %v6760, %v6608
        %v6762 = vadd.f32 %v6761, %v6609
        %v6763 = vadd.f32 %v6762, %v6610
        %v6764 = vrot.slane %v6763, 4
        %v6765 = vadd.f32 %v6763, %v6764
        %v6766 = vrot.slane %v6765, 2
        %v6767 = vadd.f32 %v6765, %v6766
        %v6768 = vrot.slane %v6767, 1
        %v6769 = vadd.f32 %v6767, %v6768
        %v6770 = vadd.f32 %v6611, %v6612
        %v6771 = vadd.f32 %v6770, %v6613
        %v6772 = vadd.f32 %v6771, %v6614
        %v6773 = vadd.f32 %v6772, %v6615
        %v6774 = vadd.f32 %v6773, %v6616
        %v6775 = vadd.f32 %v6774, %v6617
        %v6776 = vadd.f32 %v6775, %v6618
        %v6777 = vadd.f32 %v6776, %v6619
        %v6778 = vadd.f32 %v6777, %v6620
        %v6779 = vadd.f32 %v6778, %v6621
        %v6780 = vadd.f32 %v6779, %v6622
        %v6781 = vadd.f32 %v6780, %v6623
        %v6782 = vadd.f32 %v6781, %v6624
        %v6783 = vadd.f32 %v6782, %v6625
        %v6784 = vadd.f32 %v6783, %v6626
        %v6785 = vrot.slane %v6784, 4
        %v6786 = vadd.f32 %v6784, %v6785
        %v6787 = vrot.slane %v6786, 2
        %v6788 = vadd.f32 %v6786, %v6787
        %v6789 = vrot.slane %v6788, 1
        %v6790 = vadd.f32 %v6788, %v6789
        %v6791 = vadd.f32 %v6627, %v6628
        %v6792 = vadd.f32 %v6791, %v6629
        %v6793 = vadd.f32 %v6792, %v6630
        %v6794 = vadd.f32 %v6793, %v6631
        %v6795 = vadd.f32 %v6794, %v6632
        %v6796 = vadd.f32 %v6795, %v6633
        %v6797 = vadd.f32 %v6796, %v6634
        %v6798 = vadd.f32 %v6797, %v6635
        %v6799 = vadd.f32 %v6798, %v6636
        %v6800 = vadd.f32 %v6799, %v6637
        %v6801 = vadd.f32 %v6800, %v6638
        %v6802 = vadd.f32 %v6801, %v6639
        %v6803 = vadd.f32 %v6802, %v6640
        %v6804 = vadd.f32 %v6803, %v6641
        %v6805 = vadd.f32 %v6804, %v6642
        %v6806 = vrot.slane %v6805, 4
        %v6807 = vadd.f32 %v6805, %v6806
        %v6808 = vrot.slane %v6807, 2
        %v6809 = vadd.f32 %v6807, %v6808
        %v6810 = vrot.slane %v6809, 1
        %v6811 = vadd.f32 %v6809, %v6810
        %vm6820 = vcmask 1041409
        %v6821 = vsel %vm6820, %v6685, %v6664
        %vm6822 = vcmask 1042434
        %v6823 = vsel %vm6822, %v6706, %v6821
        %vm6824 = vcmask 1043459
        %v6825 = vsel %vm6824, %v6727, %v6823
        %vm6826 = vcmask 1044484
        %v6827 = vsel %vm6826, %v6748, %v6825
        %vm6828 = vcmask 1045509
        %v6829 = vsel %vm6828, %v6769, %v6827
        %vm6830 = vcmask 1046534
        %v6831 = vsel %vm6830, %v6790, %v6829
        %vm6832 = vcmask 1047559
        %v6833 = vsel %vm6832, %v6811, %v6831
        %v6835 = vadd.f32 %v6643, %v6833
        %6836 = vst [vmem:[#allocation2] sm:$0xff] %v6835
        %p6837 = scmp.eq.s32.totalorder %s21, 1
        // Predicated region
        $region86: #{birdclef_forward.1} parent=76 // pred_check
          %p6838 = pneg %p6837
        $region87: #{birdclef_forward.1} parent=76 // pred_check_branch
          %6840 = sbr.rel (%p6838) target = $region89
        $region88: #{birdclef_forward.1} parent=76 // pred_region
          %v6841 = vld [vmem:[#allocation2] sm:$0xff]
          %v6842 = vmul.f32 %v6841, 0.00390625
          %v6843 = vld [vmem:[%s3] sm:$0xff]
          %v6844 = vld [vmem:[%s3 + $0x8] sm:$0xff]
          %v6845 = vld [vmem:[%s3 + $0x10] sm:$0xff]
          %v6846 = vld [vmem:[%s3 + $0x18] sm:$0xff]
          %v6847 = vld [vmem:[%s3 + $0x20] sm:$0xff]
          %v6848 = vld [vmem:[%s3 + $0x28] sm:$0xff]
          %v6849 = vld [vmem:[%s3 + $0x30] sm:$0xff]
          %v6850 = vld [vmem:[%s3 + $0x38] sm:$0xff]
          %v6851 = vld [vmem:[%s3 + $0x40] sm:$0xff]
          %v6852 = vld [vmem:[%s3 + $0x48] sm:$0xff]
          %v6853 = vld [vmem:[%s3 + $0x50] sm:$0xff]
          %v6854 = vld [vmem:[%s3 + $0x58] sm:$0xff]
          %v6855 = vld [vmem:[%s3 + $0x60] sm:$0xff]
          %v6856 = vld [vmem:[%s3 + $0x68] sm:$0xff]
          %v6857 = vld [vmem:[%s3 + $0x70] sm:$0xff]
          %v6858 = vld [vmem:[%s3 + $0x78] sm:$0xff]
          %v6859 = vld [vmem:[%s4] sm:$0x1]
          %v6861 = vlaneseq
          %v6862 = vshrl.u32 %v6861, 7
          %v6863 = vsub.s32 0, %v6862
          %v6864 = vrot.slane %v6859, %v6863
          %6866 = vmatprep.subr.mxu0 0.0
          %6867 = vmatpush1.msra.mxu0 %v6858
          %6868 = vmatprep.subr.mxu0 0.0
          %6869 = vmatpush1.msra.mxu0 %v6857
          %6870 = vmatprep.subr.mxu0 0.0
          %6871 = vmatpush1.msra.mxu0 %v6856
          %6872 = vmatprep.subr.mxu0 0.0
          %6873 = vmatpush1.msra.mxu0 %v6855
          %6874 = vmatprep.subr.mxu0 0.0
          %6875 = vmatpush1.msra.mxu0 %v6854
          %6876 = vmatprep.subr.mxu0 0.0
          %6877 = vmatpush1.msra.mxu0 %v6853
          %6878 = vmatprep.subr.mxu0 0.0
          %6879 = vmatpush1.msra.mxu0 %v6852
          %6880 = vmatprep.subr.mxu0 0.0
          %6881 = vmatpush1.msra.mxu0 %v6851
          %6882 = vmatprep.subr.mxu0 0.0
          %6883 = vmatpush1.msra.mxu0 %v6850
          %6884 = vmatprep.subr.mxu0 0.0
          %6885 = vmatpush1.msra.mxu0 %v6849
          %6886 = vmatprep.subr.mxu0 0.0
          %6887 = vmatpush1.msra.mxu0 %v6848
          %6888 = vmatprep.subr.mxu0 0.0
          %6889 = vmatpush1.msra.mxu0 %v6847
          %6890 = vmatprep.subr.mxu0 0.0
          %6891 = vmatpush1.msra.mxu0 %v6846
          %6892 = vmatprep.subr.mxu0 0.0
          %6893 = vmatpush1.msra.mxu0 %v6845
          %6894 = vmatprep.subr.mxu0 0.0
          %6895 = vmatpush1.msra.mxu0 %v6844
          %6896 = vmatprep.subr.mxu0 0.0
          %6897 = vmatpush1.msra.mxu0 %v6843
          %6898 = vmatprep.subr.mxu0 0.0
          %6899 = vmatpush2.msra.mxu0 0.0
          %6900 = vmatprep.subr.mxu0 0.0
          %6901 = vmatpush2.msra.mxu0 0.0
          %6902 = vmatprep.subr.mxu0 0.0
          %6903 = vmatpush2.msra.mxu0 0.0
          %6904 = vmatprep.subr.mxu0 0.0
          %6905 = vmatpush2.msra.mxu0 0.0
          %6906 = vmatprep.subr.mxu0 0.0
          %6907 = vmatpush2.msra.mxu0 0.0
          %6908 = vmatprep.subr.mxu0 0.0
          %6909 = vmatpush2.msra.mxu0 0.0
          %6910 = vmatprep.subr.mxu0 0.0
          %6911 = vmatpush2.msra.mxu0 0.0
          %6912 = vmatprep.subr.mxu0 0.0
          %6913 = vmatpush2.msra.mxu0 0.0
          %6914 = vmatprep.subr.mxu0 0.0
          %6915 = vmatpush2.msra.mxu0 0.0
          %6916 = vmatprep.subr.mxu0 0.0
          %6917 = vmatpush2.msra.mxu0 0.0
          %6918 = vmatprep.subr.mxu0 0.0
          %6919 = vmatpush2.msra.mxu0 0.0
          %6920 = vmatprep.subr.mxu0 0.0
          %6921 = vmatpush2.msra.mxu0 0.0
          %6922 = vmatprep.subr.mxu0 0.0
          %6923 = vmatpush2.msra.mxu0 0.0
          %6924 = vmatprep.subr.mxu0 0.0
          %6925 = vmatpush2.msra.mxu0 0.0
          %6926 = vmatprep.subr.mxu0 0.0
          %6927 = vmatpush2.msra.mxu0 0.0
          %6928 = vmatprep.subr.mxu0 0.0
          %6929 = vmatpush2.msra.mxu0 0.0
          %6930 = vmatprep.mubr.f32.mxu0 0.0
          %6931 = vmatmul.mubr.f32.gmra.mxu0 %v6842
          %v6932 = vpop.f32.mrf.mxu0
          %v6933 = vadd.f32 %v6864, %v6932
          %v6934 = vpop.f32.mrf.mxu0
          %6935 = vdwg.mxu0
          %6936 = vst [vmem:[%s1050] sm:$0xff] %v6933
        $region89: #{birdclef_forward.1} parent=76 // pred_fallthru
          _
        %p6937 = scmp.lt.s32.totalorder %s20, 0
        %s6938 = scalar_select %p6937, %s20, 0
        %s6939 = smul.addr %s6938, 8
        %s6940 = scalar_lea.vmem %s5, %s6939
        // Predicated region
        $region90: #{birdclef_forward.1} parent=76 // pred_check
          %p6941 = pneg %p158
        $region91: #{birdclef_forward.1} parent=76 // pred_check_branch
          %6943 = sbr.rel (%p6941) target = $region93
        $region92: #{birdclef_forward.1} parent=76 // pred_region
          _
        $region93: #{birdclef_forward.1} parent=76 // pred_fallthru
          _
        // Predicated region
        $region94: #{birdclef_forward.1} parent=76 // pred_check
          %p6944 = pneg %p158
        $region95: #{birdclef_forward.1} parent=76 // pred_check_branch
          %6946 = sbr.rel (%p6944) target = $region97
        $region96: #{birdclef_forward.1} parent=76 // pred_region
          %p6947 = scmp.lt.s32.totalorder %s20, 0
          %s6948 = scalar_select %p6947, %s20, 0
          %s6949 = smul.addr %s6948, 8
          %s6950 = scalar_lea.vmem %s5, %s6949
        $region97: #{birdclef_forward.1} parent=76 // pred_fallthru
          _
      $region77: #{birdclef_forward.1} parent=5 // pred_fallthru
        _
      %p6951 = scmp.le.s32.totalorder 2, %s11
      // Predicated region
      $region98: #{birdclef_forward.1} parent=5 // pred_check
        %p6952 = pneg %p6951
      $region99: #{birdclef_forward.1} parent=5 // pred_check_branch
        %6954 = sbr.rel (%p6952) target = $region101
      $region100: #{birdclef_forward.1} parent=5 // pred_region
        %s6955 = ssub.s32 %s11, 2
      $region101: #{birdclef_forward.1} parent=5 // pred_fallthru
        _
    $region6: #{birdclef_forward.1} parent=1 // loop_footer
      %s15 = sadd.s32 1, %s11
    $region7: #{birdclef_forward.1} parent=1 // loop_footer_branch
      %10 = sbr.rel target = $region3
    $region8: #{birdclef_forward.1} parent=1 // loop_exit
      _

</llo_original>
